<compile_context>
chip_gen: v5e
topology: v5e:2x2
jax: 0.10.0
libtpu: 0.0.40
codegen_flags: <defaults>
</compile_context>

<pallas_src>
from functools import partial

import jax
import jax.numpy as jnp
from jax.experimental import pallas as pl
from jax.experimental.pallas import tpu as pltpu


# ---------------------------------------------------------------------------
# Shared conv routine: one MXU matmul with K = Kh*Kw*Cin (register-level im2col)
# ---------------------------------------------------------------------------

def _conv_mxu(xp_ref, w_ref, *, kh, kw, hc, wc):
    # xp_ref: (1, H+2, W+2, Cin) bf16 padded NHWC image
    # w_ref : (Kh*Kw*Cin, Cp)    bf16 conv weight, flattened (ky, kx, cin) -> K
    # returns (Hc*Wc, Cp) f32 conv output (no bias)
    cin = xp_ref.shape[-1]
    taps = [xp_ref[0, ky:ky + hc, kx:kx + wc, :]
            for ky in range(kh) for kx in range(kw)]          # each (Hc, Wc, Cin) bf16
    patches = jnp.concatenate(taps, axis=-1)                  # (Hc, Wc, Kh*Kw*Cin)
    patches = patches.reshape(hc * wc, kh * kw * cin)         # single flatten
    return jnp.dot(patches, w_ref[...], preferred_element_type=jnp.float32)


# ---------------------------------------------------------------------------
# Kernel 1: per-image conv + bias -> partial BN statistics only (no y slab)
# ---------------------------------------------------------------------------

def _conv_stats_kernel(xp_ref, w_ref, b_ref, s_ref, ss_ref, *, kh, kw, hc, wc):
    # s_ref / ss_ref: (1, 1, Cp) f32 per-image sum and sum-of-squares
    y = _conv_mxu(xp_ref, w_ref, kh=kh, kw=kw, hc=hc, wc=wc) + b_ref[...]   # (Hc*Wc, Cp)
    s_ref[0] = jnp.sum(y, axis=0, keepdims=True)          # (1, Cp)
    ss_ref[0] = jnp.sum(y * y, axis=0, keepdims=True)      # (1, Cp)


# ---------------------------------------------------------------------------
# Kernel 2: recompute conv, apply fused BN affine (+bias) + ReLU + 2x2 maxpool
# ---------------------------------------------------------------------------

def _conv_bn_relu_pool_kernel(xp_ref, w_ref, scale_ref, shift_ref, o_ref, *,
                              kh, kw, hc, wc, ho, wo):
    # scale_ref/shift_ref: (1, Cp) f32 with scale = gamma*rsqrt(var+eps),
    #                      shift = beta + (bias - mean)*scale  (bias folded in)
    cp = o_ref.shape[-1]
    conv = _conv_mxu(xp_ref, w_ref, kh=kh, kw=kw, hc=hc, wc=wc)            # (Hc*Wc, Cp)
    v = jnp.maximum(conv * scale_ref[...] + shift_ref[...], 0.0)           # affine+ReLU once
    v = v.reshape(hc, wc, cp)

    # 2x2 / stride-2 floor-mode max pool via static slices + pairwise max.
    v = v[:2 * ho, :2 * wo, :]                       # drop trailing odd row/col
    v = v.reshape(ho, 2, 2 * wo, cp)                 # split row pairs (leading dims only)
    v = jnp.maximum(v[:, 0, :, :], v[:, 1, :, :])    # (Ho, 2*Wo, Cp)
    v = v.reshape(ho, wo, 2, cp)                     # split column pairs
    v = jnp.maximum(v[:, :, 0, :], v[:, :, 1, :])    # (Ho, Wo, Cp)
    o_ref[0] = v


# ---------------------------------------------------------------------------
# Wrapper (layout/padding glue + tiny BN finalize; heavy work stays in kernels)
# ---------------------------------------------------------------------------

def conv_block_forward(x_nchw, params, *, eps=1e-5):
    conv_w = params["conv_w"]      # (Cout, Cin, Kh, Kw)  PyTorch layout
    conv_b = params["conv_b"]      # (Cout,)
    gamma = params["bn_gamma"]     # (Cout,)
    beta = params["bn_beta"]       # (Cout,)

    N, Cin, H, W = x_nchw.shape
    Cout, _, Kh, Kw = conv_w.shape

    # Conv: padding=1, stride=1  (max_pool=True, max_pool_factor=1 branch).
    Hc = H + 2 - Kh + 1
    Wc = W + 2 - Kw + 1
    Ho, Wo = Hc // 2, Wc // 2                        # MaxPool2d(2,2), ceil_mode=False
    Cp = ((Cout + 127) // 128) * 128                 # lane-dense channel padding

    # NHWC + spatial pad; bf16 MXU operands (accumulation stays f32 in-kernel).
    x = jnp.transpose(x_nchw, (0, 2, 3, 1)).astype(jnp.bfloat16)
    xp = jnp.pad(x, ((0, 0), (1, 1), (1, 1), (0, 0)))

    w = jnp.transpose(conv_w, (2, 3, 1, 0)).astype(jnp.bfloat16)          # (Kh,Kw,Cin,Cout)
    w = jnp.pad(w, ((0, 0), (0, 0), (0, 0), (0, Cp - Cout)))
    wflat = w.reshape(Kh * Kw * Cin, Cp)                                   # K = Kh*Kw*Cin
    b2 = jnp.pad(conv_b.astype(jnp.float32), (0, Cp - Cout)).reshape(1, Cp)
    g2 = jnp.pad(gamma.astype(jnp.float32), (0, Cp - Cout)).reshape(1, Cp)
    be2 = jnp.pad(beta.astype(jnp.float32), (0, Cp - Cout)).reshape(1, Cp)

    # Per-step blocks here are well under the scoped VMEM default; for large
    # images raise vmem_limit_bytes and/or add a spatial grid axis (v7x: 64 MiB).
    parallel = pltpu.CompilerParams(dimension_semantics=("parallel",))

    # ---- kernel 1: conv + bias -> per-image partial stats (tiny outputs) ---
    ysum, ysq = pl.pallas_call(
        partial(_conv_stats_kernel, kh=Kh, kw=Kw, hc=Hc, wc=Wc),
        grid=(N,),
        in_specs=[
            pl.BlockSpec((1, H + 2, W + 2, Cin), lambda n: (n, 0, 0, 0)),
            pl.BlockSpec((Kh * Kw * Cin, Cp), lambda n: (0, 0)),
            pl.BlockSpec((1, Cp), lambda n: (0, 0)),
        ],
        out_specs=(
            pl.BlockSpec((1, 1, Cp), lambda n: (n, 0, 0)),
            pl.BlockSpec((1, 1, Cp), lambda n: (n, 0, 0)),
        ),
        out_shape=(
            jax.ShapeDtypeStruct((N, 1, Cp), jnp.float32),
            jax.ShapeDtypeStruct((N, 1, Cp), jnp.float32),
        ),
        compiler_params=parallel,
    )(xp, wflat, b2)

    # ---- tiny BN finalize in XLA: (1, Cp) scale/shift for kernel 2 ---------
    m_total = float(N * Hc * Wc)
    mean = jnp.sum(ysum[:, 0, :], axis=0, keepdims=True) / m_total        # (1, Cp)
    ex2 = jnp.sum(ysq[:, 0, :], axis=0, keepdims=True) / m_total
    var = jnp.maximum(ex2 - mean * mean, 0.0)                             # biased batch var
    scale = g2 * jax.lax.rsqrt(var + eps)
    shift = be2 + (b2 - mean) * scale                                     # bias folded in

    # ---- kernel 2: conv recompute + affine + ReLU + 2x2 maxpool ------------
    pooled = pl.pallas_call(
        partial(_conv_bn_relu_pool_kernel,
                kh=Kh, kw=Kw, hc=Hc, wc=Wc, ho=Ho, wo=Wo),
        grid=(N,),
        in_specs=[
            pl.BlockSpec((1, H + 2, W + 2, Cin), lambda n: (n, 0, 0, 0)),
            pl.BlockSpec((Kh * Kw * Cin, Cp), lambda n: (0, 0)),
            pl.BlockSpec((1, Cp), lambda n: (0, 0)),
            pl.BlockSpec((1, Cp), lambda n: (0, 0)),
        ],
        out_specs=pl.BlockSpec((1, Ho, Wo, Cp), lambda n: (n, 0, 0, 0)),
        out_shape=jax.ShapeDtypeStruct((N, Ho, Wo, Cp), jnp.float32),
        compiler_params=parallel,
    )(xp, wflat, scale, shift)

    # Single slice+transpose back to the PyTorch NCHW convention.
    return jnp.transpose(pooled[..., :Cout], (0, 3, 1, 2))


# ---------------------------------------------------------------------------
# Deterministic parameter init (mirrors ConvBlock.__init__ / maml_init_)
# ---------------------------------------------------------------------------

def init_params(key, in_channels, out_channels, kernel_size):
    kw, kg = jax.random.split(key, 2)
    fan_in = in_channels * kernel_size * kernel_size
    fan_out = out_channels * kernel_size * kernel_size
    bound = (6.0 / (fan_in + fan_out)) ** 0.5                 # xavier_uniform_, gain=1.0
    conv_w = jax.random.uniform(
        kw, (out_channels, in_channels, kernel_size, kernel_size),
        jnp.float32, -bound, bound)
    conv_b = jnp.zeros((out_channels,), jnp.float32)          # constant_(bias, 0)
    bn_gamma = jax.random.uniform(kg, (out_channels,), jnp.float32, 0.0, 1.0)
    bn_beta = jnp.zeros((out_channels,), jnp.float32)
    return dict(conv_w=conv_w, conv_b=conv_b, bn_gamma=bn_gamma, bn_beta=bn_beta)


if __name__ == "__main__":
    key = jax.random.PRNGKey(0)
    kx, kp = jax.random.split(key)

    N, Cin, H, W = 2, 4, 16, 16
    Cout, K = 8, 3

    x = jax.random.normal(kx, (N, Cin, H, W), jnp.float32)    # NCHW, like PyTorch
    params = init_params(kp, Cin, Cout, K)

    out = jax.jit(conv_block_forward)(x, params)
    out = jax.block_until_ready(out)
    assert out.shape == (N, Cout, H // 2, W // 2), out.shape
    assert out.dtype == jnp.float32
    print("KERNEL_OK")
</pallas_src>

<mosaic_0001>
module attributes {stable_mosaic.version = 11 : i64} {
  func.func @_conv_stats_kernel(%arg0: i32, %arg1: memref<1x18x18x4xbf16, #tpu.memory_space<vmem>>, %arg2: memref<36x128xbf16, #tpu.memory_space<vmem>>, %arg3: memref<1x128xf32, #tpu.memory_space<vmem>>, %arg4: memref<1x1x128xf32, #tpu.memory_space<vmem>>, %arg5: memref<1x1x128xf32, #tpu.memory_space<vmem>>) attributes {dimension_semantics = [#tpu.dimension_semantics<parallel>], iteration_bounds = array<i64: 2>, scalar_prefetch = 0 : i64, scratch_operands = 0 : i64, tpu.core_type = #tpu.core_type<tc>, window_params = [{transform_indices = @transform_0, window_bounds = array<i64: 1, 18, 18, 4>}, {pipeline_mode = #tpu.pipeline_mode<synchronous>, transform_indices = @transform_1, window_bounds = array<i64: 36, 128>}, {pipeline_mode = #tpu.pipeline_mode<synchronous>, transform_indices = @transform_2, window_bounds = array<i64: 1, 128>}, {transform_indices = @transform_3, window_bounds = array<i64: 1, 1, 128>}, {transform_indices = @transform_4, window_bounds = array<i64: 1, 1, 128>}]} {
    %c0 = arith.constant 0 : index
    %c0_0 = arith.constant 0 : index
    %c0_1 = arith.constant 0 : index
    %c0_2 = arith.constant 0 : index
    %0 = vector.load %arg1[%c0, %c0_0, %c0_1, %c0_2] : memref<1x18x18x4xbf16, #tpu.memory_space<vmem>>, vector<1x16x16x4xbf16>
    %1 = vector.shape_cast %0 : vector<1x16x16x4xbf16> to vector<16x16x4xbf16>
    %c0_3 = arith.constant 0 : index
    %c0_4 = arith.constant 0 : index
    %c1 = arith.constant 1 : index
    %c0_5 = arith.constant 0 : index
    %2 = vector.load %arg1[%c0_3, %c0_4, %c1, %c0_5] : memref<1x18x18x4xbf16, #tpu.memory_space<vmem>>, vector<1x16x16x4xbf16>
    %3 = vector.shape_cast %2 : vector<1x16x16x4xbf16> to vector<16x16x4xbf16>
    %c0_6 = arith.constant 0 : index
    %c0_7 = arith.constant 0 : index
    %c2 = arith.constant 2 : index
    %c0_8 = arith.constant 0 : index
    %4 = vector.load %arg1[%c0_6, %c0_7, %c2, %c0_8] : memref<1x18x18x4xbf16, #tpu.memory_space<vmem>>, vector<1x16x16x4xbf16>
    %5 = vector.shape_cast %4 : vector<1x16x16x4xbf16> to vector<16x16x4xbf16>
    %c0_9 = arith.constant 0 : index
    %c1_10 = arith.constant 1 : index
    %c0_11 = arith.constant 0 : index
    %c0_12 = arith.constant 0 : index
    %6 = vector.load %arg1[%c0_9, %c1_10, %c0_11, %c0_12] : memref<1x18x18x4xbf16, #tpu.memory_space<vmem>>, vector<1x16x16x4xbf16>
    %7 = vector.shape_cast %6 : vector<1x16x16x4xbf16> to vector<16x16x4xbf16>
    %c0_13 = arith.constant 0 : index
    %c1_14 = arith.constant 1 : index
    %c1_15 = arith.constant 1 : index
    %c0_16 = arith.constant 0 : index
    %8 = vector.load %arg1[%c0_13, %c1_14, %c1_15, %c0_16] : memref<1x18x18x4xbf16, #tpu.memory_space<vmem>>, vector<1x16x16x4xbf16>
    %9 = vector.shape_cast %8 : vector<1x16x16x4xbf16> to vector<16x16x4xbf16>
    %c0_17 = arith.constant 0 : index
    %c1_18 = arith.constant 1 : index
    %c2_19 = arith.constant 2 : index
    %c0_20 = arith.constant 0 : index
    %10 = vector.load %arg1[%c0_17, %c1_18, %c2_19, %c0_20] : memref<1x18x18x4xbf16, #tpu.memory_space<vmem>>, vector<1x16x16x4xbf16>
    %11 = vector.shape_cast %10 : vector<1x16x16x4xbf16> to vector<16x16x4xbf16>
    %c0_21 = arith.constant 0 : index
    %c2_22 = arith.constant 2 : index
    %c0_23 = arith.constant 0 : index
    %c0_24 = arith.constant 0 : index
    %12 = vector.load %arg1[%c0_21, %c2_22, %c0_23, %c0_24] : memref<1x18x18x4xbf16, #tpu.memory_space<vmem>>, vector<1x16x16x4xbf16>
    %13 = vector.shape_cast %12 : vector<1x16x16x4xbf16> to vector<16x16x4xbf16>
    %c0_25 = arith.constant 0 : index
    %c2_26 = arith.constant 2 : index
    %c1_27 = arith.constant 1 : index
    %c0_28 = arith.constant 0 : index
    %14 = vector.load %arg1[%c0_25, %c2_26, %c1_27, %c0_28] : memref<1x18x18x4xbf16, #tpu.memory_space<vmem>>, vector<1x16x16x4xbf16>
    %15 = vector.shape_cast %14 : vector<1x16x16x4xbf16> to vector<16x16x4xbf16>
    %c0_29 = arith.constant 0 : index
    %c2_30 = arith.constant 2 : index
    %c2_31 = arith.constant 2 : index
    %c0_32 = arith.constant 0 : index
    %16 = vector.load %arg1[%c0_29, %c2_30, %c2_31, %c0_32] : memref<1x18x18x4xbf16, #tpu.memory_space<vmem>>, vector<1x16x16x4xbf16>
    %17 = vector.shape_cast %16 : vector<1x16x16x4xbf16> to vector<16x16x4xbf16>
    %18 = tpu.concatenate %1, %3, %5, %7, %9, %11, %13, %15, %17 in 2 : vector<16x16x4xbf16>, vector<16x16x4xbf16>, vector<16x16x4xbf16>, vector<16x16x4xbf16>, vector<16x16x4xbf16>, vector<16x16x4xbf16>, vector<16x16x4xbf16>, vector<16x16x4xbf16>, vector<16x16x4xbf16> -> vector<16x16x36xbf16>
    %19 = vector.shape_cast %18 : vector<16x16x36xbf16> to vector<256x36xbf16>
    %c0_33 = arith.constant 0 : index
    %c0_34 = arith.constant 0 : index
    %20 = vector.load %arg2[%c0_33, %c0_34] : memref<36x128xbf16, #tpu.memory_space<vmem>>, vector<36x128xbf16>
    %cst = arith.constant dense<0.000000e+00> : vector<256x128xf32>
    %21 = tpu.matmul %19, %20, %cst {dimension_numbers = #tpu.dot_dimension_numbers<[1], [0], [0], [1], [0, 0, 1, 1], [], []>} : vector<256x36xbf16>, vector<36x128xbf16>, vector<256x128xf32> -> vector<256x128xf32>
    %c0_35 = arith.constant 0 : index
    %c0_36 = arith.constant 0 : index
    %22 = vector.load %arg3[%c0_35, %c0_36] : memref<1x128xf32, #tpu.memory_space<vmem>>, vector<1x128xf32>
    %23 = vector.broadcast %22 : vector<1x128xf32> to vector<256x128xf32>
    %24 = arith.addf %21, %23 : vector<256x128xf32>
    %cst_37 = arith.constant dense<0.000000e+00> : vector<128xf32>
    %25 = vector.multi_reduction <add>, %24, %cst_37 [0] : vector<256x128xf32> to vector<128xf32>
    %26 = vector.shape_cast %25 : vector<128xf32> to vector<1x128xf32>
    %c0_38 = arith.constant 0 : index
    %c0_39 = arith.constant 0 : index
    %c0_40 = arith.constant 0 : index
    %27 = vector.load %arg4[%c0_38, %c0_39, %c0_40] : memref<1x1x128xf32, #tpu.memory_space<vmem>>, vector<1x1x128xf32>
    %28 = vector.shape_cast %27 : vector<1x1x128xf32> to vector<1x128xf32>
    %29 = vector.shape_cast %26 : vector<1x128xf32> to vector<1x1x128xf32>
    tpu.vector_store %arg4[%c0_38, %c0_39, %c0_40], %29 {strides = array<i32>} : memref<1x1x128xf32, #tpu.memory_space<vmem>>, vector<1x1x128xf32>,
    %30 = arith.mulf %24, %24 : vector<256x128xf32>
    %cst_41 = arith.constant dense<0.000000e+00> : vector<128xf32>
    %31 = vector.multi_reduction <add>, %30, %cst_41 [0] : vector<256x128xf32> to vector<128xf32>
    %32 = vector.shape_cast %31 : vector<128xf32> to vector<1x128xf32>
    %c0_42 = arith.constant 0 : index
    %c0_43 = arith.constant 0 : index
    %c0_44 = arith.constant 0 : index
    %33 = vector.load %arg5[%c0_42, %c0_43, %c0_44] : memref<1x1x128xf32, #tpu.memory_space<vmem>>, vector<1x1x128xf32>
    %34 = vector.shape_cast %33 : vector<1x1x128xf32> to vector<1x128xf32>
    %35 = vector.shape_cast %32 : vector<1x128xf32> to vector<1x1x128xf32>
    tpu.vector_store %arg5[%c0_42, %c0_43, %c0_44], %35 {strides = array<i32>} : memref<1x1x128xf32, #tpu.memory_space<vmem>>, vector<1x1x128xf32>,
    return
  }
  func.func @transform_0(%arg0: i32) -> (i32, i32, i32, i32) {
    %c0_i32 = arith.constant 0 : i32
    %c0_i32_0 = arith.constant 0 : i32
    %c0_i32_1 = arith.constant 0 : i32
    %c0_i32_2 = arith.constant 0 : i32
    return %arg0, %c0_i32, %c0_i32_0, %c0_i32_1 : i32, i32, i32, i32
  }
  func.func @transform_1(%arg0: i32) -> (i32, i32) {
    %c0_i32 = arith.constant 0 : i32
    %c0_i32_0 = arith.constant 0 : i32
    %c0_i32_1 = arith.constant 0 : i32
    return %c0_i32, %c0_i32_0 : i32, i32
  }
  func.func @transform_2(%arg0: i32) -> (i32, i32) {
    %c0_i32 = arith.constant 0 : i32
    %c0_i32_0 = arith.constant 0 : i32
    %c0_i32_1 = arith.constant 0 : i32
    return %c0_i32, %c0_i32_0 : i32, i32
  }
  func.func @transform_3(%arg0: i32) -> (i32, i32, i32) {
    %c0_i32 = arith.constant 0 : i32
    %c0_i32_0 = arith.constant 0 : i32
    %c0_i32_1 = arith.constant 0 : i32
    return %arg0, %c0_i32, %c0_i32_0 : i32, i32, i32
  }
  func.func @transform_4(%arg0: i32) -> (i32, i32, i32) {
    %c0_i32 = arith.constant 0 : i32
    %c0_i32_0 = arith.constant 0 : i32
    %c0_i32_1 = arith.constant 0 : i32
    return %arg0, %c0_i32, %c0_i32_0 : i32, i32, i32
  }
}

module attributes {stable_mosaic.version = 11 : i64} {
  func.func @_conv_bn_relu_pool_kernel(%arg0: i32, %arg1: memref<1x18x18x4xbf16, #tpu.memory_space<vmem>>, %arg2: memref<36x128xbf16, #tpu.memory_space<vmem>>, %arg3: memref<1x128xf32, #tpu.memory_space<vmem>>, %arg4: memref<1x128xf32, #tpu.memory_space<vmem>>, %arg5: memref<1x8x8x128xf32, #tpu.memory_space<vmem>>) attributes {dimension_semantics = [#tpu.dimension_semantics<parallel>], iteration_bounds = array<i64: 2>, scalar_prefetch = 0 : i64, scratch_operands = 0 : i64, tpu.core_type = #tpu.core_type<tc>, window_params = [{transform_indices = @transform_0, window_bounds = array<i64: 1, 18, 18, 4>}, {pipeline_mode = #tpu.pipeline_mode<synchronous>, transform_indices = @transform_1, window_bounds = array<i64: 36, 128>}, {pipeline_mode = #tpu.pipeline_mode<synchronous>, transform_indices = @transform_2, window_bounds = array<i64: 1, 128>}, {pipeline_mode = #tpu.pipeline_mode<synchronous>, transform_indices = @transform_3, window_bounds = array<i64: 1, 128>}, {transform_indices = @transform_4, window_bounds = array<i64: 1, 8, 8, 128>}]} {
    %c0 = arith.constant 0 : index
    %c0_0 = arith.constant 0 : index
    %c0_1 = arith.constant 0 : index
    %c0_2 = arith.constant 0 : index
    %0 = vector.load %arg1[%c0, %c0_0, %c0_1, %c0_2] : memref<1x18x18x4xbf16, #tpu.memory_space<vmem>>, vector<1x16x16x4xbf16>
    %1 = vector.shape_cast %0 : vector<1x16x16x4xbf16> to vector<16x16x4xbf16>
    %c0_3 = arith.constant 0 : index
    %c0_4 = arith.constant 0 : index
    %c1 = arith.constant 1 : index
    %c0_5 = arith.constant 0 : index
    %2 = vector.load %arg1[%c0_3, %c0_4, %c1, %c0_5] : memref<1x18x18x4xbf16, #tpu.memory_space<vmem>>, vector<1x16x16x4xbf16>
    %3 = vector.shape_cast %2 : vector<1x16x16x4xbf16> to vector<16x16x4xbf16>
    %c0_6 = arith.constant 0 : index
    %c0_7 = arith.constant 0 : index
    %c2 = arith.constant 2 : index
    %c0_8 = arith.constant 0 : index
    %4 = vector.load %arg1[%c0_6, %c0_7, %c2, %c0_8] : memref<1x18x18x4xbf16, #tpu.memory_space<vmem>>, vector<1x16x16x4xbf16>
    %5 = vector.shape_cast %4 : vector<1x16x16x4xbf16> to vector<16x16x4xbf16>
    %c0_9 = arith.constant 0 : index
    %c1_10 = arith.constant 1 : index
    %c0_11 = arith.constant 0 : index
    %c0_12 = arith.constant 0 : index
    %6 = vector.load %arg1[%c0_9, %c1_10, %c0_11, %c0_12] : memref<1x18x18x4xbf16, #tpu.memory_space<vmem>>, vector<1x16x16x4xbf16>
    %7 = vector.shape_cast %6 : vector<1x16x16x4xbf16> to vector<16x16x4xbf16>
    %c0_13 = arith.constant 0 : index
    %c1_14 = arith.constant 1 : index
    %c1_15 = arith.constant 1 : index
    %c0_16 = arith.constant 0 : index
    %8 = vector.load %arg1[%c0_13, %c1_14, %c1_15, %c0_16] : memref<1x18x18x4xbf16, #tpu.memory_space<vmem>>, vector<1x16x16x4xbf16>
    %9 = vector.shape_cast %8 : vector<1x16x16x4xbf16> to vector<16x16x4xbf16>
    %c0_17 = arith.constant 0 : index
    %c1_18 = arith.constant 1 : index
    %c2_19 = arith.constant 2 : index
    %c0_20 = arith.constant 0 : index
    %10 = vector.load %arg1[%c0_17, %c1_18, %c2_19, %c0_20] : memref<1x18x18x4xbf16, #tpu.memory_space<vmem>>, vector<1x16x16x4xbf16>
    %11 = vector.shape_cast %10 : vector<1x16x16x4xbf16> to vector<16x16x4xbf16>
    %c0_21 = arith.constant 0 : index
    %c2_22 = arith.constant 2 : index
    %c0_23 = arith.constant 0 : index
    %c0_24 = arith.constant 0 : index
    %12 = vector.load %arg1[%c0_21, %c2_22, %c0_23, %c0_24] : memref<1x18x18x4xbf16, #tpu.memory_space<vmem>>, vector<1x16x16x4xbf16>
    %13 = vector.shape_cast %12 : vector<1x16x16x4xbf16> to vector<16x16x4xbf16>
    %c0_25 = arith.constant 0 : index
    %c2_26 = arith.constant 2 : index
    %c1_27 = arith.constant 1 : index
    %c0_28 = arith.constant 0 : index
    %14 = vector.load %arg1[%c0_25, %c2_26, %c1_27, %c0_28] : memref<1x18x18x4xbf16, #tpu.memory_space<vmem>>, vector<1x16x16x4xbf16>
    %15 = vector.shape_cast %14 : vector<1x16x16x4xbf16> to vector<16x16x4xbf16>
    %c0_29 = arith.constant 0 : index
    %c2_30 = arith.constant 2 : index
    %c2_31 = arith.constant 2 : index
    %c0_32 = arith.constant 0 : index
    %16 = vector.load %arg1[%c0_29, %c2_30, %c2_31, %c0_32] : memref<1x18x18x4xbf16, #tpu.memory_space<vmem>>, vector<1x16x16x4xbf16>
    %17 = vector.shape_cast %16 : vector<1x16x16x4xbf16> to vector<16x16x4xbf16>
    %18 = tpu.concatenate %1, %3, %5, %7, %9, %11, %13, %15, %17 in 2 : vector<16x16x4xbf16>, vector<16x16x4xbf16>, vector<16x16x4xbf16>, vector<16x16x4xbf16>, vector<16x16x4xbf16>, vector<16x16x4xbf16>, vector<16x16x4xbf16>, vector<16x16x4xbf16>, vector<16x16x4xbf16> -> vector<16x16x36xbf16>
    %19 = vector.shape_cast %18 : vector<16x16x36xbf16> to vector<256x36xbf16>
    %c0_33 = arith.constant 0 : index
    %c0_34 = arith.constant 0 : index
    %20 = vector.load %arg2[%c0_33, %c0_34] : memref<36x128xbf16, #tpu.memory_space<vmem>>, vector<36x128xbf16>
    %cst = arith.constant dense<0.000000e+00> : vector<256x128xf32>
    %21 = tpu.matmul %19, %20, %cst {dimension_numbers = #tpu.dot_dimension_numbers<[1], [0], [0], [1], [0, 0, 1, 1], [], []>} : vector<256x36xbf16>, vector<36x128xbf16>, vector<256x128xf32> -> vector<256x128xf32>
    %c0_35 = arith.constant 0 : index
    %c0_36 = arith.constant 0 : index
    %22 = vector.load %arg3[%c0_35, %c0_36] : memref<1x128xf32, #tpu.memory_space<vmem>>, vector<1x128xf32>
    %23 = vector.broadcast %22 : vector<1x128xf32> to vector<256x128xf32>
    %24 = arith.mulf %21, %23 : vector<256x128xf32>
    %c0_37 = arith.constant 0 : index
    %c0_38 = arith.constant 0 : index
    %25 = vector.load %arg4[%c0_37, %c0_38] : memref<1x128xf32, #tpu.memory_space<vmem>>, vector<1x128xf32>
    %26 = vector.broadcast %25 : vector<1x128xf32> to vector<256x128xf32>
    %27 = arith.addf %24, %26 : vector<256x128xf32>
    %cst_39 = arith.constant 0.000000e+00 : f32
    %28 = vector.broadcast %cst_39 : f32 to vector<256x128xf32>
    %29 = arith.maximumf %27, %28 : vector<256x128xf32>
    %30 = vector.shape_cast %29 : vector<256x128xf32> to vector<16x16x128xf32>
    %31 = vector.shape_cast %30 : vector<16x16x128xf32> to vector<8x2x16x128xf32>
    %32 = vector.extract_strided_slice %31 {offsets = [0, 0, 0, 0], sizes = [8, 1, 16, 128], strides = [1, 1, 1, 1]} : vector<8x2x16x128xf32> to vector<8x1x16x128xf32>
    %33 = vector.shape_cast %32 : vector<8x1x16x128xf32> to vector<8x16x128xf32>
    %34 = vector.extract_strided_slice %31 {offsets = [0, 1, 0, 0], sizes = [8, 1, 16, 128], strides = [1, 1, 1, 1]} : vector<8x2x16x128xf32> to vector<8x1x16x128xf32>
    %35 = vector.shape_cast %34 : vector<8x1x16x128xf32> to vector<8x16x128xf32>
    %36 = arith.maximumf %33, %35 : vector<8x16x128xf32>
    %37 = vector.shape_cast %36 : vector<8x16x128xf32> to vector<8x8x2x128xf32>
    %38 = vector.extract_strided_slice %37 {offsets = [0, 0, 0, 0], sizes = [8, 8, 1, 128], strides = [1, 1, 1, 1]} : vector<8x8x2x128xf32> to vector<8x8x1x128xf32>
    %39 = vector.shape_cast %38 : vector<8x8x1x128xf32> to vector<8x8x128xf32>
    %40 = vector.extract_strided_slice %37 {offsets = [0, 0, 1, 0], sizes = [8, 8, 1, 128], strides = [1, 1, 1, 1]} : vector<8x8x2x128xf32> to vector<8x8x1x128xf32>
    %41 = vector.shape_cast %40 : vector<8x8x1x128xf32> to vector<8x8x128xf32>
    %42 = arith.maximumf %39, %41 : vector<8x8x128xf32>
    %c0_40 = arith.constant 0 : index
    %c0_41 = arith.constant 0 : index
    %c0_42 = arith.constant 0 : index
    %c0_43 = arith.constant 0 : index
    %43 = vector.load %arg5[%c0_40, %c0_41, %c0_42, %c0_43] : memref<1x8x8x128xf32, #tpu.memory_space<vmem>>, vector<1x8x8x128xf32>
    %44 = vector.shape_cast %43 : vector<1x8x8x128xf32> to vector<8x8x128xf32>
    %45 = vector.shape_cast %42 : vector<8x8x128xf32> to vector<1x8x8x128xf32>
    tpu.vector_store %arg5[%c0_40, %c0_41, %c0_42, %c0_43], %45 {strides = array<i32>} : memref<1x8x8x128xf32, #tpu.memory_space<vmem>>, vector<1x8x8x128xf32>,
    return
  }
  func.func @transform_0(%arg0: i32) -> (i32, i32, i32, i32) {
    %c0_i32 = arith.constant 0 : i32
    %c0_i32_0 = arith.constant 0 : i32
    %c0_i32_1 = arith.constant 0 : i32
    %c0_i32_2 = arith.constant 0 : i32
    return %arg0, %c0_i32, %c0_i32_0, %c0_i32_1 : i32, i32, i32, i32
  }
  func.func @transform_1(%arg0: i32) -> (i32, i32) {
    %c0_i32 = arith.constant 0 : i32
    %c0_i32_0 = arith.constant 0 : i32
    %c0_i32_1 = arith.constant 0 : i32
    return %c0_i32, %c0_i32_0 : i32, i32
  }
  func.func @transform_2(%arg0: i32) -> (i32, i32) {
    %c0_i32 = arith.constant 0 : i32
    %c0_i32_0 = arith.constant 0 : i32
    %c0_i32_1 = arith.constant 0 : i32
    return %c0_i32, %c0_i32_0 : i32, i32
  }
  func.func @transform_3(%arg0: i32) -> (i32, i32) {
    %c0_i32 = arith.constant 0 : i32
    %c0_i32_0 = arith.constant 0 : i32
    %c0_i32_1 = arith.constant 0 : i32
    return %c0_i32, %c0_i32_0 : i32, i32
  }
  func.func @transform_4(%arg0: i32) -> (i32, i32, i32, i32) {
    %c0_i32 = arith.constant 0 : i32
    %c0_i32_0 = arith.constant 0 : i32
    %c0_i32_1 = arith.constant 0 : i32
    %c0_i32_2 = arith.constant 0 : i32
    return %arg0, %c0_i32, %c0_i32_0, %c0_i32_1 : i32, i32, i32, i32
  }
}

</mosaic_0001>

<llo_original>
// kernel: conv_block_forward.2
$region0: #{conv_block_forward.2}
  #allocation0 [shape = 'u32[]', space=smem, size = 0x4, offset = 0x4, fixed_abs, tag = 'smem constant byte address 0x4 - core index']
  #allocation1 [shape = 'u32[72,128]{1,0:T(1,128)}', space=vmem, size = 0x9000, scoped, tag = 'internal scratch']
  %s0 = inlined_call_operand.vmem [shape: bf16[2,18,18,4], index: 0, kind: input, shape index: {}]
  %s1 = inlined_call_operand.vmem [shape: bf16[36,128], index: 1, kind: input, shape index: {}]
  %s2 = inlined_call_operand.vmem [shape: f32[1,128], index: 2, kind: input, shape index: {}]
  %s3 = inlined_call_operand.vmem [shape: f32[2,1,128], index: 3, kind: output, shape index: {0}]
  %s4 = inlined_call_operand.vmem [shape: f32[2,1,128], index: 4, kind: output, shape index: {1}]
  %5 = xla_tuple %s3, %s4
  %s6 = sld [smem:[#allocation0]]
  $region53: #{conv_block_forward.2} parent=0
    _
  %s8 = ssub.s32 1, %s6
  %s9 = scalar_select 0, %s8, %s6
  loop: start=0, step=1, limit=4
  $region2: #{conv_block_forward.2} parent=0 // loop_pre_header
    _
  $region3: #{conv_block_forward.2} parent=0 // loop_header
    %s11 = sphi 0, %s15
    %p12 = scmp.ge.s32.totalorder %s11, 4
    %s21 = sphi 0, %s23
    %s24 = sphi 0, %s21
    %s25 = sphi 0, %s24
    %s41 = sphi 0, %s25
    %s45 = sphi 0, %s45
    %s47 = sphi 0, %s45
    %s48 = sphi 0, %s47
    %s62 = sphi 0, %s48
    %s66 = sphi 0, %s66
    %s68 = sphi 0, %s66
    %s69 = sphi 0, %s68
    %s83 = sphi 0, %s69
    %s89 = sphi 0, %s91
    %s92 = sphi 0, %s89
    %s93 = sphi 0, %s92
    %s109 = sphi 0, %s93
    %s115 = sphi 0, %s117
    %s118 = sphi 0, %s115
    %s119 = sphi 0, %s118
    %s135 = sphi 0, %s119
  $region4: #{conv_block_forward.2} parent=0 // loop_header_branch
    %14 = sbr.rel (%p12) target = $region8
  $region5: #{conv_block_forward.2} parent=0 // loop_body
    %s16 = ssub.s32 %s11, 1
    %s17 = ssub.s32 %s11, 2
    %s18 = sadd.s32 %s11, 1
    %s19 = ssub.s32 %s11, %s18
    %p20 = scmp.eq.s32.totalorder %s19, 0
    %s22 = sadd.s32 %s21, 1
    %s23 = scalar_select %p20, %s21, %s22
    %p26 = pneg %p20
    %p27 = scmp.eq.s32.totalorder %s11, 1
    %p28 = por %p26, %p27
    %p29 = scmp.ne.s32.totalorder %s21, %s24
    %p30 = scmp.eq.s32.totalorder %s11, 0
    %p31 = por %p29, %p30
    %p32 = scmp.ne.s32.totalorder %s21, %s24
    %p33 = scmp.eq.s32.totalorder %s16, 1
    %p34 = por %p32, %p33
    %p35 = scmp.ne.s32.totalorder %s24, %s25
    %p36 = scmp.eq.s32.totalorder %s16, 0
    %p37 = por %p35, %p36
    %p38 = scmp.ne.s32.totalorder %s24, %s25
    %p39 = scmp.eq.s32.totalorder %s17, 1
    %p40 = por %p38, %p39
    %p42 = scmp.ne.s32.totalorder %s25, %s41
    %p43 = scmp.eq.s32.totalorder %s17, 0
    %p44 = por %p42, %p43
    %s46 = sadd.s32 %s45, 1
    %p49 = scmp.eq.s32.totalorder %s11, 1
    %p50 = scmp.ne.s32.totalorder %s45, %s47
    %p51 = scmp.eq.s32.totalorder %s11, 0
    %p52 = por %p50, %p51
    %p53 = scmp.ne.s32.totalorder %s45, %s47
    %p54 = scmp.eq.s32.totalorder %s16, 1
    %p55 = por %p53, %p54
    %p56 = scmp.ne.s32.totalorder %s47, %s48
    %p57 = scmp.eq.s32.totalorder %s16, 0
    %p58 = por %p56, %p57
    %p59 = scmp.ne.s32.totalorder %s47, %s48
    %p60 = scmp.eq.s32.totalorder %s17, 1
    %p61 = por %p59, %p60
    %p63 = scmp.ne.s32.totalorder %s48, %s62
    %p64 = scmp.eq.s32.totalorder %s17, 0
    %p65 = por %p63, %p64
    %s67 = sadd.s32 %s66, 1
    %p70 = scmp.eq.s32.totalorder %s11, 1
    %p71 = scmp.ne.s32.totalorder %s66, %s68
    %p72 = scmp.eq.s32.totalorder %s11, 0
    %p73 = por %p71, %p72
    %p74 = scmp.ne.s32.totalorder %s66, %s68
    %p75 = scmp.eq.s32.totalorder %s16, 1
    %p76 = por %p74, %p75
    %p77 = scmp.ne.s32.totalorder %s68, %s69
    %p78 = scmp.eq.s32.totalorder %s16, 0
    %p79 = por %p77, %p78
    %p80 = scmp.ne.s32.totalorder %s68, %s69
    %p81 = scmp.eq.s32.totalorder %s17, 1
    %p82 = por %p80, %p81
    %p84 = scmp.ne.s32.totalorder %s69, %s83
    %p85 = scmp.eq.s32.totalorder %s17, 0
    %p86 = por %p84, %p85
    %s87 = ssub.s32 %s11, %s18
    %p88 = scmp.eq.s32.totalorder %s87, 0
    %s90 = sadd.s32 %s89, 1
    %s91 = scalar_select %p88, %s89, %s90
    %p94 = pneg %p88
    %p95 = scmp.eq.s32.totalorder %s11, 1
    %p96 = por %p94, %p95
    %p97 = scmp.ne.s32.totalorder %s89, %s92
    %p98 = scmp.eq.s32.totalorder %s11, 0
    %p99 = por %p97, %p98
    %p100 = scmp.ne.s32.totalorder %s89, %s92
    %p101 = scmp.eq.s32.totalorder %s16, 1
    %p102 = por %p100, %p101
    %p103 = scmp.ne.s32.totalorder %s92, %s93
    %p104 = scmp.eq.s32.totalorder %s16, 0
    %p105 = por %p103, %p104
    %p106 = scmp.ne.s32.totalorder %s92, %s93
    %p107 = scmp.eq.s32.totalorder %s17, 1
    %p108 = por %p106, %p107
    %p110 = scmp.ne.s32.totalorder %s93, %s109
    %p111 = scmp.eq.s32.totalorder %s17, 0
    %p112 = por %p110, %p111
    %s113 = ssub.s32 %s11, %s18
    %p114 = scmp.eq.s32.totalorder %s113, 0
    %s116 = sadd.s32 %s115, 1
    %s117 = scalar_select %p114, %s115, %s116
    %p120 = pneg %p114
    %p121 = scmp.eq.s32.totalorder %s11, 1
    %p122 = por %p120, %p121
    %p123 = scmp.ne.s32.totalorder %s115, %s118
    %p124 = scmp.eq.s32.totalorder %s11, 0
    %p125 = por %p123, %p124
    %p126 = scmp.ne.s32.totalorder %s115, %s118
    %p127 = scmp.eq.s32.totalorder %s16, 1
    %p128 = por %p126, %p127
    %p129 = scmp.ne.s32.totalorder %s118, %s119
    %p130 = scmp.eq.s32.totalorder %s16, 0
    %p131 = por %p129, %p130
    %p132 = scmp.ne.s32.totalorder %s118, %s119
    %p133 = scmp.eq.s32.totalorder %s17, 1
    %p134 = por %p132, %p133
    %p136 = scmp.ne.s32.totalorder %s119, %s135
    %p137 = scmp.eq.s32.totalorder %s17, 0
    %p138 = por %p136, %p137
    %p139 = scmp.le.s32.totalorder 1, %s11
    %p140 = scmp.lt.s32.totalorder %s11, 3
    %p141 = pnand %p139, %p140
    %p142 = pneg %p141
    // Predicated region
    $region9: #{conv_block_forward.2} parent=5 // pred_check
      _
    $region10: #{conv_block_forward.2} parent=5 // pred_check_branch
      %144 = sbr.rel (%p141) target = $region12
    $region11: #{conv_block_forward.2} parent=5 // pred_region
      %s145 = ssub.s32 %s11, 1
      // Predicated region
      $region13: #{conv_block_forward.2} parent=11 // pred_check
        %p146 = pneg %p58
      $region14: #{conv_block_forward.2} parent=11 // pred_check_branch
        %148 = sbr.rel (%p146) target = $region16
      $region15: #{conv_block_forward.2} parent=11 // pred_region
        _
      $region16: #{conv_block_forward.2} parent=11 // pred_fallthru
        _
      // Predicated region
      $region17: #{conv_block_forward.2} parent=11 // pred_check
        %p149 = pneg %p79
      $region18: #{conv_block_forward.2} parent=11 // pred_check_branch
        %151 = sbr.rel (%p149) target = $region20
      $region19: #{conv_block_forward.2} parent=11 // pred_region
        _
      $region20: #{conv_block_forward.2} parent=11 // pred_fallthru
        _
    $region12: #{conv_block_forward.2} parent=5 // pred_fallthru
      _
    %p152 = scmp.lt.s32.totalorder %s11, 2
    // Predicated region
    $region21: #{conv_block_forward.2} parent=5 // pred_check
      %p153 = pneg %p152
    $region22: #{conv_block_forward.2} parent=5 // pred_check_branch
      %155 = sbr.rel (%p153) target = $region24
    $region23: #{conv_block_forward.2} parent=5 // pred_region
      // Predicated region
      $region25: #{conv_block_forward.2} parent=23 // pred_check
        %p156 = pneg %p31
      $region26: #{conv_block_forward.2} parent=23 // pred_check_branch
        %158 = sbr.rel (%p156) target = $region28
      $region27: #{conv_block_forward.2} parent=23 // pred_region
        %p159 = scmp.lt.s32.totalorder %s11, 1
        %s160 = scalar_select %p159, %s11, 1
        %s161 = smul.addr %s160, 54
        %s162 = smul.addr %s161, 4
        %s163 = scalar_lea.vmem %s0, %s162
      $region28: #{conv_block_forward.2} parent=23 // pred_fallthru
        _
    $region24: #{conv_block_forward.2} parent=5 // pred_fallthru
      _
    %p164 = scmp.le.s32.totalorder 1, %s11
    %p165 = scmp.lt.s32.totalorder %s11, 3
    %p166 = pnand %p164, %p165
    %p167 = pneg %p166
    // Predicated region
    $region29: #{conv_block_forward.2} parent=5 // pred_check
      _
    $region30: #{conv_block_forward.2} parent=5 // pred_check_branch
      %169 = sbr.rel (%p166) target = $region32
    $region31: #{conv_block_forward.2} parent=5 // pred_region
      %s170 = ssub.s32 %s11, 1
      %p171 = scmp.lt.s32.totalorder %s16, 1
      %s172 = scalar_select %p171, %s16, 1
      %s173 = smul.addr %s172, 54
      %s174 = smul.addr %s173, 4
      %s175 = scalar_lea.vmem %s0, %s174
      %p176 = pneg %p37
      %p177 = pneg %p34
      %p178 = pneg %p58
      %p179 = pneg %p55
      %p180 = pneg %p79
      %p181 = pneg %p76
      %p182 = pneg %p105
      %p183 = pneg %p102
      %p184 = scmp.lt.s32.totalorder %s16, 1
      %s185 = scalar_select %p184, %s16, 1
      %s186 = scalar_lea.vmem %s3, %s185
      %p187 = pneg %p131
      %p188 = pneg %p128
      %p189 = scmp.lt.s32.totalorder %s16, 1
      %s190 = scalar_select %p189, %s16, 1
      %s191 = scalar_lea.vmem %s4, %s190
      %p192 = scmp.lt.s32.totalorder %s16, 1
      %s193 = scalar_select %p192, %s16, 1
      %s194 = smul.addr %s193, 54
      %s195 = smul.addr %s194, 4
      %s196 = scalar_lea.vmem %s0, %s195
      %p197 = scmp.lt.s32.totalorder %s16, 1
      %s198 = scalar_select %p197, %s16, 1
      %s199 = scalar_lea.vmem %s3, %s198
      %p200 = scmp.lt.s32.totalorder %s16, 1
      %s201 = scalar_select %p200, %s16, 1
      %s202 = scalar_lea.vmem %s4, %s201
      %v204 = vld [vmem:[%s196] sm:$0xf]
      %v205 = vld [vmem:[%s196 + $0x4] sm:$0xf]
      %v206 = vld [vmem:[%s196 + $0xc] sm:$0xf]
      %v207 = vld [vmem:[%s196 + $0x10] sm:$0xf]
      %v208 = vld [vmem:[%s196 + $0x18] sm:$0xf]
      %v209 = vld [vmem:[%s196 + $0x1c] sm:$0xf]
      %v210 = vld [vmem:[%s196 + $0x24] sm:$0xf]
      %v211 = vld [vmem:[%s196 + $0x28] sm:$0xf]
      %v212 = vld [vmem:[%s196 + $0x30] sm:$0xf]
      %v213 = vld [vmem:[%s196 + $0x34] sm:$0xf]
      %v214 = vld [vmem:[%s196 + $0x3c] sm:$0xf]
      %v215 = vld [vmem:[%s196 + $0x40] sm:$0xf]
      %v216 = vld [vmem:[%s196 + $0x48] sm:$0xf]
      %v217 = vld [vmem:[%s196 + $0x4c] sm:$0xf]
      %v218 = vld [vmem:[%s196 + $0x54] sm:$0xf]
      %v219 = vld [vmem:[%s196 + $0x58] sm:$0xf]
      %v220 = vld [vmem:[%s196 + $0x60] sm:$0xf]
      %v221 = vld [vmem:[%s196 + $0x64] sm:$0xf]
      %v222 = vld [vmem:[%s196 + $0x6c] sm:$0xf]
      %v223 = vld [vmem:[%s196 + $0x70] sm:$0xf]
      %v224 = vld [vmem:[%s196 + $0x78] sm:$0xf]
      %v225 = vld [vmem:[%s196 + $0x7c] sm:$0xf]
      %v226 = vld [vmem:[%s196 + $0x84] sm:$0xf]
      %v227 = vld [vmem:[%s196 + $0x88] sm:$0xf]
      %v228 = vld [vmem:[%s196 + $0x90] sm:$0xf]
      %v229 = vld [vmem:[%s196 + $0x94] sm:$0xf]
      %v230 = vld [vmem:[%s196 + $0x9c] sm:$0xf]
      %v231 = vld [vmem:[%s196 + $0xa0] sm:$0xf]
      %v232 = vld [vmem:[%s196 + $0xa8] sm:$0xf]
      %v233 = vld [vmem:[%s196 + $0xac] sm:$0xf]
      %v234 = vld [vmem:[%s196 + $0xb4] sm:$0xf]
      %v235 = vld [vmem:[%s196 + $0xb8] sm:$0xf]
      %v236 = vld [vmem:[%s196 + $0x8] sm:$0x1]
      %v237 = vld [vmem:[%s196 + $0x14] sm:$0x1]
      %v238 = vld [vmem:[%s196 + $0x20] sm:$0x1]
      %v239 = vld [vmem:[%s196 + $0x2c] sm:$0x1]
      %v240 = vld [vmem:[%s196 + $0x38] sm:$0x1]
      %v241 = vld [vmem:[%s196 + $0x44] sm:$0x1]
      %v242 = vld [vmem:[%s196 + $0x50] sm:$0x1]
      %v243 = vld [vmem:[%s196 + $0x5c] sm:$0x1]
      %v244 = vld [vmem:[%s196 + $0x68] sm:$0x1]
      %v245 = vld [vmem:[%s196 + $0x74] sm:$0x1]
      %v246 = vld [vmem:[%s196 + $0x80] sm:$0x1]
      %v247 = vld [vmem:[%s196 + $0x8c] sm:$0x1]
      %v248 = vld [vmem:[%s196 + $0x98] sm:$0x1]
      %v249 = vld [vmem:[%s196 + $0xa4] sm:$0x1]
      %v250 = vld [vmem:[%s196 + $0xb0] sm:$0x1]
      %v251 = vld [vmem:[%s196 + $0xbc] sm:$0x1]
      %v252 = vld [vmem:[%s196] sm:$0xe]
      %v253 = vld [vmem:[%s196 + $0xc] sm:$0xe]
      %v254 = vld [vmem:[%s196 + $0x18] sm:$0xe]
      %v255 = vld [vmem:[%s196 + $0x24] sm:$0xe]
      %v256 = vld [vmem:[%s196 + $0x30] sm:$0xe]
      %v257 = vld [vmem:[%s196 + $0x3c] sm:$0xe]
      %v258 = vld [vmem:[%s196 + $0x48] sm:$0xe]
      %v259 = vld [vmem:[%s196 + $0x54] sm:$0xe]
      %v260 = vld [vmem:[%s196 + $0x60] sm:$0xe]
      %v261 = vld [vmem:[%s196 + $0x6c] sm:$0xe]
      %v262 = vld [vmem:[%s196 + $0x78] sm:$0xe]
      %v263 = vld [vmem:[%s196 + $0x84] sm:$0xe]
      %v264 = vld [vmem:[%s196 + $0x90] sm:$0xe]
      %v265 = vld [vmem:[%s196 + $0x9c] sm:$0xe]
      %v266 = vld [vmem:[%s196 + $0xa8] sm:$0xe]
      %v267 = vld [vmem:[%s196 + $0xb4] sm:$0xe]
      %s268 = scalar_lea.vmem %s196, 12
      %v269 = vld [vmem:[%s268] sm:$0xf]
      %v270 = vld [vmem:[%s268 + $0x4] sm:$0xf]
      %v271 = vld [vmem:[%s268 + $0xc] sm:$0xf]
      %v272 = vld [vmem:[%s268 + $0x10] sm:$0xf]
      %v273 = vld [vmem:[%s268 + $0x18] sm:$0xf]
      %v274 = vld [vmem:[%s268 + $0x1c] sm:$0xf]
      %v275 = vld [vmem:[%s268 + $0x24] sm:$0xf]
      %v276 = vld [vmem:[%s268 + $0x28] sm:$0xf]
      %v277 = vld [vmem:[%s268 + $0x30] sm:$0xf]
      %v278 = vld [vmem:[%s268 + $0x34] sm:$0xf]
      %v279 = vld [vmem:[%s268 + $0x3c] sm:$0xf]
      %v280 = vld [vmem:[%s268 + $0x40] sm:$0xf]
      %v281 = vld [vmem:[%s268 + $0x48] sm:$0xf]
      %v282 = vld [vmem:[%s268 + $0x4c] sm:$0xf]
      %v283 = vld [vmem:[%s268 + $0x54] sm:$0xf]
      %v284 = vld [vmem:[%s268 + $0x58] sm:$0xf]
      %v285 = vld [vmem:[%s268 + $0x60] sm:$0xf]
      %v286 = vld [vmem:[%s268 + $0x64] sm:$0xf]
      %v287 = vld [vmem:[%s268 + $0x6c] sm:$0xf]
      %v288 = vld [vmem:[%s268 + $0x70] sm:$0xf]
      %v289 = vld [vmem:[%s268 + $0x78] sm:$0xf]
      %v290 = vld [vmem:[%s268 + $0x7c] sm:$0xf]
      %v291 = vld [vmem:[%s268 + $0x84] sm:$0xf]
      %v292 = vld [vmem:[%s268 + $0x88] sm:$0xf]
      %v293 = vld [vmem:[%s268 + $0x90] sm:$0xf]
      %v294 = vld [vmem:[%s268 + $0x94] sm:$0xf]
      %v295 = vld [vmem:[%s268 + $0x9c] sm:$0xf]
      %v296 = vld [vmem:[%s268 + $0xa0] sm:$0xf]
      %v297 = vld [vmem:[%s268 + $0xa8] sm:$0xf]
      %v298 = vld [vmem:[%s268 + $0xac] sm:$0xf]
      %v299 = vld [vmem:[%s268 + $0xb4] sm:$0xf]
      %v300 = vld [vmem:[%s268 + $0xb8] sm:$0xf]
      %v301 = vld [vmem:[%s268 + $0x8] sm:$0x1]
      %v302 = vld [vmem:[%s268 + $0x14] sm:$0x1]
      %v303 = vld [vmem:[%s268 + $0x20] sm:$0x1]
      %v304 = vld [vmem:[%s268 + $0x2c] sm:$0x1]
      %v305 = vld [vmem:[%s268 + $0x38] sm:$0x1]
      %v306 = vld [vmem:[%s268 + $0x44] sm:$0x1]
      %v307 = vld [vmem:[%s268 + $0x50] sm:$0x1]
      %v308 = vld [vmem:[%s268 + $0x5c] sm:$0x1]
      %v309 = vld [vmem:[%s268 + $0x68] sm:$0x1]
      %v310 = vld [vmem:[%s268 + $0x74] sm:$0x1]
      %v311 = vld [vmem:[%s268 + $0x80] sm:$0x1]
      %v312 = vld [vmem:[%s268 + $0x8c] sm:$0x1]
      %v313 = vld [vmem:[%s268 + $0x98] sm:$0x1]
      %v314 = vld [vmem:[%s268 + $0xa4] sm:$0x1]
      %v315 = vld [vmem:[%s268 + $0xb0] sm:$0x1]
      %v316 = vld [vmem:[%s268 + $0xbc] sm:$0x1]
      %v317 = vld [vmem:[%s268] sm:$0xe]
      %v318 = vld [vmem:[%s268 + $0xc] sm:$0xe]
      %v319 = vld [vmem:[%s268 + $0x18] sm:$0xe]
      %v320 = vld [vmem:[%s268 + $0x24] sm:$0xe]
      %v321 = vld [vmem:[%s268 + $0x30] sm:$0xe]
      %v322 = vld [vmem:[%s268 + $0x3c] sm:$0xe]
      %v323 = vld [vmem:[%s268 + $0x48] sm:$0xe]
      %v324 = vld [vmem:[%s268 + $0x54] sm:$0xe]
      %v325 = vld [vmem:[%s268 + $0x60] sm:$0xe]
      %v326 = vld [vmem:[%s268 + $0x6c] sm:$0xe]
      %v327 = vld [vmem:[%s268 + $0x78] sm:$0xe]
      %v328 = vld [vmem:[%s268 + $0x84] sm:$0xe]
      %v329 = vld [vmem:[%s268 + $0x90] sm:$0xe]
      %v330 = vld [vmem:[%s268 + $0x9c] sm:$0xe]
      %v331 = vld [vmem:[%s268 + $0xa8] sm:$0xe]
      %v332 = vld [vmem:[%s268 + $0xb4] sm:$0xe]
      %s333 = scalar_lea.vmem %s196, 24
      %v334 = vld [vmem:[%s333] sm:$0xf]
      %v335 = vld [vmem:[%s333 + $0x4] sm:$0xf]
      %v336 = vld [vmem:[%s333 + $0xc] sm:$0xf]
      %v337 = vld [vmem:[%s333 + $0x10] sm:$0xf]
      %v338 = vld [vmem:[%s333 + $0x18] sm:$0xf]
      %v339 = vld [vmem:[%s333 + $0x1c] sm:$0xf]
      %v340 = vld [vmem:[%s333 + $0x24] sm:$0xf]
      %v341 = vld [vmem:[%s333 + $0x28] sm:$0xf]
      %v342 = vld [vmem:[%s333 + $0x30] sm:$0xf]
      %v343 = vld [vmem:[%s333 + $0x34] sm:$0xf]
      %v344 = vld [vmem:[%s333 + $0x3c] sm:$0xf]
      %v345 = vld [vmem:[%s333 + $0x40] sm:$0xf]
      %v346 = vld [vmem:[%s333 + $0x48] sm:$0xf]
      %v347 = vld [vmem:[%s333 + $0x4c] sm:$0xf]
      %v348 = vld [vmem:[%s333 + $0x54] sm:$0xf]
      %v349 = vld [vmem:[%s333 + $0x58] sm:$0xf]
      %v350 = vld [vmem:[%s333 + $0x60] sm:$0xf]
      %v351 = vld [vmem:[%s333 + $0x64] sm:$0xf]
      %v352 = vld [vmem:[%s333 + $0x6c] sm:$0xf]
      %v353 = vld [vmem:[%s333 + $0x70] sm:$0xf]
      %v354 = vld [vmem:[%s333 + $0x78] sm:$0xf]
      %v355 = vld [vmem:[%s333 + $0x7c] sm:$0xf]
      %v356 = vld [vmem:[%s333 + $0x84] sm:$0xf]
      %v357 = vld [vmem:[%s333 + $0x88] sm:$0xf]
      %v358 = vld [vmem:[%s333 + $0x90] sm:$0xf]
      %v359 = vld [vmem:[%s333 + $0x94] sm:$0xf]
      %v360 = vld [vmem:[%s333 + $0x9c] sm:$0xf]
      %v361 = vld [vmem:[%s333 + $0xa0] sm:$0xf]
      %v362 = vld [vmem:[%s333 + $0xa8] sm:$0xf]
      %v363 = vld [vmem:[%s333 + $0xac] sm:$0xf]
      %v364 = vld [vmem:[%s333 + $0xb4] sm:$0xf]
      %v365 = vld [vmem:[%s333 + $0xb8] sm:$0xf]
      %v366 = vld [vmem:[%s333 + $0x8] sm:$0x1]
      %v367 = vld [vmem:[%s333 + $0x14] sm:$0x1]
      %v368 = vld [vmem:[%s333 + $0x20] sm:$0x1]
      %v369 = vld [vmem:[%s333 + $0x2c] sm:$0x1]
      %v370 = vld [vmem:[%s333 + $0x38] sm:$0x1]
      %v371 = vld [vmem:[%s333 + $0x44] sm:$0x1]
      %v372 = vld [vmem:[%s333 + $0x50] sm:$0x1]
      %v373 = vld [vmem:[%s333 + $0x5c] sm:$0x1]
      %v374 = vld [vmem:[%s333 + $0x68] sm:$0x1]
      %v375 = vld [vmem:[%s333 + $0x74] sm:$0x1]
      %v376 = vld [vmem:[%s333 + $0x80] sm:$0x1]
      %v377 = vld [vmem:[%s333 + $0x8c] sm:$0x1]
      %v378 = vld [vmem:[%s333 + $0x98] sm:$0x1]
      %v379 = vld [vmem:[%s333 + $0xa4] sm:$0x1]
      %v380 = vld [vmem:[%s333 + $0xb0] sm:$0x1]
      %v381 = vld [vmem:[%s333 + $0xbc] sm:$0x1]
      %v382 = vld [vmem:[%s333] sm:$0xe]
      %v383 = vld [vmem:[%s333 + $0xc] sm:$0xe]
      %v384 = vld [vmem:[%s333 + $0x18] sm:$0xe]
      %v385 = vld [vmem:[%s333 + $0x24] sm:$0xe]
      %v386 = vld [vmem:[%s333 + $0x30] sm:$0xe]
      %v387 = vld [vmem:[%s333 + $0x3c] sm:$0xe]
      %v388 = vld [vmem:[%s333 + $0x48] sm:$0xe]
      %v389 = vld [vmem:[%s333 + $0x54] sm:$0xe]
      %v390 = vld [vmem:[%s333 + $0x60] sm:$0xe]
      %v391 = vld [vmem:[%s333 + $0x6c] sm:$0xe]
      %v392 = vld [vmem:[%s333 + $0x78] sm:$0xe]
      %v393 = vld [vmem:[%s333 + $0x84] sm:$0xe]
      %v394 = vld [vmem:[%s333 + $0x90] sm:$0xe]
      %v395 = vld [vmem:[%s333 + $0x9c] sm:$0xe]
      %v396 = vld [vmem:[%s333 + $0xa8] sm:$0xe]
      %v397 = vld [vmem:[%s333 + $0xb4] sm:$0xe]
      %v430 = vunpack.c.l.b16 %v204
      %v431 = vunpack.c.l.b16 %v205
      %v432 = vunpack.c.l.b16 %v206
      %v433 = vunpack.c.l.b16 %v207
      %v434 = vunpack.c.l.b16 %v208
      %v435 = vunpack.c.l.b16 %v209
      %v436 = vunpack.c.l.b16 %v210
      %v437 = vunpack.c.l.b16 %v211
      %v438 = vunpack.c.l.b16 %v212
      %v439 = vunpack.c.l.b16 %v213
      %v440 = vunpack.c.l.b16 %v214
      %v441 = vunpack.c.l.b16 %v215
      %v442 = vunpack.c.l.b16 %v216
      %v443 = vunpack.c.l.b16 %v217
      %v444 = vunpack.c.l.b16 %v218
      %v445 = vunpack.c.l.b16 %v219
      %v446 = vunpack.c.l.b16 %v220
      %v447 = vunpack.c.l.b16 %v221
      %v448 = vunpack.c.l.b16 %v222
      %v449 = vunpack.c.l.b16 %v223
      %v450 = vunpack.c.l.b16 %v224
      %v451 = vunpack.c.l.b16 %v225
      %v452 = vunpack.c.l.b16 %v226
      %v453 = vunpack.c.l.b16 %v227
      %v454 = vunpack.c.l.b16 %v228
      %v455 = vunpack.c.l.b16 %v229
      %v456 = vunpack.c.l.b16 %v230
      %v457 = vunpack.c.l.b16 %v231
      %v458 = vunpack.c.l.b16 %v232
      %v459 = vunpack.c.l.b16 %v233
      %v460 = vunpack.c.l.b16 %v234
      %v461 = vunpack.c.l.b16 %v235
      %v462 = vpack.c.b16 %v431, %v430
      %v463 = vpack.c.b16 %v433, %v432
      %v464 = vpack.c.b16 %v435, %v434
      %v465 = vpack.c.b16 %v437, %v436
      %v466 = vpack.c.b16 %v439, %v438
      %v467 = vpack.c.b16 %v441, %v440
      %v468 = vpack.c.b16 %v443, %v442
      %v469 = vpack.c.b16 %v445, %v444
      %v470 = vpack.c.b16 %v447, %v446
      %v471 = vpack.c.b16 %v449, %v448
      %v472 = vpack.c.b16 %v451, %v450
      %v473 = vpack.c.b16 %v453, %v452
      %v474 = vpack.c.b16 %v455, %v454
      %v475 = vpack.c.b16 %v457, %v456
      %v476 = vpack.c.b16 %v459, %v458
      %v477 = vpack.c.b16 %v461, %v460
      %v494 = vunpack.c.l.b16 %v236
      %v495 = vunpack.c.l.b16 %v237
      %v496 = vunpack.c.l.b16 %v238
      %v497 = vunpack.c.l.b16 %v239
      %v498 = vunpack.c.l.b16 %v240
      %v499 = vunpack.c.l.b16 %v241
      %v500 = vunpack.c.l.b16 %v242
      %v501 = vunpack.c.l.b16 %v243
      %v502 = vunpack.c.l.b16 %v244
      %v503 = vunpack.c.l.b16 %v245
      %v504 = vunpack.c.l.b16 %v246
      %v505 = vunpack.c.l.b16 %v247
      %v506 = vunpack.c.l.b16 %v248
      %v507 = vunpack.c.l.b16 %v249
      %v508 = vunpack.c.l.b16 %v250
      %v509 = vunpack.c.l.b16 %v251
      %v510 = vpack.c.b16 %v494, %v494
      %v511 = vpack.c.b16 %v495, %v495
      %v512 = vpack.c.b16 %v496, %v496
      %v513 = vpack.c.b16 %v497, %v497
      %v514 = vpack.c.b16 %v498, %v498
      %v515 = vpack.c.b16 %v499, %v499
      %v516 = vpack.c.b16 %v500, %v500
      %v517 = vpack.c.b16 %v501, %v501
      %v518 = vpack.c.b16 %v502, %v502
      %v519 = vpack.c.b16 %v503, %v503
      %v520 = vpack.c.b16 %v504, %v504
      %v521 = vpack.c.b16 %v505, %v505
      %v522 = vpack.c.b16 %v506, %v506
      %v523 = vpack.c.b16 %v507, %v507
      %v524 = vpack.c.b16 %v508, %v508
      %v525 = vpack.c.b16 %v509, %v509
      %vm526 = vsmask.f32 7424
      %v528 = vshrl.u32 %v462, 16
      %v530 = vshll.u32 %v462, 16
      %v532 = vrot.slane %v530, 1
      %v533 = vor.u32 %v528, %v532
      %v535 = vshll.u32 %v510, 16
      %v537 = vrot.slane %v535, 1
      %v538 = vsel %vm526, %v533, %v537
      %v540 = vshrl.u32 %v463, 16
      %v542 = vshll.u32 %v463, 16
      %v544 = vrot.slane %v542, 1
      %v545 = vor.u32 %v540, %v544
      %v547 = vshll.u32 %v511, 16
      %v549 = vrot.slane %v547, 1
      %v550 = vsel %vm526, %v545, %v549
      %v552 = vshrl.u32 %v464, 16
      %v554 = vshll.u32 %v464, 16
      %v556 = vrot.slane %v554, 1
      %v557 = vor.u32 %v552, %v556
      %v559 = vshll.u32 %v512, 16
      %v561 = vrot.slane %v559, 1
      %v562 = vsel %vm526, %v557, %v561
      %v564 = vshrl.u32 %v465, 16
      %v566 = vshll.u32 %v465, 16
      %v568 = vrot.slane %v566, 1
      %v569 = vor.u32 %v564, %v568
      %v571 = vshll.u32 %v513, 16
      %v573 = vrot.slane %v571, 1
      %v574 = vsel %vm526, %v569, %v573
      %v576 = vshrl.u32 %v466, 16
      %v578 = vshll.u32 %v466, 16
      %v580 = vrot.slane %v578, 1
      %v581 = vor.u32 %v576, %v580
      %v583 = vshll.u32 %v514, 16
      %v585 = vrot.slane %v583, 1
      %v586 = vsel %vm526, %v581, %v585
      %v588 = vshrl.u32 %v467, 16
      %v590 = vshll.u32 %v467, 16
      %v592 = vrot.slane %v590, 1
      %v593 = vor.u32 %v588, %v592
      %v595 = vshll.u32 %v515, 16
      %v597 = vrot.slane %v595, 1
      %v598 = vsel %vm526, %v593, %v597
      %v600 = vshrl.u32 %v468, 16
      %v602 = vshll.u32 %v468, 16
      %v604 = vrot.slane %v602, 1
      %v605 = vor.u32 %v600, %v604
      %v607 = vshll.u32 %v516, 16
      %v609 = vrot.slane %v607, 1
      %v610 = vsel %vm526, %v605, %v609
      %v612 = vshrl.u32 %v469, 16
      %v614 = vshll.u32 %v469, 16
      %v616 = vrot.slane %v614, 1
      %v617 = vor.u32 %v612, %v616
      %v619 = vshll.u32 %v517, 16
      %v621 = vrot.slane %v619, 1
      %v622 = vsel %vm526, %v617, %v621
      %v624 = vshrl.u32 %v470, 16
      %v626 = vshll.u32 %v470, 16
      %v628 = vrot.slane %v626, 1
      %v629 = vor.u32 %v624, %v628
      %v631 = vshll.u32 %v518, 16
      %v633 = vrot.slane %v631, 1
      %v634 = vsel %vm526, %v629, %v633
      %v636 = vshrl.u32 %v471, 16
      %v638 = vshll.u32 %v471, 16
      %v640 = vrot.slane %v638, 1
      %v641 = vor.u32 %v636, %v640
      %v643 = vshll.u32 %v519, 16
      %v645 = vrot.slane %v643, 1
      %v646 = vsel %vm526, %v641, %v645
      %v648 = vshrl.u32 %v472, 16
      %v650 = vshll.u32 %v472, 16
      %v652 = vrot.slane %v650, 1
      %v653 = vor.u32 %v648, %v652
      %v655 = vshll.u32 %v520, 16
      %v657 = vrot.slane %v655, 1
      %v658 = vsel %vm526, %v653, %v657
      %v660 = vshrl.u32 %v473, 16
      %v662 = vshll.u32 %v473, 16
      %v664 = vrot.slane %v662, 1
      %v665 = vor.u32 %v660, %v664
      %v667 = vshll.u32 %v521, 16
      %v669 = vrot.slane %v667, 1
      %v670 = vsel %vm526, %v665, %v669
      %v672 = vshrl.u32 %v474, 16
      %v674 = vshll.u32 %v474, 16
      %v676 = vrot.slane %v674, 1
      %v677 = vor.u32 %v672, %v676
      %v679 = vshll.u32 %v522, 16
      %v681 = vrot.slane %v679, 1
      %v682 = vsel %vm526, %v677, %v681
      %v684 = vshrl.u32 %v475, 16
      %v686 = vshll.u32 %v475, 16
      %v688 = vrot.slane %v686, 1
      %v689 = vor.u32 %v684, %v688
      %v691 = vshll.u32 %v523, 16
      %v693 = vrot.slane %v691, 1
      %v694 = vsel %vm526, %v689, %v693
      %v696 = vshrl.u32 %v476, 16
      %v698 = vshll.u32 %v476, 16
      %v700 = vrot.slane %v698, 1
      %v701 = vor.u32 %v696, %v700
      %v703 = vshll.u32 %v524, 16
      %v705 = vrot.slane %v703, 1
      %v706 = vsel %vm526, %v701, %v705
      %v708 = vshrl.u32 %v477, 16
      %v710 = vshll.u32 %v477, 16
      %v712 = vrot.slane %v710, 1
      %v713 = vor.u32 %v708, %v712
      %v715 = vshll.u32 %v525, 16
      %v717 = vrot.slane %v715, 1
      %v718 = vsel %vm526, %v713, %v717
      %719 = vrot.lane.b32.xlu0 %v538, 4
      %v720 = vpop.permute.xlu0 %719
      %721 = vrot.lane.b32.xlu0 %v550, 4
      %v722 = vpop.permute.xlu0 %721
      %723 = vrot.lane.b32.xlu0 %v562, 4
      %v724 = vpop.permute.xlu0 %723
      %725 = vrot.lane.b32.xlu0 %v574, 4
      %v726 = vpop.permute.xlu0 %725
      %727 = vrot.lane.b32.xlu0 %v586, 4
      %v728 = vpop.permute.xlu0 %727
      %729 = vrot.lane.b32.xlu0 %v598, 4
      %v730 = vpop.permute.xlu0 %729
      %731 = vrot.lane.b32.xlu0 %v610, 4
      %v732 = vpop.permute.xlu0 %731
      %733 = vrot.lane.b32.xlu0 %v622, 4
      %v734 = vpop.permute.xlu0 %733
      %735 = vrot.lane.b32.xlu0 %v634, 4
      %v736 = vpop.permute.xlu0 %735
      %737 = vrot.lane.b32.xlu0 %v646, 4
      %v738 = vpop.permute.xlu0 %737
      %739 = vrot.lane.b32.xlu0 %v658, 4
      %v740 = vpop.permute.xlu0 %739
      %741 = vrot.lane.b32.xlu0 %v670, 4
      %v742 = vpop.permute.xlu0 %741
      %743 = vrot.lane.b32.xlu0 %v682, 4
      %v744 = vpop.permute.xlu0 %743
      %745 = vrot.lane.b32.xlu0 %v694, 4
      %v746 = vpop.permute.xlu0 %745
      %747 = vrot.lane.b32.xlu0 %v706, 4
      %v748 = vpop.permute.xlu0 %747
      %749 = vrot.lane.b32.xlu0 %v718, 4
      %v750 = vpop.permute.xlu0 %749
      %v767 = vunpack.c.l.b16 %v252
      %v768 = vunpack.c.l.b16 %v253
      %v769 = vunpack.c.l.b16 %v254
      %v770 = vunpack.c.l.b16 %v255
      %v771 = vunpack.c.l.b16 %v256
      %v772 = vunpack.c.l.b16 %v257
      %v773 = vunpack.c.l.b16 %v258
      %v774 = vunpack.c.l.b16 %v259
      %v775 = vunpack.c.l.b16 %v260
      %v776 = vunpack.c.l.b16 %v261
      %v777 = vunpack.c.l.b16 %v262
      %v778 = vunpack.c.l.b16 %v263
      %v779 = vunpack.c.l.b16 %v264
      %v780 = vunpack.c.l.b16 %v265
      %v781 = vunpack.c.l.b16 %v266
      %v782 = vunpack.c.l.b16 %v267
      %v783 = vpack.c.b16 %v431, %v767
      %v784 = vpack.c.b16 %v433, %v768
      %v785 = vpack.c.b16 %v435, %v769
      %v786 = vpack.c.b16 %v437, %v770
      %v787 = vpack.c.b16 %v439, %v771
      %v788 = vpack.c.b16 %v441, %v772
      %v789 = vpack.c.b16 %v443, %v773
      %v790 = vpack.c.b16 %v445, %v774
      %v791 = vpack.c.b16 %v447, %v775
      %v792 = vpack.c.b16 %v449, %v776
      %v793 = vpack.c.b16 %v451, %v777
      %v794 = vpack.c.b16 %v453, %v778
      %v795 = vpack.c.b16 %v455, %v779
      %v796 = vpack.c.b16 %v457, %v780
      %v797 = vpack.c.b16 %v459, %v781
      %v798 = vpack.c.b16 %v461, %v782
      %vm799 = vcmask 1046528
      %v800 = vrot.slane %v783, 1
      %v801 = vrot.slane %v510, 1
      %v802 = vsel %vm799, %v800, %v801
      %v803 = vrot.slane %v784, 1
      %v804 = vrot.slane %v511, 1
      %v805 = vsel %vm799, %v803, %v804
      %v806 = vrot.slane %v785, 1
      %v807 = vrot.slane %v512, 1
      %v808 = vsel %vm799, %v806, %v807
      %v809 = vrot.slane %v786, 1
      %v810 = vrot.slane %v513, 1
      %v811 = vsel %vm799, %v809, %v810
      %v812 = vrot.slane %v787, 1
      %v813 = vrot.slane %v514, 1
      %v814 = vsel %vm799, %v812, %v813
      %v815 = vrot.slane %v788, 1
      %v816 = vrot.slane %v515, 1
      %v817 = vsel %vm799, %v815, %v816
      %v818 = vrot.slane %v789, 1
      %v819 = vrot.slane %v516, 1
      %v820 = vsel %vm799, %v818, %v819
      %v821 = vrot.slane %v790, 1
      %v822 = vrot.slane %v517, 1
      %v823 = vsel %vm799, %v821, %v822
      %v824 = vrot.slane %v791, 1
      %v825 = vrot.slane %v518, 1
      %v826 = vsel %vm799, %v824, %v825
      %v827 = vrot.slane %v792, 1
      %v828 = vrot.slane %v519, 1
      %v829 = vsel %vm799, %v827, %v828
      %v830 = vrot.slane %v793, 1
      %v831 = vrot.slane %v520, 1
      %v832 = vsel %vm799, %v830, %v831
      %v833 = vrot.slane %v794, 1
      %v834 = vrot.slane %v521, 1
      %v835 = vsel %vm799, %v833, %v834
      %v836 = vrot.slane %v795, 1
      %v837 = vrot.slane %v522, 1
      %v838 = vsel %vm799, %v836, %v837
      %v839 = vrot.slane %v796, 1
      %v840 = vrot.slane %v523, 1
      %v841 = vsel %vm799, %v839, %v840
      %v842 = vrot.slane %v797, 1
      %v843 = vrot.slane %v524, 1
      %v844 = vsel %vm799, %v842, %v843
      %v845 = vrot.slane %v798, 1
      %v846 = vrot.slane %v525, 1
      %v847 = vsel %vm799, %v845, %v846
      %848 = vrot.lane.b32.xlu0 %v802, 8
      %v849 = vpop.permute.xlu0 %848
      %850 = vrot.lane.b32.xlu0 %v805, 8
      %v851 = vpop.permute.xlu0 %850
      %852 = vrot.lane.b32.xlu0 %v808, 8
      %v853 = vpop.permute.xlu0 %852
      %854 = vrot.lane.b32.xlu0 %v811, 8
      %v855 = vpop.permute.xlu0 %854
      %856 = vrot.lane.b32.xlu0 %v814, 8
      %v857 = vpop.permute.xlu0 %856
      %858 = vrot.lane.b32.xlu0 %v817, 8
      %v859 = vpop.permute.xlu0 %858
      %860 = vrot.lane.b32.xlu0 %v820, 8
      %v861 = vpop.permute.xlu0 %860
      %862 = vrot.lane.b32.xlu0 %v823, 8
      %v863 = vpop.permute.xlu0 %862
      %864 = vrot.lane.b32.xlu0 %v826, 8
      %v865 = vpop.permute.xlu0 %864
      %866 = vrot.lane.b32.xlu0 %v829, 8
      %v867 = vpop.permute.xlu0 %866
      %868 = vrot.lane.b32.xlu0 %v832, 8
      %v869 = vpop.permute.xlu0 %868
      %870 = vrot.lane.b32.xlu0 %v835, 8
      %v871 = vpop.permute.xlu0 %870
      %872 = vrot.lane.b32.xlu0 %v838, 8
      %v873 = vpop.permute.xlu0 %872
      %874 = vrot.lane.b32.xlu0 %v841, 8
      %v875 = vpop.permute.xlu0 %874
      %876 = vrot.lane.b32.xlu0 %v844, 8
      %v877 = vpop.permute.xlu0 %876
      %878 = vrot.lane.b32.xlu0 %v847, 8
      %v879 = vpop.permute.xlu0 %878
      %v912 = vunpack.c.l.b16 %v269
      %v913 = vunpack.c.l.b16 %v270
      %v914 = vunpack.c.l.b16 %v271
      %v915 = vunpack.c.l.b16 %v272
      %v916 = vunpack.c.l.b16 %v273
      %v917 = vunpack.c.l.b16 %v274
      %v918 = vunpack.c.l.b16 %v275
      %v919 = vunpack.c.l.b16 %v276
      %v920 = vunpack.c.l.b16 %v277
      %v921 = vunpack.c.l.b16 %v278
      %v922 = vunpack.c.l.b16 %v279
      %v923 = vunpack.c.l.b16 %v280
      %v924 = vunpack.c.l.b16 %v281
      %v925 = vunpack.c.l.b16 %v282
      %v926 = vunpack.c.l.b16 %v283
      %v927 = vunpack.c.l.b16 %v284
      %v928 = vunpack.c.l.b16 %v285
      %v929 = vunpack.c.l.b16 %v286
      %v930 = vunpack.c.l.b16 %v287
      %v931 = vunpack.c.l.b16 %v288
      %v932 = vunpack.c.l.b16 %v289
      %v933 = vunpack.c.l.b16 %v290
      %v934 = vunpack.c.l.b16 %v291
      %v935 = vunpack.c.l.b16 %v292
      %v936 = vunpack.c.l.b16 %v293
      %v937 = vunpack.c.l.b16 %v294
      %v938 = vunpack.c.l.b16 %v295
      %v939 = vunpack.c.l.b16 %v296
      %v940 = vunpack.c.l.b16 %v297
      %v941 = vunpack.c.l.b16 %v298
      %v942 = vunpack.c.l.b16 %v299
      %v943 = vunpack.c.l.b16 %v300
      %v944 = vpack.c.b16 %v913, %v912
      %v945 = vpack.c.b16 %v915, %v914
      %v946 = vpack.c.b16 %v917, %v916
      %v947 = vpack.c.b16 %v919, %v918
      %v948 = vpack.c.b16 %v921, %v920
      %v949 = vpack.c.b16 %v923, %v922
      %v950 = vpack.c.b16 %v925, %v924
      %v951 = vpack.c.b16 %v927, %v926
      %v952 = vpack.c.b16 %v929, %v928
      %v953 = vpack.c.b16 %v931, %v930
      %v954 = vpack.c.b16 %v933, %v932
      %v955 = vpack.c.b16 %v935, %v934
      %v956 = vpack.c.b16 %v937, %v936
      %v957 = vpack.c.b16 %v939, %v938
      %v958 = vpack.c.b16 %v941, %v940
      %v959 = vpack.c.b16 %v943, %v942
      %960 = vrot.lane.b32.xlu0 %v944, 12
      %v961 = vpop.permute.xlu0 %960
      %962 = vrot.lane.b32.xlu0 %v945, 12
      %v963 = vpop.permute.xlu0 %962
      %964 = vrot.lane.b32.xlu0 %v946, 12
      %v965 = vpop.permute.xlu0 %964
      %966 = vrot.lane.b32.xlu0 %v947, 12
      %v967 = vpop.permute.xlu0 %966
      %968 = vrot.lane.b32.xlu0 %v948, 12
      %v969 = vpop.permute.xlu0 %968
      %970 = vrot.lane.b32.xlu0 %v949, 12
      %v971 = vpop.permute.xlu0 %970
      %972 = vrot.lane.b32.xlu0 %v950, 12
      %v973 = vpop.permute.xlu0 %972
      %974 = vrot.lane.b32.xlu0 %v951, 12
      %v975 = vpop.permute.xlu0 %974
      %976 = vrot.lane.b32.xlu0 %v952, 12
      %v977 = vpop.permute.xlu0 %976
      %978 = vrot.lane.b32.xlu0 %v953, 12
      %v979 = vpop.permute.xlu0 %978
      %980 = vrot.lane.b32.xlu0 %v954, 12
      %v981 = vpop.permute.xlu0 %980
      %982 = vrot.lane.b32.xlu0 %v955, 12
      %v983 = vpop.permute.xlu0 %982
      %984 = vrot.lane.b32.xlu0 %v956, 12
      %v985 = vpop.permute.xlu0 %984
      %986 = vrot.lane.b32.xlu0 %v957, 12
      %v987 = vpop.permute.xlu0 %986
      %988 = vrot.lane.b32.xlu0 %v958, 12
      %v989 = vpop.permute.xlu0 %988
      %990 = vrot.lane.b32.xlu0 %v959, 12
      %v991 = vpop.permute.xlu0 %990
      %v1008 = vunpack.c.l.b16 %v301
      %v1009 = vunpack.c.l.b16 %v302
      %v1010 = vunpack.c.l.b16 %v303
      %v1011 = vunpack.c.l.b16 %v304
      %v1012 = vunpack.c.l.b16 %v305
      %v1013 = vunpack.c.l.b16 %v306
      %v1014 = vunpack.c.l.b16 %v307
      %v1015 = vunpack.c.l.b16 %v308
      %v1016 = vunpack.c.l.b16 %v309
      %v1017 = vunpack.c.l.b16 %v310
      %v1018 = vunpack.c.l.b16 %v311
      %v1019 = vunpack.c.l.b16 %v312
      %v1020 = vunpack.c.l.b16 %v313
      %v1021 = vunpack.c.l.b16 %v314
      %v1022 = vunpack.c.l.b16 %v315
      %v1023 = vunpack.c.l.b16 %v316
      %v1024 = vpack.c.b16 %v1008, %v1008
      %v1025 = vpack.c.b16 %v1009, %v1009
      %v1026 = vpack.c.b16 %v1010, %v1010
      %v1027 = vpack.c.b16 %v1011, %v1011
      %v1028 = vpack.c.b16 %v1012, %v1012
      %v1029 = vpack.c.b16 %v1013, %v1013
      %v1030 = vpack.c.b16 %v1014, %v1014
      %v1031 = vpack.c.b16 %v1015, %v1015
      %v1032 = vpack.c.b16 %v1016, %v1016
      %v1033 = vpack.c.b16 %v1017, %v1017
      %v1034 = vpack.c.b16 %v1018, %v1018
      %v1035 = vpack.c.b16 %v1019, %v1019
      %v1036 = vpack.c.b16 %v1020, %v1020
      %v1037 = vpack.c.b16 %v1021, %v1021
      %v1038 = vpack.c.b16 %v1022, %v1022
      %v1039 = vpack.c.b16 %v1023, %v1023
      %v1041 = vshrl.u32 %v944, 16
      %v1043 = vshll.u32 %v944, 16
      %v1045 = vrot.slane %v1043, 1
      %v1046 = vor.u32 %v1041, %v1045
      %v1048 = vshll.u32 %v1024, 16
      %v1050 = vrot.slane %v1048, 1
      %v1051 = vsel %vm526, %v1046, %v1050
      %v1053 = vshrl.u32 %v945, 16
      %v1055 = vshll.u32 %v945, 16
      %v1057 = vrot.slane %v1055, 1
      %v1058 = vor.u32 %v1053, %v1057
      %v1060 = vshll.u32 %v1025, 16
      %v1062 = vrot.slane %v1060, 1
      %v1063 = vsel %vm526, %v1058, %v1062
      %v1065 = vshrl.u32 %v946, 16
      %v1067 = vshll.u32 %v946, 16
      %v1069 = vrot.slane %v1067, 1
      %v1070 = vor.u32 %v1065, %v1069
      %v1072 = vshll.u32 %v1026, 16
      %v1074 = vrot.slane %v1072, 1
      %v1075 = vsel %vm526, %v1070, %v1074
      %v1077 = vshrl.u32 %v947, 16
      %v1079 = vshll.u32 %v947, 16
      %v1081 = vrot.slane %v1079, 1
      %v1082 = vor.u32 %v1077, %v1081
      %v1084 = vshll.u32 %v1027, 16
      %v1086 = vrot.slane %v1084, 1
      %v1087 = vsel %vm526, %v1082, %v1086
      %v1089 = vshrl.u32 %v948, 16
      %v1091 = vshll.u32 %v948, 16
      %v1093 = vrot.slane %v1091, 1
      %v1094 = vor.u32 %v1089, %v1093
      %v1096 = vshll.u32 %v1028, 16
      %v1098 = vrot.slane %v1096, 1
      %v1099 = vsel %vm526, %v1094, %v1098
      %v1101 = vshrl.u32 %v949, 16
      %v1103 = vshll.u32 %v949, 16
      %v1105 = vrot.slane %v1103, 1
      %v1106 = vor.u32 %v1101, %v1105
      %v1108 = vshll.u32 %v1029, 16
      %v1110 = vrot.slane %v1108, 1
      %v1111 = vsel %vm526, %v1106, %v1110
      %v1113 = vshrl.u32 %v950, 16
      %v1115 = vshll.u32 %v950, 16
      %v1117 = vrot.slane %v1115, 1
      %v1118 = vor.u32 %v1113, %v1117
      %v1120 = vshll.u32 %v1030, 16
      %v1122 = vrot.slane %v1120, 1
      %v1123 = vsel %vm526, %v1118, %v1122
      %v1125 = vshrl.u32 %v951, 16
      %v1127 = vshll.u32 %v951, 16
      %v1129 = vrot.slane %v1127, 1
      %v1130 = vor.u32 %v1125, %v1129
      %v1132 = vshll.u32 %v1031, 16
      %v1134 = vrot.slane %v1132, 1
      %v1135 = vsel %vm526, %v1130, %v1134
      %v1137 = vshrl.u32 %v952, 16
      %v1139 = vshll.u32 %v952, 16
      %v1141 = vrot.slane %v1139, 1
      %v1142 = vor.u32 %v1137, %v1141
      %v1144 = vshll.u32 %v1032, 16
      %v1146 = vrot.slane %v1144, 1
      %v1147 = vsel %vm526, %v1142, %v1146
      %v1149 = vshrl.u32 %v953, 16
      %v1151 = vshll.u32 %v953, 16
      %v1153 = vrot.slane %v1151, 1
      %v1154 = vor.u32 %v1149, %v1153
      %v1156 = vshll.u32 %v1033, 16
      %v1158 = vrot.slane %v1156, 1
      %v1159 = vsel %vm526, %v1154, %v1158
      %v1161 = vshrl.u32 %v954, 16
      %v1163 = vshll.u32 %v954, 16
      %v1165 = vrot.slane %v1163, 1
      %v1166 = vor.u32 %v1161, %v1165
      %v1168 = vshll.u32 %v1034, 16
      %v1170 = vrot.slane %v1168, 1
      %v1171 = vsel %vm526, %v1166, %v1170
      %v1173 = vshrl.u32 %v955, 16
      %v1175 = vshll.u32 %v955, 16
      %v1177 = vrot.slane %v1175, 1
      %v1178 = vor.u32 %v1173, %v1177
      %v1180 = vshll.u32 %v1035, 16
      %v1182 = vrot.slane %v1180, 1
      %v1183 = vsel %vm526, %v1178, %v1182
      %v1185 = vshrl.u32 %v956, 16
      %v1187 = vshll.u32 %v956, 16
      %v1189 = vrot.slane %v1187, 1
      %v1190 = vor.u32 %v1185, %v1189
      %v1192 = vshll.u32 %v1036, 16
      %v1194 = vrot.slane %v1192, 1
      %v1195 = vsel %vm526, %v1190, %v1194
      %v1197 = vshrl.u32 %v957, 16
      %v1199 = vshll.u32 %v957, 16
      %v1201 = vrot.slane %v1199, 1
      %v1202 = vor.u32 %v1197, %v1201
      %v1204 = vshll.u32 %v1037, 16
      %v1206 = vrot.slane %v1204, 1
      %v1207 = vsel %vm526, %v1202, %v1206
      %v1209 = vshrl.u32 %v958, 16
      %v1211 = vshll.u32 %v958, 16
      %v1213 = vrot.slane %v1211, 1
      %v1214 = vor.u32 %v1209, %v1213
      %v1216 = vshll.u32 %v1038, 16
      %v1218 = vrot.slane %v1216, 1
      %v1219 = vsel %vm526, %v1214, %v1218
      %v1221 = vshrl.u32 %v959, 16
      %v1223 = vshll.u32 %v959, 16
      %v1225 = vrot.slane %v1223, 1
      %v1226 = vor.u32 %v1221, %v1225
      %v1228 = vshll.u32 %v1039, 16
      %v1230 = vrot.slane %v1228, 1
      %v1231 = vsel %vm526, %v1226, %v1230
      %1232 = vrot.lane.b32.xlu0 %v1051, 16
      %v1233 = vpop.permute.xlu0 %1232
      %1234 = vrot.lane.b32.xlu0 %v1063, 16
      %v1235 = vpop.permute.xlu0 %1234
      %1236 = vrot.lane.b32.xlu0 %v1075, 16
      %v1237 = vpop.permute.xlu0 %1236
      %1238 = vrot.lane.b32.xlu0 %v1087, 16
      %v1239 = vpop.permute.xlu0 %1238
      %1240 = vrot.lane.b32.xlu0 %v1099, 16
      %v1241 = vpop.permute.xlu0 %1240
      %1242 = vrot.lane.b32.xlu0 %v1111, 16
      %v1243 = vpop.permute.xlu0 %1242
      %1244 = vrot.lane.b32.xlu0 %v1123, 16
      %v1245 = vpop.permute.xlu0 %1244
      %1246 = vrot.lane.b32.xlu0 %v1135, 16
      %v1247 = vpop.permute.xlu0 %1246
      %1248 = vrot.lane.b32.xlu0 %v1147, 16
      %v1249 = vpop.permute.xlu0 %1248
      %1250 = vrot.lane.b32.xlu0 %v1159, 16
      %v1251 = vpop.permute.xlu0 %1250
      %1252 = vrot.lane.b32.xlu0 %v1171, 16
      %v1253 = vpop.permute.xlu0 %1252
      %1254 = vrot.lane.b32.xlu0 %v1183, 16
      %v1255 = vpop.permute.xlu0 %1254
      %1256 = vrot.lane.b32.xlu0 %v1195, 16
      %v1257 = vpop.permute.xlu0 %1256
      %1258 = vrot.lane.b32.xlu0 %v1207, 16
      %v1259 = vpop.permute.xlu0 %1258
      %1260 = vrot.lane.b32.xlu0 %v1219, 16
      %v1261 = vpop.permute.xlu0 %1260
      %1262 = vrot.lane.b32.xlu0 %v1231, 16
      %v1263 = vpop.permute.xlu0 %1262
      %v1280 = vunpack.c.l.b16 %v317
      %v1281 = vunpack.c.l.b16 %v318
      %v1282 = vunpack.c.l.b16 %v319
      %v1283 = vunpack.c.l.b16 %v320
      %v1284 = vunpack.c.l.b16 %v321
      %v1285 = vunpack.c.l.b16 %v322
      %v1286 = vunpack.c.l.b16 %v323
      %v1287 = vunpack.c.l.b16 %v324
      %v1288 = vunpack.c.l.b16 %v325
      %v1289 = vunpack.c.l.b16 %v326
      %v1290 = vunpack.c.l.b16 %v327
      %v1291 = vunpack.c.l.b16 %v328
      %v1292 = vunpack.c.l.b16 %v329
      %v1293 = vunpack.c.l.b16 %v330
      %v1294 = vunpack.c.l.b16 %v331
      %v1295 = vunpack.c.l.b16 %v332
      %v1296 = vpack.c.b16 %v913, %v1280
      %v1297 = vpack.c.b16 %v915, %v1281
      %v1298 = vpack.c.b16 %v917, %v1282
      %v1299 = vpack.c.b16 %v919, %v1283
      %v1300 = vpack.c.b16 %v921, %v1284
      %v1301 = vpack.c.b16 %v923, %v1285
      %v1302 = vpack.c.b16 %v925, %v1286
      %v1303 = vpack.c.b16 %v927, %v1287
      %v1304 = vpack.c.b16 %v929, %v1288
      %v1305 = vpack.c.b16 %v931, %v1289
      %v1306 = vpack.c.b16 %v933, %v1290
      %v1307 = vpack.c.b16 %v935, %v1291
      %v1308 = vpack.c.b16 %v937, %v1292
      %v1309 = vpack.c.b16 %v939, %v1293
      %v1310 = vpack.c.b16 %v941, %v1294
      %v1311 = vpack.c.b16 %v943, %v1295
      %v1312 = vrot.slane %v1296, 1
      %v1313 = vrot.slane %v1024, 1
      %v1314 = vsel %vm799, %v1312, %v1313
      %v1315 = vrot.slane %v1297, 1
      %v1316 = vrot.slane %v1025, 1
      %v1317 = vsel %vm799, %v1315, %v1316
      %v1318 = vrot.slane %v1298, 1
      %v1319 = vrot.slane %v1026, 1
      %v1320 = vsel %vm799, %v1318, %v1319
      %v1321 = vrot.slane %v1299, 1
      %v1322 = vrot.slane %v1027, 1
      %v1323 = vsel %vm799, %v1321, %v1322
      %v1324 = vrot.slane %v1300, 1
      %v1325 = vrot.slane %v1028, 1
      %v1326 = vsel %vm799, %v1324, %v1325
      %v1327 = vrot.slane %v1301, 1
      %v1328 = vrot.slane %v1029, 1
      %v1329 = vsel %vm799, %v1327, %v1328
      %v1330 = vrot.slane %v1302, 1
      %v1331 = vrot.slane %v1030, 1
      %v1332 = vsel %vm799, %v1330, %v1331
      %v1333 = vrot.slane %v1303, 1
      %v1334 = vrot.slane %v1031, 1
      %v1335 = vsel %vm799, %v1333, %v1334
      %v1336 = vrot.slane %v1304, 1
      %v1337 = vrot.slane %v1032, 1
      %v1338 = vsel %vm799, %v1336, %v1337
      %v1339 = vrot.slane %v1305, 1
      %v1340 = vrot.slane %v1033, 1
      %v1341 = vsel %vm799, %v1339, %v1340
      %v1342 = vrot.slane %v1306, 1
      %v1343 = vrot.slane %v1034, 1
      %v1344 = vsel %vm799, %v1342, %v1343
      %v1345 = vrot.slane %v1307, 1
      %v1346 = vrot.slane %v1035, 1
      %v1347 = vsel %vm799, %v1345, %v1346
      %v1348 = vrot.slane %v1308, 1
      %v1349 = vrot.slane %v1036, 1
      %v1350 = vsel %vm799, %v1348, %v1349
      %v1351 = vrot.slane %v1309, 1
      %v1352 = vrot.slane %v1037, 1
      %v1353 = vsel %vm799, %v1351, %v1352
      %v1354 = vrot.slane %v1310, 1
      %v1355 = vrot.slane %v1038, 1
      %v1356 = vsel %vm799, %v1354, %v1355
      %v1357 = vrot.slane %v1311, 1
      %v1358 = vrot.slane %v1039, 1
      %v1359 = vsel %vm799, %v1357, %v1358
      %1360 = vrot.lane.b32.xlu0 %v1314, 20
      %v1361 = vpop.permute.xlu0 %1360
      %1362 = vrot.lane.b32.xlu0 %v1317, 20
      %v1363 = vpop.permute.xlu0 %1362
      %1364 = vrot.lane.b32.xlu0 %v1320, 20
      %v1365 = vpop.permute.xlu0 %1364
      %1366 = vrot.lane.b32.xlu0 %v1323, 20
      %v1367 = vpop.permute.xlu0 %1366
      %1368 = vrot.lane.b32.xlu0 %v1326, 20
      %v1369 = vpop.permute.xlu0 %1368
      %1370 = vrot.lane.b32.xlu0 %v1329, 20
      %v1371 = vpop.permute.xlu0 %1370
      %1372 = vrot.lane.b32.xlu0 %v1332, 20
      %v1373 = vpop.permute.xlu0 %1372
      %1374 = vrot.lane.b32.xlu0 %v1335, 20
      %v1375 = vpop.permute.xlu0 %1374
      %1376 = vrot.lane.b32.xlu0 %v1338, 20
      %v1377 = vpop.permute.xlu0 %1376
      %1378 = vrot.lane.b32.xlu0 %v1341, 20
      %v1379 = vpop.permute.xlu0 %1378
      %1380 = vrot.lane.b32.xlu0 %v1344, 20
      %v1381 = vpop.permute.xlu0 %1380
      %1382 = vrot.lane.b32.xlu0 %v1347, 20
      %v1383 = vpop.permute.xlu0 %1382
      %1384 = vrot.lane.b32.xlu0 %v1350, 20
      %v1385 = vpop.permute.xlu0 %1384
      %1386 = vrot.lane.b32.xlu0 %v1353, 20
      %v1387 = vpop.permute.xlu0 %1386
      %1388 = vrot.lane.b32.xlu0 %v1356, 20
      %v1389 = vpop.permute.xlu0 %1388
      %1390 = vrot.lane.b32.xlu0 %v1359, 20
      %v1391 = vpop.permute.xlu0 %1390
      %v1424 = vunpack.c.l.b16 %v334
      %v1425 = vunpack.c.l.b16 %v335
      %v1426 = vunpack.c.l.b16 %v336
      %v1427 = vunpack.c.l.b16 %v337
      %v1428 = vunpack.c.l.b16 %v338
      %v1429 = vunpack.c.l.b16 %v339
      %v1430 = vunpack.c.l.b16 %v340
      %v1431 = vunpack.c.l.b16 %v341
      %v1432 = vunpack.c.l.b16 %v342
      %v1433 = vunpack.c.l.b16 %v343
      %v1434 = vunpack.c.l.b16 %v344
      %v1435 = vunpack.c.l.b16 %v345
      %v1436 = vunpack.c.l.b16 %v346
      %v1437 = vunpack.c.l.b16 %v347
      %v1438 = vunpack.c.l.b16 %v348
      %v1439 = vunpack.c.l.b16 %v349
      %v1440 = vunpack.c.l.b16 %v350
      %v1441 = vunpack.c.l.b16 %v351
      %v1442 = vunpack.c.l.b16 %v352
      %v1443 = vunpack.c.l.b16 %v353
      %v1444 = vunpack.c.l.b16 %v354
      %v1445 = vunpack.c.l.b16 %v355
      %v1446 = vunpack.c.l.b16 %v356
      %v1447 = vunpack.c.l.b16 %v357
      %v1448 = vunpack.c.l.b16 %v358
      %v1449 = vunpack.c.l.b16 %v359
      %v1450 = vunpack.c.l.b16 %v360
      %v1451 = vunpack.c.l.b16 %v361
      %v1452 = vunpack.c.l.b16 %v362
      %v1453 = vunpack.c.l.b16 %v363
      %v1454 = vunpack.c.l.b16 %v364
      %v1455 = vunpack.c.l.b16 %v365
      %v1456 = vpack.c.b16 %v1425, %v1424
      %v1457 = vpack.c.b16 %v1427, %v1426
      %v1458 = vpack.c.b16 %v1429, %v1428
      %v1459 = vpack.c.b16 %v1431, %v1430
      %v1460 = vpack.c.b16 %v1433, %v1432
      %v1461 = vpack.c.b16 %v1435, %v1434
      %v1462 = vpack.c.b16 %v1437, %v1436
      %v1463 = vpack.c.b16 %v1439, %v1438
      %v1464 = vpack.c.b16 %v1441, %v1440
      %v1465 = vpack.c.b16 %v1443, %v1442
      %v1466 = vpack.c.b16 %v1445, %v1444
      %v1467 = vpack.c.b16 %v1447, %v1446
      %v1468 = vpack.c.b16 %v1449, %v1448
      %v1469 = vpack.c.b16 %v1451, %v1450
      %v1470 = vpack.c.b16 %v1453, %v1452
      %v1471 = vpack.c.b16 %v1455, %v1454
      %1472 = vrot.lane.b32.xlu0 %v1456, 24
      %v1473 = vpop.permute.xlu0 %1472
      %1474 = vrot.lane.b32.xlu0 %v1457, 24
      %v1475 = vpop.permute.xlu0 %1474
      %1476 = vrot.lane.b32.xlu0 %v1458, 24
      %v1477 = vpop.permute.xlu0 %1476
      %1478 = vrot.lane.b32.xlu0 %v1459, 24
      %v1479 = vpop.permute.xlu0 %1478
      %1480 = vrot.lane.b32.xlu0 %v1460, 24
      %v1481 = vpop.permute.xlu0 %1480
      %1482 = vrot.lane.b32.xlu0 %v1461, 24
      %v1483 = vpop.permute.xlu0 %1482
      %1484 = vrot.lane.b32.xlu0 %v1462, 24
      %v1485 = vpop.permute.xlu0 %1484
      %1486 = vrot.lane.b32.xlu0 %v1463, 24
      %v1487 = vpop.permute.xlu0 %1486
      %1488 = vrot.lane.b32.xlu0 %v1464, 24
      %v1489 = vpop.permute.xlu0 %1488
      %1490 = vrot.lane.b32.xlu0 %v1465, 24
      %v1491 = vpop.permute.xlu0 %1490
      %1492 = vrot.lane.b32.xlu0 %v1466, 24
      %v1493 = vpop.permute.xlu0 %1492
      %1494 = vrot.lane.b32.xlu0 %v1467, 24
      %v1495 = vpop.permute.xlu0 %1494
      %1496 = vrot.lane.b32.xlu0 %v1468, 24
      %v1497 = vpop.permute.xlu0 %1496
      %1498 = vrot.lane.b32.xlu0 %v1469, 24
      %v1499 = vpop.permute.xlu0 %1498
      %1500 = vrot.lane.b32.xlu0 %v1470, 24
      %v1501 = vpop.permute.xlu0 %1500
      %1502 = vrot.lane.b32.xlu0 %v1471, 24
      %v1503 = vpop.permute.xlu0 %1502
      %v1520 = vunpack.c.l.b16 %v366
      %v1521 = vunpack.c.l.b16 %v367
      %v1522 = vunpack.c.l.b16 %v368
      %v1523 = vunpack.c.l.b16 %v369
      %v1524 = vunpack.c.l.b16 %v370
      %v1525 = vunpack.c.l.b16 %v371
      %v1526 = vunpack.c.l.b16 %v372
      %v1527 = vunpack.c.l.b16 %v373
      %v1528 = vunpack.c.l.b16 %v374
      %v1529 = vunpack.c.l.b16 %v375
      %v1530 = vunpack.c.l.b16 %v376
      %v1531 = vunpack.c.l.b16 %v377
      %v1532 = vunpack.c.l.b16 %v378
      %v1533 = vunpack.c.l.b16 %v379
      %v1534 = vunpack.c.l.b16 %v380
      %v1535 = vunpack.c.l.b16 %v381
      %v1536 = vpack.c.b16 %v1520, %v1520
      %v1537 = vpack.c.b16 %v1521, %v1521
      %v1538 = vpack.c.b16 %v1522, %v1522
      %v1539 = vpack.c.b16 %v1523, %v1523
      %v1540 = vpack.c.b16 %v1524, %v1524
      %v1541 = vpack.c.b16 %v1525, %v1525
      %v1542 = vpack.c.b16 %v1526, %v1526
      %v1543 = vpack.c.b16 %v1527, %v1527
      %v1544 = vpack.c.b16 %v1528, %v1528
      %v1545 = vpack.c.b16 %v1529, %v1529
      %v1546 = vpack.c.b16 %v1530, %v1530
      %v1547 = vpack.c.b16 %v1531, %v1531
      %v1548 = vpack.c.b16 %v1532, %v1532
      %v1549 = vpack.c.b16 %v1533, %v1533
      %v1550 = vpack.c.b16 %v1534, %v1534
      %v1551 = vpack.c.b16 %v1535, %v1535
      %v1553 = vshrl.u32 %v1456, 16
      %v1555 = vshll.u32 %v1456, 16
      %v1557 = vrot.slane %v1555, 1
      %v1558 = vor.u32 %v1553, %v1557
      %v1560 = vshll.u32 %v1536, 16
      %v1562 = vrot.slane %v1560, 1
      %v1563 = vsel %vm526, %v1558, %v1562
      %v1565 = vshrl.u32 %v1457, 16
      %v1567 = vshll.u32 %v1457, 16
      %v1569 = vrot.slane %v1567, 1
      %v1570 = vor.u32 %v1565, %v1569
      %v1572 = vshll.u32 %v1537, 16
      %v1574 = vrot.slane %v1572, 1
      %v1575 = vsel %vm526, %v1570, %v1574
      %v1577 = vshrl.u32 %v1458, 16
      %v1579 = vshll.u32 %v1458, 16
      %v1581 = vrot.slane %v1579, 1
      %v1582 = vor.u32 %v1577, %v1581
      %v1584 = vshll.u32 %v1538, 16
      %v1586 = vrot.slane %v1584, 1
      %v1587 = vsel %vm526, %v1582, %v1586
      %v1589 = vshrl.u32 %v1459, 16
      %v1591 = vshll.u32 %v1459, 16
      %v1593 = vrot.slane %v1591, 1
      %v1594 = vor.u32 %v1589, %v1593
      %v1596 = vshll.u32 %v1539, 16
      %v1598 = vrot.slane %v1596, 1
      %v1599 = vsel %vm526, %v1594, %v1598
      %v1601 = vshrl.u32 %v1460, 16
      %v1603 = vshll.u32 %v1460, 16
      %v1605 = vrot.slane %v1603, 1
      %v1606 = vor.u32 %v1601, %v1605
      %v1608 = vshll.u32 %v1540, 16
      %v1610 = vrot.slane %v1608, 1
      %v1611 = vsel %vm526, %v1606, %v1610
      %v1613 = vshrl.u32 %v1461, 16
      %v1615 = vshll.u32 %v1461, 16
      %v1617 = vrot.slane %v1615, 1
      %v1618 = vor.u32 %v1613, %v1617
      %v1620 = vshll.u32 %v1541, 16
      %v1622 = vrot.slane %v1620, 1
      %v1623 = vsel %vm526, %v1618, %v1622
      %v1625 = vshrl.u32 %v1462, 16
      %v1627 = vshll.u32 %v1462, 16
      %v1629 = vrot.slane %v1627, 1
      %v1630 = vor.u32 %v1625, %v1629
      %v1632 = vshll.u32 %v1542, 16
      %v1634 = vrot.slane %v1632, 1
      %v1635 = vsel %vm526, %v1630, %v1634
      %v1637 = vshrl.u32 %v1463, 16
      %v1639 = vshll.u32 %v1463, 16
      %v1641 = vrot.slane %v1639, 1
      %v1642 = vor.u32 %v1637, %v1641
      %v1644 = vshll.u32 %v1543, 16
      %v1646 = vrot.slane %v1644, 1
      %v1647 = vsel %vm526, %v1642, %v1646
      %v1649 = vshrl.u32 %v1464, 16
      %v1651 = vshll.u32 %v1464, 16
      %v1653 = vrot.slane %v1651, 1
      %v1654 = vor.u32 %v1649, %v1653
      %v1656 = vshll.u32 %v1544, 16
      %v1658 = vrot.slane %v1656, 1
      %v1659 = vsel %vm526, %v1654, %v1658
      %v1661 = vshrl.u32 %v1465, 16
      %v1663 = vshll.u32 %v1465, 16
      %v1665 = vrot.slane %v1663, 1
      %v1666 = vor.u32 %v1661, %v1665
      %v1668 = vshll.u32 %v1545, 16
      %v1670 = vrot.slane %v1668, 1
      %v1671 = vsel %vm526, %v1666, %v1670
      %v1673 = vshrl.u32 %v1466, 16
      %v1675 = vshll.u32 %v1466, 16
      %v1677 = vrot.slane %v1675, 1
      %v1678 = vor.u32 %v1673, %v1677
      %v1680 = vshll.u32 %v1546, 16
      %v1682 = vrot.slane %v1680, 1
      %v1683 = vsel %vm526, %v1678, %v1682
      %v1685 = vshrl.u32 %v1467, 16
      %v1687 = vshll.u32 %v1467, 16
      %v1689 = vrot.slane %v1687, 1
      %v1690 = vor.u32 %v1685, %v1689
      %v1692 = vshll.u32 %v1547, 16
      %v1694 = vrot.slane %v1692, 1
      %v1695 = vsel %vm526, %v1690, %v1694
      %v1697 = vshrl.u32 %v1468, 16
      %v1699 = vshll.u32 %v1468, 16
      %v1701 = vrot.slane %v1699, 1
      %v1702 = vor.u32 %v1697, %v1701
      %v1704 = vshll.u32 %v1548, 16
      %v1706 = vrot.slane %v1704, 1
      %v1707 = vsel %vm526, %v1702, %v1706
      %v1709 = vshrl.u32 %v1469, 16
      %v1711 = vshll.u32 %v1469, 16
      %v1713 = vrot.slane %v1711, 1
      %v1714 = vor.u32 %v1709, %v1713
      %v1716 = vshll.u32 %v1549, 16
      %v1718 = vrot.slane %v1716, 1
      %v1719 = vsel %vm526, %v1714, %v1718
      %v1721 = vshrl.u32 %v1470, 16
      %v1723 = vshll.u32 %v1470, 16
      %v1725 = vrot.slane %v1723, 1
      %v1726 = vor.u32 %v1721, %v1725
      %v1728 = vshll.u32 %v1550, 16
      %v1730 = vrot.slane %v1728, 1
      %v1731 = vsel %vm526, %v1726, %v1730
      %v1733 = vshrl.u32 %v1471, 16
      %v1735 = vshll.u32 %v1471, 16
      %v1737 = vrot.slane %v1735, 1
      %v1738 = vor.u32 %v1733, %v1737
      %v1740 = vshll.u32 %v1551, 16
      %v1742 = vrot.slane %v1740, 1
      %v1743 = vsel %vm526, %v1738, %v1742
      %1744 = vrot.lane.b32.xlu0 %v1563, 28
      %v1745 = vpop.permute.xlu0 %1744
      %1746 = vrot.lane.b32.xlu0 %v1575, 28
      %v1747 = vpop.permute.xlu0 %1746
      %1748 = vrot.lane.b32.xlu0 %v1587, 28
      %v1749 = vpop.permute.xlu0 %1748
      %1750 = vrot.lane.b32.xlu0 %v1599, 28
      %v1751 = vpop.permute.xlu0 %1750
      %1752 = vrot.lane.b32.xlu0 %v1611, 28
      %v1753 = vpop.permute.xlu0 %1752
      %1754 = vrot.lane.b32.xlu0 %v1623, 28
      %v1755 = vpop.permute.xlu0 %1754
      %1756 = vrot.lane.b32.xlu0 %v1635, 28
      %v1757 = vpop.permute.xlu0 %1756
      %1758 = vrot.lane.b32.xlu0 %v1647, 28
      %v1759 = vpop.permute.xlu0 %1758
      %1760 = vrot.lane.b32.xlu0 %v1659, 28
      %v1761 = vpop.permute.xlu0 %1760
      %1762 = vrot.lane.b32.xlu0 %v1671, 28
      %v1763 = vpop.permute.xlu0 %1762
      %1764 = vrot.lane.b32.xlu0 %v1683, 28
      %v1765 = vpop.permute.xlu0 %1764
      %1766 = vrot.lane.b32.xlu0 %v1695, 28
      %v1767 = vpop.permute.xlu0 %1766
      %1768 = vrot.lane.b32.xlu0 %v1707, 28
      %v1769 = vpop.permute.xlu0 %1768
      %1770 = vrot.lane.b32.xlu0 %v1719, 28
      %v1771 = vpop.permute.xlu0 %1770
      %1772 = vrot.lane.b32.xlu0 %v1731, 28
      %v1773 = vpop.permute.xlu0 %1772
      %1774 = vrot.lane.b32.xlu0 %v1743, 28
      %v1775 = vpop.permute.xlu0 %1774
      %v1792 = vunpack.c.l.b16 %v382
      %v1793 = vunpack.c.l.b16 %v383
      %v1794 = vunpack.c.l.b16 %v384
      %v1795 = vunpack.c.l.b16 %v385
      %v1796 = vunpack.c.l.b16 %v386
      %v1797 = vunpack.c.l.b16 %v387
      %v1798 = vunpack.c.l.b16 %v388
      %v1799 = vunpack.c.l.b16 %v389
      %v1800 = vunpack.c.l.b16 %v390
      %v1801 = vunpack.c.l.b16 %v391
      %v1802 = vunpack.c.l.b16 %v392
      %v1803 = vunpack.c.l.b16 %v393
      %v1804 = vunpack.c.l.b16 %v394
      %v1805 = vunpack.c.l.b16 %v395
      %v1806 = vunpack.c.l.b16 %v396
      %v1807 = vunpack.c.l.b16 %v397
      %v1808 = vpack.c.b16 %v1425, %v1792
      %v1809 = vpack.c.b16 %v1427, %v1793
      %v1810 = vpack.c.b16 %v1429, %v1794
      %v1811 = vpack.c.b16 %v1431, %v1795
      %v1812 = vpack.c.b16 %v1433, %v1796
      %v1813 = vpack.c.b16 %v1435, %v1797
      %v1814 = vpack.c.b16 %v1437, %v1798
      %v1815 = vpack.c.b16 %v1439, %v1799
      %v1816 = vpack.c.b16 %v1441, %v1800
      %v1817 = vpack.c.b16 %v1443, %v1801
      %v1818 = vpack.c.b16 %v1445, %v1802
      %v1819 = vpack.c.b16 %v1447, %v1803
      %v1820 = vpack.c.b16 %v1449, %v1804
      %v1821 = vpack.c.b16 %v1451, %v1805
      %v1822 = vpack.c.b16 %v1453, %v1806
      %v1823 = vpack.c.b16 %v1455, %v1807
      %v1824 = vrot.slane %v1808, 1
      %v1825 = vrot.slane %v1536, 1
      %v1826 = vsel %vm799, %v1824, %v1825
      %v1827 = vrot.slane %v1809, 1
      %v1828 = vrot.slane %v1537, 1
      %v1829 = vsel %vm799, %v1827, %v1828
      %v1830 = vrot.slane %v1810, 1
      %v1831 = vrot.slane %v1538, 1
      %v1832 = vsel %vm799, %v1830, %v1831
      %v1833 = vrot.slane %v1811, 1
      %v1834 = vrot.slane %v1539, 1
      %v1835 = vsel %vm799, %v1833, %v1834
      %v1836 = vrot.slane %v1812, 1
      %v1837 = vrot.slane %v1540, 1
      %v1838 = vsel %vm799, %v1836, %v1837
      %v1839 = vrot.slane %v1813, 1
      %v1840 = vrot.slane %v1541, 1
      %v1841 = vsel %vm799, %v1839, %v1840
      %v1842 = vrot.slane %v1814, 1
      %v1843 = vrot.slane %v1542, 1
      %v1844 = vsel %vm799, %v1842, %v1843
      %v1845 = vrot.slane %v1815, 1
      %v1846 = vrot.slane %v1543, 1
      %v1847 = vsel %vm799, %v1845, %v1846
      %v1848 = vrot.slane %v1816, 1
      %v1849 = vrot.slane %v1544, 1
      %v1850 = vsel %vm799, %v1848, %v1849
      %v1851 = vrot.slane %v1817, 1
      %v1852 = vrot.slane %v1545, 1
      %v1853 = vsel %vm799, %v1851, %v1852
      %v1854 = vrot.slane %v1818, 1
      %v1855 = vrot.slane %v1546, 1
      %v1856 = vsel %vm799, %v1854, %v1855
      %v1857 = vrot.slane %v1819, 1
      %v1858 = vrot.slane %v1547, 1
      %v1859 = vsel %vm799, %v1857, %v1858
      %v1860 = vrot.slane %v1820, 1
      %v1861 = vrot.slane %v1548, 1
      %v1862 = vsel %vm799, %v1860, %v1861
      %v1863 = vrot.slane %v1821, 1
      %v1864 = vrot.slane %v1549, 1
      %v1865 = vsel %vm799, %v1863, %v1864
      %v1866 = vrot.slane %v1822, 1
      %v1867 = vrot.slane %v1550, 1
      %v1868 = vsel %vm799, %v1866, %v1867
      %v1869 = vrot.slane %v1823, 1
      %v1870 = vrot.slane %v1551, 1
      %v1871 = vsel %vm799, %v1869, %v1870
      %1872 = vrot.lane.b32.xlu0 %v1826, 32
      %v1873 = vpop.permute.xlu0 %1872
      %1874 = vrot.lane.b32.xlu0 %v1829, 32
      %v1875 = vpop.permute.xlu0 %1874
      %1876 = vrot.lane.b32.xlu0 %v1832, 32
      %v1877 = vpop.permute.xlu0 %1876
      %1878 = vrot.lane.b32.xlu0 %v1835, 32
      %v1879 = vpop.permute.xlu0 %1878
      %1880 = vrot.lane.b32.xlu0 %v1838, 32
      %v1881 = vpop.permute.xlu0 %1880
      %1882 = vrot.lane.b32.xlu0 %v1841, 32
      %v1883 = vpop.permute.xlu0 %1882
      %1884 = vrot.lane.b32.xlu0 %v1844, 32
      %v1885 = vpop.permute.xlu0 %1884
      %1886 = vrot.lane.b32.xlu0 %v1847, 32
      %v1887 = vpop.permute.xlu0 %1886
      %1888 = vrot.lane.b32.xlu0 %v1850, 32
      %v1889 = vpop.permute.xlu0 %1888
      %1890 = vrot.lane.b32.xlu0 %v1853, 32
      %v1891 = vpop.permute.xlu0 %1890
      %1892 = vrot.lane.b32.xlu0 %v1856, 32
      %v1893 = vpop.permute.xlu0 %1892
      %1894 = vrot.lane.b32.xlu0 %v1859, 32
      %v1895 = vpop.permute.xlu0 %1894
      %1896 = vrot.lane.b32.xlu0 %v1862, 32
      %v1897 = vpop.permute.xlu0 %1896
      %1898 = vrot.lane.b32.xlu0 %v1865, 32
      %v1899 = vpop.permute.xlu0 %1898
      %1900 = vrot.lane.b32.xlu0 %v1868, 32
      %v1901 = vpop.permute.xlu0 %1900
      %1902 = vrot.lane.b32.xlu0 %v1871, 32
      %v1903 = vpop.permute.xlu0 %1902
      %vm1904 = vcmask 31744
      %v1906 = vsel %vm1904, %v462, %v720
      %v1908 = vsel %vm1904, %v463, %v722
      %v1910 = vsel %vm1904, %v464, %v724
      %v1912 = vsel %vm1904, %v465, %v726
      %v1914 = vsel %vm1904, %v466, %v728
      %v1916 = vsel %vm1904, %v467, %v730
      %v1918 = vsel %vm1904, %v468, %v732
      %v1920 = vsel %vm1904, %v469, %v734
      %v1922 = vsel %vm1904, %v470, %v736
      %v1924 = vsel %vm1904, %v471, %v738
      %v1926 = vsel %vm1904, %v472, %v740
      %v1928 = vsel %vm1904, %v473, %v742
      %v1930 = vsel %vm1904, %v474, %v744
      %v1932 = vsel %vm1904, %v475, %v746
      %v1934 = vsel %vm1904, %v476, %v748
      %v1936 = vsel %vm1904, %v477, %v750
      %vm1937 = vcmask 64512
      %v1939 = vsel %vm1937, %v1906, %v849
      %v1941 = vsel %vm1937, %v1908, %v851
      %v1943 = vsel %vm1937, %v1910, %v853
      %v1945 = vsel %vm1937, %v1912, %v855
      %v1947 = vsel %vm1937, %v1914, %v857
      %v1949 = vsel %vm1937, %v1916, %v859
      %v1951 = vsel %vm1937, %v1918, %v861
      %v1953 = vsel %vm1937, %v1920, %v863
      %v1955 = vsel %vm1937, %v1922, %v865
      %v1957 = vsel %vm1937, %v1924, %v867
      %v1959 = vsel %vm1937, %v1926, %v869
      %v1961 = vsel %vm1937, %v1928, %v871
      %v1963 = vsel %vm1937, %v1930, %v873
      %v1965 = vsel %vm1937, %v1932, %v875
      %v1967 = vsel %vm1937, %v1934, %v877
      %v1969 = vsel %vm1937, %v1936, %v879
      %vm1970 = vcmask 97280
      %v1972 = vsel %vm1970, %v1939, %v961
      %v1974 = vsel %vm1970, %v1941, %v963
      %v1976 = vsel %vm1970, %v1943, %v965
      %v1978 = vsel %vm1970, %v1945, %v967
      %v1980 = vsel %vm1970, %v1947, %v969
      %v1982 = vsel %vm1970, %v1949, %v971
      %v1984 = vsel %vm1970, %v1951, %v973
      %v1986 = vsel %vm1970, %v1953, %v975
      %v1988 = vsel %vm1970, %v1955, %v977
      %v1990 = vsel %vm1970, %v1957, %v979
      %v1992 = vsel %vm1970, %v1959, %v981
      %v1994 = vsel %vm1970, %v1961, %v983
      %v1996 = vsel %vm1970, %v1963, %v985
      %v1998 = vsel %vm1970, %v1965, %v987
      %v2000 = vsel %vm1970, %v1967, %v989
      %v2002 = vsel %vm1970, %v1969, %v991
      %vm2003 = vcmask 130048
      %v2005 = vsel %vm2003, %v1972, %v1233
      %v2007 = vsel %vm2003, %v1974, %v1235
      %v2009 = vsel %vm2003, %v1976, %v1237
      %v2011 = vsel %vm2003, %v1978, %v1239
      %v2013 = vsel %vm2003, %v1980, %v1241
      %v2015 = vsel %vm2003, %v1982, %v1243
      %v2017 = vsel %vm2003, %v1984, %v1245
      %v2019 = vsel %vm2003, %v1986, %v1247
      %v2021 = vsel %vm2003, %v1988, %v1249
      %v2023 = vsel %vm2003, %v1990, %v1251
      %v2025 = vsel %vm2003, %v1992, %v1253
      %v2027 = vsel %vm2003, %v1994, %v1255
      %v2029 = vsel %vm2003, %v1996, %v1257
      %v2031 = vsel %vm2003, %v1998, %v1259
      %v2033 = vsel %vm2003, %v2000, %v1261
      %v2035 = vsel %vm2003, %v2002, %v1263
      %vm2036 = vcmask 162816
      %v2038 = vsel %vm2036, %v2005, %v1361
      %v2040 = vsel %vm2036, %v2007, %v1363
      %v2042 = vsel %vm2036, %v2009, %v1365
      %v2044 = vsel %vm2036, %v2011, %v1367
      %v2046 = vsel %vm2036, %v2013, %v1369
      %v2048 = vsel %vm2036, %v2015, %v1371
      %v2050 = vsel %vm2036, %v2017, %v1373
      %v2052 = vsel %vm2036, %v2019, %v1375
      %v2054 = vsel %vm2036, %v2021, %v1377
      %v2056 = vsel %vm2036, %v2023, %v1379
      %v2058 = vsel %vm2036, %v2025, %v1381
      %v2060 = vsel %vm2036, %v2027, %v1383
      %v2062 = vsel %vm2036, %v2029, %v1385
      %v2064 = vsel %vm2036, %v2031, %v1387
      %v2066 = vsel %vm2036, %v2033, %v1389
      %v2068 = vsel %vm2036, %v2035, %v1391
      %vm2069 = vcmask 195584
      %v2071 = vsel %vm2069, %v2038, %v1473
      %v2073 = vsel %vm2069, %v2040, %v1475
      %v2075 = vsel %vm2069, %v2042, %v1477
      %v2077 = vsel %vm2069, %v2044, %v1479
      %v2079 = vsel %vm2069, %v2046, %v1481
      %v2081 = vsel %vm2069, %v2048, %v1483
      %v2083 = vsel %vm2069, %v2050, %v1485
      %v2085 = vsel %vm2069, %v2052, %v1487
      %v2087 = vsel %vm2069, %v2054, %v1489
      %v2089 = vsel %vm2069, %v2056, %v1491
      %v2091 = vsel %vm2069, %v2058, %v1493
      %v2093 = vsel %vm2069, %v2060, %v1495
      %v2095 = vsel %vm2069, %v2062, %v1497
      %v2097 = vsel %vm2069, %v2064, %v1499
      %v2099 = vsel %vm2069, %v2066, %v1501
      %v2101 = vsel %vm2069, %v2068, %v1503
      %vm2102 = vcmask 228352
      %v2104 = vsel %vm2102, %v2071, %v1745
      %v2106 = vsel %vm2102, %v2073, %v1747
      %v2108 = vsel %vm2102, %v2075, %v1749
      %v2110 = vsel %vm2102, %v2077, %v1751
      %v2112 = vsel %vm2102, %v2079, %v1753
      %v2114 = vsel %vm2102, %v2081, %v1755
      %v2116 = vsel %vm2102, %v2083, %v1757
      %v2118 = vsel %vm2102, %v2085, %v1759
      %v2120 = vsel %vm2102, %v2087, %v1761
      %v2122 = vsel %vm2102, %v2089, %v1763
      %v2124 = vsel %vm2102, %v2091, %v1765
      %v2126 = vsel %vm2102, %v2093, %v1767
      %v2128 = vsel %vm2102, %v2095, %v1769
      %v2130 = vsel %vm2102, %v2097, %v1771
      %v2132 = vsel %vm2102, %v2099, %v1773
      %v2134 = vsel %vm2102, %v2101, %v1775
      %vm2135 = vcmask 261120
      %v2137 = vsel %vm2135, %v2104, %v1873
      %v2139 = vsel %vm2135, %v2106, %v1875
      %v2141 = vsel %vm2135, %v2108, %v1877
      %v2143 = vsel %vm2135, %v2110, %v1879
      %v2145 = vsel %vm2135, %v2112, %v1881
      %v2147 = vsel %vm2135, %v2114, %v1883
      %v2149 = vsel %vm2135, %v2116, %v1885
      %v2151 = vsel %vm2135, %v2118, %v1887
      %v2153 = vsel %vm2135, %v2120, %v1889
      %v2155 = vsel %vm2135, %v2122, %v1891
      %v2157 = vsel %vm2135, %v2124, %v1893
      %v2159 = vsel %vm2135, %v2126, %v1895
      %v2161 = vsel %vm2135, %v2128, %v1897
      %v2163 = vsel %vm2135, %v2130, %v1899
      %v2165 = vsel %vm2135, %v2132, %v1901
      %v2167 = vsel %vm2135, %v2134, %v1903
      %v2168 = vld [vmem:[%s1] sm:$0xf]
      %v2169 = vld [vmem:[%s1 + $0x4] sm:$0xf]
      %v2170 = vld [vmem:[%s1 + $0x8] sm:$0xf]
      %v2171 = vld [vmem:[%s1 + $0xc] sm:$0xf]
      %v2172 = vld [vmem:[%s1 + $0x10] sm:$0x3]
      %v2173 = vld [vmem:[%s2] sm:$0x1]
      %v2175 = vperm.slane %v2173, 0
      %v2182 = vunpack.c.l.b16 %v2168
      %v2183 = vunpack.c.l.b16 %v2169
      %v2184 = vunpack.c.l.b16 %v2170
      %v2185 = vunpack.c.l.b16 %v2171
      %v2186 = vunpack.c.l.b16 %v2172
      %v2187 = vpack.c.b16 %v2183, %v2182
      %v2188 = vpack.c.b16 %v2185, %v2184
      %v2189 = vpack.c.b16 %v2186, %v2186
      %vm2192 = vcmask 293888
      %v2193 = vsel %vm2192, %v2137, 0
      %v2195 = vsel %vm2192, %v2139, 0
      %v2197 = vsel %vm2192, %v2141, 0
      %v2199 = vsel %vm2192, %v2143, 0
      %v2201 = vsel %vm2192, %v2145, 0
      %v2203 = vsel %vm2192, %v2147, 0
      %v2205 = vsel %vm2192, %v2149, 0
      %v2207 = vsel %vm2192, %v2151, 0
      %v2209 = vsel %vm2192, %v2153, 0
      %v2211 = vsel %vm2192, %v2155, 0
      %v2213 = vsel %vm2192, %v2157, 0
      %v2215 = vsel %vm2192, %v2159, 0
      %v2217 = vsel %vm2192, %v2161, 0
      %v2219 = vsel %vm2192, %v2163, 0
      %v2221 = vsel %vm2192, %v2165, 0
      %v2223 = vsel %vm2192, %v2167, 0
      %vm2225 = vcmask 1041408
      %v2227 = vsel %vm2225, %v2189, 0
      %2229 = vmatpush.bf16.msra.mxu0 0
      %2230 = vmatpush.bf16.msra.mxu0 0
      %2231 = vmatpush.bf16.msra.mxu0 0
      %2232 = vmatpush.bf16.msra.mxu0 0
      %2233 = vmatpush.bf16.msra.mxu0 0
      %2234 = vmatpush.bf16.msra.mxu0 %v2227
      %2235 = vmatpush.bf16.msra.mxu0 %v2188
      %2236 = vmatpush.bf16.msra.mxu0 %v2187
      %2237 = vmatmul.bf16.gmra.mxu0 %v2193
      %v2238 = vpop.f32.mrf.mxu0
      %v2239 = vadd.f32 %v2175, %v2238
      %v2240 = vpop.f32.mrf.mxu0
      %v2241 = vadd.f32 %v2175, %v2240
      %2242 = vmatmul.bf16.gmra.mxu0 %v2195
      %v2243 = vpop.f32.mrf.mxu0
      %v2244 = vadd.f32 %v2175, %v2243
      %v2245 = vpop.f32.mrf.mxu0
      %v2246 = vadd.f32 %v2175, %v2245
      %2247 = vmatmul.bf16.gmra.mxu0 %v2197
      %v2248 = vpop.f32.mrf.mxu0
      %v2249 = vadd.f32 %v2175, %v2248
      %v2250 = vpop.f32.mrf.mxu0
      %v2251 = vadd.f32 %v2175, %v2250
      %2252 = vmatmul.bf16.gmra.mxu0 %v2199
      %v2253 = vpop.f32.mrf.mxu0
      %v2254 = vadd.f32 %v2175, %v2253
      %v2255 = vpop.f32.mrf.mxu0
      %v2256 = vadd.f32 %v2175, %v2255
      %2257 = vmatmul.bf16.gmra.mxu0 %v2201
      %v2258 = vpop.f32.mrf.mxu0
      %v2259 = vadd.f32 %v2175, %v2258
      %v2260 = vpop.f32.mrf.mxu0
      %v2261 = vadd.f32 %v2175, %v2260
      %2262 = vmatmul.bf16.gmra.mxu0 %v2203
      %v2263 = vpop.f32.mrf.mxu0
      %v2264 = vadd.f32 %v2175, %v2263
      %v2265 = vpop.f32.mrf.mxu0
      %v2266 = vadd.f32 %v2175, %v2265
      %2267 = vmatmul.bf16.gmra.mxu0 %v2205
      %v2268 = vpop.f32.mrf.mxu0
      %v2269 = vadd.f32 %v2175, %v2268
      %v2270 = vpop.f32.mrf.mxu0
      %v2271 = vadd.f32 %v2175, %v2270
      %2272 = vmatmul.bf16.gmra.mxu0 %v2207
      %v2273 = vpop.f32.mrf.mxu0
      %v2274 = vadd.f32 %v2175, %v2273
      %v2275 = vpop.f32.mrf.mxu0
      %v2276 = vadd.f32 %v2175, %v2275
      %2277 = vmatmul.bf16.gmra.mxu0 %v2209
      %v2278 = vpop.f32.mrf.mxu0
      %v2279 = vadd.f32 %v2175, %v2278
      %v2280 = vpop.f32.mrf.mxu0
      %v2281 = vadd.f32 %v2175, %v2280
      %2282 = vmatmul.bf16.gmra.mxu0 %v2211
      %v2283 = vpop.f32.mrf.mxu0
      %v2284 = vadd.f32 %v2175, %v2283
      %v2285 = vpop.f32.mrf.mxu0
      %v2286 = vadd.f32 %v2175, %v2285
      %2287 = vmatmul.bf16.gmra.mxu0 %v2213
      %v2288 = vpop.f32.mrf.mxu0
      %v2289 = vadd.f32 %v2175, %v2288
      %v2290 = vpop.f32.mrf.mxu0
      %v2291 = vadd.f32 %v2175, %v2290
      %2292 = vmatmul.bf16.gmra.mxu0 %v2215
      %v2293 = vpop.f32.mrf.mxu0
      %v2294 = vadd.f32 %v2175, %v2293
      %v2295 = vpop.f32.mrf.mxu0
      %v2296 = vadd.f32 %v2175, %v2295
      %2297 = vmatmul.bf16.gmra.mxu0 %v2217
      %v2298 = vpop.f32.mrf.mxu0
      %v2299 = vadd.f32 %v2175, %v2298
      %v2300 = vpop.f32.mrf.mxu0
      %v2301 = vadd.f32 %v2175, %v2300
      %2302 = vmatmul.bf16.gmra.mxu0 %v2219
      %v2303 = vpop.f32.mrf.mxu0
      %v2304 = vadd.f32 %v2175, %v2303
      %v2305 = vpop.f32.mrf.mxu0
      %v2306 = vadd.f32 %v2175, %v2305
      %2307 = vmatmul.bf16.gmra.mxu0 %v2221
      %v2308 = vpop.f32.mrf.mxu0
      %v2309 = vadd.f32 %v2175, %v2308
      %v2310 = vpop.f32.mrf.mxu0
      %v2311 = vadd.f32 %v2175, %v2310
      %2312 = vmatmul.bf16.gmra.mxu0 %v2223
      %v2313 = vpop.f32.mrf.mxu0
      %v2314 = vadd.f32 %v2175, %v2313
      %v2315 = vpop.f32.mrf.mxu0
      %v2316 = vadd.f32 %v2175, %v2315
      %2317 = vdwg.mxu0
      %v2318 = vadd.f32 %v2239, %v2241
      %v2319 = vadd.f32 %v2318, %v2244
      %v2320 = vadd.f32 %v2319, %v2246
      %v2321 = vadd.f32 %v2320, %v2249
      %v2322 = vadd.f32 %v2321, %v2251
      %v2323 = vadd.f32 %v2322, %v2254
      %v2324 = vadd.f32 %v2323, %v2256
      %v2325 = vadd.f32 %v2324, %v2259
      %v2326 = vadd.f32 %v2325, %v2261
      %v2327 = vadd.f32 %v2326, %v2264
      %v2328 = vadd.f32 %v2327, %v2266
      %v2329 = vadd.f32 %v2328, %v2269
      %v2330 = vadd.f32 %v2329, %v2271
      %v2331 = vadd.f32 %v2330, %v2274
      %v2332 = vadd.f32 %v2331, %v2276
      %v2333 = vadd.f32 %v2332, %v2279
      %v2334 = vadd.f32 %v2333, %v2281
      %v2335 = vadd.f32 %v2334, %v2284
      %v2336 = vadd.f32 %v2335, %v2286
      %v2337 = vadd.f32 %v2336, %v2289
      %v2338 = vadd.f32 %v2337, %v2291
      %v2339 = vadd.f32 %v2338, %v2294
      %v2340 = vadd.f32 %v2339, %v2296
      %v2341 = vadd.f32 %v2340, %v2299
      %v2342 = vadd.f32 %v2341, %v2301
      %v2343 = vadd.f32 %v2342, %v2304
      %v2344 = vadd.f32 %v2343, %v2306
      %v2345 = vadd.f32 %v2344, %v2309
      %v2346 = vadd.f32 %v2345, %v2311
      %v2347 = vadd.f32 %v2346, %v2314
      %v2348 = vadd.f32 %v2347, %v2316
      %v2349 = vrot.slane %v2348, 4
      %v2350 = vadd.f32 %v2348, %v2349
      %v2351 = vrot.slane %v2350, 2
      %v2352 = vadd.f32 %v2350, %v2351
      %v2353 = vrot.slane %v2352, 1
      %v2354 = vadd.f32 %v2352, %v2353
      %2355 = vst [vmem:[%s199] sm:$0x1] %v2354
      %v2356 = vmul.f32 %v2239, %v2239
      %v2357 = vmul.f32 %v2241, %v2241
      %v2358 = vmul.f32 %v2244, %v2244
      %v2359 = vmul.f32 %v2246, %v2246
      %v2360 = vmul.f32 %v2249, %v2249
      %v2361 = vmul.f32 %v2251, %v2251
      %v2362 = vmul.f32 %v2254, %v2254
      %v2363 = vmul.f32 %v2256, %v2256
      %v2364 = vmul.f32 %v2259, %v2259
      %v2365 = vmul.f32 %v2261, %v2261
      %v2366 = vmul.f32 %v2264, %v2264
      %v2367 = vmul.f32 %v2266, %v2266
      %v2368 = vmul.f32 %v2269, %v2269
      %v2369 = vmul.f32 %v2271, %v2271
      %v2370 = vmul.f32 %v2274, %v2274
      %v2371 = vmul.f32 %v2276, %v2276
      %v2372 = vmul.f32 %v2279, %v2279
      %v2373 = vmul.f32 %v2281, %v2281
      %v2374 = vmul.f32 %v2284, %v2284
      %v2375 = vmul.f32 %v2286, %v2286
      %v2376 = vmul.f32 %v2289, %v2289
      %v2377 = vmul.f32 %v2291, %v2291
      %v2378 = vmul.f32 %v2294, %v2294
      %v2379 = vmul.f32 %v2296, %v2296
      %v2380 = vmul.f32 %v2299, %v2299
      %v2381 = vmul.f32 %v2301, %v2301
      %v2382 = vmul.f32 %v2304, %v2304
      %v2383 = vmul.f32 %v2306, %v2306
      %v2384 = vmul.f32 %v2309, %v2309
      %v2385 = vmul.f32 %v2311, %v2311
      %v2386 = vmul.f32 %v2314, %v2314
      %v2387 = vmul.f32 %v2316, %v2316
      %v2388 = vadd.f32 %v2356, %v2357
      %v2389 = vadd.f32 %v2388, %v2358
      %v2390 = vadd.f32 %v2389, %v2359
      %v2391 = vadd.f32 %v2390, %v2360
      %v2392 = vadd.f32 %v2391, %v2361
      %v2393 = vadd.f32 %v2392, %v2362
      %v2394 = vadd.f32 %v2393, %v2363
      %v2395 = vadd.f32 %v2394, %v2364
      %v2396 = vadd.f32 %v2395, %v2365
      %v2397 = vadd.f32 %v2396, %v2366
      %v2398 = vadd.f32 %v2397, %v2367
      %v2399 = vadd.f32 %v2398, %v2368
      %v2400 = vadd.f32 %v2399, %v2369
      %v2401 = vadd.f32 %v2400, %v2370
      %v2402 = vadd.f32 %v2401, %v2371
      %v2403 = vadd.f32 %v2402, %v2372
      %v2404 = vadd.f32 %v2403, %v2373
      %v2405 = vadd.f32 %v2404, %v2374
      %v2406 = vadd.f32 %v2405, %v2375
      %v2407 = vadd.f32 %v2406, %v2376
      %v2408 = vadd.f32 %v2407, %v2377
      %v2409 = vadd.f32 %v2408, %v2378
      %v2410 = vadd.f32 %v2409, %v2379
      %v2411 = vadd.f32 %v2410, %v2380
      %v2412 = vadd.f32 %v2411, %v2381
      %v2413 = vadd.f32 %v2412, %v2382
      %v2414 = vadd.f32 %v2413, %v2383
      %v2415 = vadd.f32 %v2414, %v2384
      %v2416 = vadd.f32 %v2415, %v2385
      %v2417 = vadd.f32 %v2416, %v2386
      %v2418 = vadd.f32 %v2417, %v2387
      %v2419 = vrot.slane %v2418, 4
      %v2420 = vadd.f32 %v2418, %v2419
      %v2421 = vrot.slane %v2420, 2
      %v2422 = vadd.f32 %v2420, %v2421
      %v2423 = vrot.slane %v2422, 1
      %v2424 = vadd.f32 %v2422, %v2423
      %2425 = vst [vmem:[%s202] sm:$0x1] %v2424
      %p2426 = scmp.lt.s32.totalorder %s16, 1
      %s2427 = scalar_select %p2426, %s16, 1
      %s2428 = scalar_lea.vmem %s3, %s2427
      %p2429 = scmp.lt.s32.totalorder %s16, 1
      %s2430 = scalar_select %p2429, %s16, 1
      %s2431 = scalar_lea.vmem %s4, %s2430
      // Predicated region
      $region33: #{conv_block_forward.2} parent=31 // pred_check
        %p2432 = pneg %p102
      $region34: #{conv_block_forward.2} parent=31 // pred_check_branch
        %2434 = sbr.rel (%p2432) target = $region36
      $region35: #{conv_block_forward.2} parent=31 // pred_region
        _
      $region36: #{conv_block_forward.2} parent=31 // pred_fallthru
        _
      // Predicated region
      $region37: #{conv_block_forward.2} parent=31 // pred_check
        %p2435 = pneg %p128
      $region38: #{conv_block_forward.2} parent=31 // pred_check_branch
        %2437 = sbr.rel (%p2435) target = $region40
      $region39: #{conv_block_forward.2} parent=31 // pred_region
        _
      $region40: #{conv_block_forward.2} parent=31 // pred_fallthru
        _
    $region32: #{conv_block_forward.2} parent=5 // pred_fallthru
      _
    %p2438 = scmp.le.s32.totalorder 2, %s11
    // Predicated region
    $region41: #{conv_block_forward.2} parent=5 // pred_check
      %p2439 = pneg %p2438
    $region42: #{conv_block_forward.2} parent=5 // pred_check_branch
      %2441 = sbr.rel (%p2439) target = $region44
    $region43: #{conv_block_forward.2} parent=5 // pred_region
      %s2442 = ssub.s32 %s11, 2
      // Predicated region
      $region45: #{conv_block_forward.2} parent=43 // pred_check
        %p2443 = pneg %p108
      $region46: #{conv_block_forward.2} parent=43 // pred_check_branch
        %2445 = sbr.rel (%p2443) target = $region48
      $region47: #{conv_block_forward.2} parent=43 // pred_region
        %p2446 = scmp.lt.s32.totalorder %s17, 1
        %s2447 = scalar_select %p2446, %s17, 1
        %s2448 = scalar_lea.vmem %s3, %s2447
      $region48: #{conv_block_forward.2} parent=43 // pred_fallthru
        _
      // Predicated region
      $region49: #{conv_block_forward.2} parent=43 // pred_check
        %p2449 = pneg %p134
      $region50: #{conv_block_forward.2} parent=43 // pred_check_branch
        %2451 = sbr.rel (%p2449) target = $region52
      $region51: #{conv_block_forward.2} parent=43 // pred_region
        %p2452 = scmp.lt.s32.totalorder %s17, 1
        %s2453 = scalar_select %p2452, %s17, 1
        %s2454 = scalar_lea.vmem %s4, %s2453
      $region52: #{conv_block_forward.2} parent=43 // pred_fallthru
        _
    $region44: #{conv_block_forward.2} parent=5 // pred_fallthru
      _
  $region6: #{conv_block_forward.2} parent=0 // loop_footer
    %s15 = sadd.s32 1, %s11
  $region7: #{conv_block_forward.2} parent=0 // loop_footer_branch
    %10 = sbr.rel target = $region3
  $region8: #{conv_block_forward.2} parent=0 // loop_exit
    _

// kernel: conv_block_forward.3
$region0: #{conv_block_forward.3}
  #allocation0 [shape = 'u32[]', space=smem, size = 0x4, offset = 0x4, fixed_abs, tag = 'smem constant byte address 0x4 - core index']
  #allocation1 [shape = 'u32[72,128]{1,0:T(1,128)}', space=vmem, size = 0x9000, scoped, tag = 'internal scratch']
  %s0 = inlined_call_operand.vmem [shape: bf16[2,18,18,4], index: 0, kind: input, shape index: {}]
  %s1 = inlined_call_operand.vmem [shape: bf16[36,128], index: 1, kind: input, shape index: {}]
  %s2 = inlined_call_operand.vmem [shape: f32[1,128], index: 2, kind: input, shape index: {}]
  %s3 = inlined_call_operand.vmem [shape: f32[1,128], index: 3, kind: input, shape index: {}]
  %s4 = inlined_call_operand.vmem [shape: f32[2,8,8,128], index: 4, kind: output, shape index: {}]
  %s5 = sld [smem:[#allocation0]]
  $region49: #{conv_block_forward.3} parent=0
    _
  %s7 = ssub.s32 1, %s5
  %s8 = scalar_select 0, %s7, %s5
  loop: start=0, step=1, limit=4
  $region2: #{conv_block_forward.3} parent=0 // loop_pre_header
    _
  $region3: #{conv_block_forward.3} parent=0 // loop_header
    %s10 = sphi 0, %s14
    %p11 = scmp.ge.s32.totalorder %s10, 4
    %s20 = sphi 0, %s22
    %s23 = sphi 0, %s20
    %s24 = sphi 0, %s23
    %s40 = sphi 0, %s24
    %s44 = sphi 0, %s44
    %s46 = sphi 0, %s44
    %s47 = sphi 0, %s46
    %s61 = sphi 0, %s47
    %s65 = sphi 0, %s65
    %s67 = sphi 0, %s65
    %s68 = sphi 0, %s67
    %s82 = sphi 0, %s68
    %s86 = sphi 0, %s86
    %s88 = sphi 0, %s86
    %s89 = sphi 0, %s88
    %s103 = sphi 0, %s89
    %s109 = sphi 0, %s111
    %s112 = sphi 0, %s109
    %s113 = sphi 0, %s112
    %s129 = sphi 0, %s113
  $region4: #{conv_block_forward.3} parent=0 // loop_header_branch
    %13 = sbr.rel (%p11) target = $region8
  $region5: #{conv_block_forward.3} parent=0 // loop_body
    %s15 = ssub.s32 %s10, 1
    %s16 = ssub.s32 %s10, 2
    %s17 = sadd.s32 %s10, 1
    %s18 = ssub.s32 %s10, %s17
    %p19 = scmp.eq.s32.totalorder %s18, 0
    %s21 = sadd.s32 %s20, 1
    %s22 = scalar_select %p19, %s20, %s21
    %p25 = pneg %p19
    %p26 = scmp.eq.s32.totalorder %s10, 1
    %p27 = por %p25, %p26
    %p28 = scmp.ne.s32.totalorder %s20, %s23
    %p29 = scmp.eq.s32.totalorder %s10, 0
    %p30 = por %p28, %p29
    %p31 = scmp.ne.s32.totalorder %s20, %s23
    %p32 = scmp.eq.s32.totalorder %s15, 1
    %p33 = por %p31, %p32
    %p34 = scmp.ne.s32.totalorder %s23, %s24
    %p35 = scmp.eq.s32.totalorder %s15, 0
    %p36 = por %p34, %p35
    %p37 = scmp.ne.s32.totalorder %s23, %s24
    %p38 = scmp.eq.s32.totalorder %s16, 1
    %p39 = por %p37, %p38
    %p41 = scmp.ne.s32.totalorder %s24, %s40
    %p42 = scmp.eq.s32.totalorder %s16, 0
    %p43 = por %p41, %p42
    %s45 = sadd.s32 %s44, 1
    %p48 = scmp.eq.s32.totalorder %s10, 1
    %p49 = scmp.ne.s32.totalorder %s44, %s46
    %p50 = scmp.eq.s32.totalorder %s10, 0
    %p51 = por %p49, %p50
    %p52 = scmp.ne.s32.totalorder %s44, %s46
    %p53 = scmp.eq.s32.totalorder %s15, 1
    %p54 = por %p52, %p53
    %p55 = scmp.ne.s32.totalorder %s46, %s47
    %p56 = scmp.eq.s32.totalorder %s15, 0
    %p57 = por %p55, %p56
    %p58 = scmp.ne.s32.totalorder %s46, %s47
    %p59 = scmp.eq.s32.totalorder %s16, 1
    %p60 = por %p58, %p59
    %p62 = scmp.ne.s32.totalorder %s47, %s61
    %p63 = scmp.eq.s32.totalorder %s16, 0
    %p64 = por %p62, %p63
    %s66 = sadd.s32 %s65, 1
    %p69 = scmp.eq.s32.totalorder %s10, 1
    %p70 = scmp.ne.s32.totalorder %s65, %s67
    %p71 = scmp.eq.s32.totalorder %s10, 0
    %p72 = por %p70, %p71
    %p73 = scmp.ne.s32.totalorder %s65, %s67
    %p74 = scmp.eq.s32.totalorder %s15, 1
    %p75 = por %p73, %p74
    %p76 = scmp.ne.s32.totalorder %s67, %s68
    %p77 = scmp.eq.s32.totalorder %s15, 0
    %p78 = por %p76, %p77
    %p79 = scmp.ne.s32.totalorder %s67, %s68
    %p80 = scmp.eq.s32.totalorder %s16, 1
    %p81 = por %p79, %p80
    %p83 = scmp.ne.s32.totalorder %s68, %s82
    %p84 = scmp.eq.s32.totalorder %s16, 0
    %p85 = por %p83, %p84
    %s87 = sadd.s32 %s86, 1
    %p90 = scmp.eq.s32.totalorder %s10, 1
    %p91 = scmp.ne.s32.totalorder %s86, %s88
    %p92 = scmp.eq.s32.totalorder %s10, 0
    %p93 = por %p91, %p92
    %p94 = scmp.ne.s32.totalorder %s86, %s88
    %p95 = scmp.eq.s32.totalorder %s15, 1
    %p96 = por %p94, %p95
    %p97 = scmp.ne.s32.totalorder %s88, %s89
    %p98 = scmp.eq.s32.totalorder %s15, 0
    %p99 = por %p97, %p98
    %p100 = scmp.ne.s32.totalorder %s88, %s89
    %p101 = scmp.eq.s32.totalorder %s16, 1
    %p102 = por %p100, %p101
    %p104 = scmp.ne.s32.totalorder %s89, %s103
    %p105 = scmp.eq.s32.totalorder %s16, 0
    %p106 = por %p104, %p105
    %s107 = ssub.s32 %s10, %s17
    %p108 = scmp.eq.s32.totalorder %s107, 0
    %s110 = sadd.s32 %s109, 1
    %s111 = scalar_select %p108, %s109, %s110
    %p114 = pneg %p108
    %p115 = scmp.eq.s32.totalorder %s10, 1
    %p116 = por %p114, %p115
    %p117 = scmp.ne.s32.totalorder %s109, %s112
    %p118 = scmp.eq.s32.totalorder %s10, 0
    %p119 = por %p117, %p118
    %p120 = scmp.ne.s32.totalorder %s109, %s112
    %p121 = scmp.eq.s32.totalorder %s15, 1
    %p122 = por %p120, %p121
    %p123 = scmp.ne.s32.totalorder %s112, %s113
    %p124 = scmp.eq.s32.totalorder %s15, 0
    %p125 = por %p123, %p124
    %p126 = scmp.ne.s32.totalorder %s112, %s113
    %p127 = scmp.eq.s32.totalorder %s16, 1
    %p128 = por %p126, %p127
    %p130 = scmp.ne.s32.totalorder %s113, %s129
    %p131 = scmp.eq.s32.totalorder %s16, 0
    %p132 = por %p130, %p131
    %p133 = scmp.le.s32.totalorder 1, %s10
    %p134 = scmp.lt.s32.totalorder %s10, 3
    %p135 = pnand %p133, %p134
    %p136 = pneg %p135
    // Predicated region
    $region9: #{conv_block_forward.3} parent=5 // pred_check
      _
    $region10: #{conv_block_forward.3} parent=5 // pred_check_branch
      %138 = sbr.rel (%p135) target = $region12
    $region11: #{conv_block_forward.3} parent=5 // pred_region
      %s139 = ssub.s32 %s10, 1
      // Predicated region
      $region13: #{conv_block_forward.3} parent=11 // pred_check
        %p140 = pneg %p57
      $region14: #{conv_block_forward.3} parent=11 // pred_check_branch
        %142 = sbr.rel (%p140) target = $region16
      $region15: #{conv_block_forward.3} parent=11 // pred_region
        _
      $region16: #{conv_block_forward.3} parent=11 // pred_fallthru
        _
      // Predicated region
      $region17: #{conv_block_forward.3} parent=11 // pred_check
        %p143 = pneg %p78
      $region18: #{conv_block_forward.3} parent=11 // pred_check_branch
        %145 = sbr.rel (%p143) target = $region20
      $region19: #{conv_block_forward.3} parent=11 // pred_region
        _
      $region20: #{conv_block_forward.3} parent=11 // pred_fallthru
        _
      // Predicated region
      $region21: #{conv_block_forward.3} parent=11 // pred_check
        %p146 = pneg %p99
      $region22: #{conv_block_forward.3} parent=11 // pred_check_branch
        %148 = sbr.rel (%p146) target = $region24
      $region23: #{conv_block_forward.3} parent=11 // pred_region
        _
      $region24: #{conv_block_forward.3} parent=11 // pred_fallthru
        _
    $region12: #{conv_block_forward.3} parent=5 // pred_fallthru
      _
    %p149 = scmp.lt.s32.totalorder %s10, 2
    // Predicated region
    $region25: #{conv_block_forward.3} parent=5 // pred_check
      %p150 = pneg %p149
    $region26: #{conv_block_forward.3} parent=5 // pred_check_branch
      %152 = sbr.rel (%p150) target = $region28
    $region27: #{conv_block_forward.3} parent=5 // pred_region
      // Predicated region
      $region29: #{conv_block_forward.3} parent=27 // pred_check
        %p153 = pneg %p30
      $region30: #{conv_block_forward.3} parent=27 // pred_check_branch
        %155 = sbr.rel (%p153) target = $region32
      $region31: #{conv_block_forward.3} parent=27 // pred_region
        %p156 = scmp.lt.s32.totalorder %s10, 1
        %s157 = scalar_select %p156, %s10, 1
        %s158 = smul.addr %s157, 54
        %s159 = smul.addr %s158, 4
        %s160 = scalar_lea.vmem %s0, %s159
      $region32: #{conv_block_forward.3} parent=27 // pred_fallthru
        _
    $region28: #{conv_block_forward.3} parent=5 // pred_fallthru
      _
    %p161 = scmp.le.s32.totalorder 1, %s10
    %p162 = scmp.lt.s32.totalorder %s10, 3
    %p163 = pnand %p161, %p162
    %p164 = pneg %p163
    // Predicated region
    $region33: #{conv_block_forward.3} parent=5 // pred_check
      _
    $region34: #{conv_block_forward.3} parent=5 // pred_check_branch
      %166 = sbr.rel (%p163) target = $region36
    $region35: #{conv_block_forward.3} parent=5 // pred_region
      %s167 = ssub.s32 %s10, 1
      %p168 = scmp.lt.s32.totalorder %s15, 1
      %s169 = scalar_select %p168, %s15, 1
      %s170 = smul.addr %s169, 54
      %s171 = smul.addr %s170, 4
      %s172 = scalar_lea.vmem %s0, %s171
      %p173 = pneg %p36
      %p174 = pneg %p33
      %p175 = pneg %p57
      %p176 = pneg %p54
      %p177 = pneg %p78
      %p178 = pneg %p75
      %p179 = pneg %p99
      %p180 = pneg %p96
      %p181 = pneg %p125
      %p182 = pneg %p122
      %p183 = scmp.lt.s32.totalorder %s15, 1
      %s184 = scalar_select %p183, %s15, 1
      %s185 = smul.addr %s184, 8
      %s186 = smul.addr %s185, 8
      %s187 = scalar_lea.vmem %s4, %s186
      %p188 = scmp.lt.s32.totalorder %s15, 1
      %s189 = scalar_select %p188, %s15, 1
      %s190 = smul.addr %s189, 54
      %s191 = smul.addr %s190, 4
      %s192 = scalar_lea.vmem %s0, %s191
      %p193 = scmp.lt.s32.totalorder %s15, 1
      %s194 = scalar_select %p193, %s15, 1
      %s195 = smul.addr %s194, 8
      %s196 = smul.addr %s195, 8
      %s197 = scalar_lea.vmem %s4, %s196
      %v199 = vld [vmem:[%s192] sm:$0xf]
      %v200 = vld [vmem:[%s192 + $0x4] sm:$0xf]
      %v201 = vld [vmem:[%s192 + $0xc] sm:$0xf]
      %v202 = vld [vmem:[%s192 + $0x10] sm:$0xf]
      %v203 = vld [vmem:[%s192 + $0x18] sm:$0xf]
      %v204 = vld [vmem:[%s192 + $0x1c] sm:$0xf]
      %v205 = vld [vmem:[%s192 + $0x24] sm:$0xf]
      %v206 = vld [vmem:[%s192 + $0x28] sm:$0xf]
      %v207 = vld [vmem:[%s192 + $0x30] sm:$0xf]
      %v208 = vld [vmem:[%s192 + $0x34] sm:$0xf]
      %v209 = vld [vmem:[%s192 + $0x3c] sm:$0xf]
      %v210 = vld [vmem:[%s192 + $0x40] sm:$0xf]
      %v211 = vld [vmem:[%s192 + $0x48] sm:$0xf]
      %v212 = vld [vmem:[%s192 + $0x4c] sm:$0xf]
      %v213 = vld [vmem:[%s192 + $0x54] sm:$0xf]
      %v214 = vld [vmem:[%s192 + $0x58] sm:$0xf]
      %v215 = vld [vmem:[%s192 + $0x60] sm:$0xf]
      %v216 = vld [vmem:[%s192 + $0x64] sm:$0xf]
      %v217 = vld [vmem:[%s192 + $0x6c] sm:$0xf]
      %v218 = vld [vmem:[%s192 + $0x70] sm:$0xf]
      %v219 = vld [vmem:[%s192 + $0x78] sm:$0xf]
      %v220 = vld [vmem:[%s192 + $0x7c] sm:$0xf]
      %v221 = vld [vmem:[%s192 + $0x84] sm:$0xf]
      %v222 = vld [vmem:[%s192 + $0x88] sm:$0xf]
      %v223 = vld [vmem:[%s192 + $0x90] sm:$0xf]
      %v224 = vld [vmem:[%s192 + $0x94] sm:$0xf]
      %v225 = vld [vmem:[%s192 + $0x9c] sm:$0xf]
      %v226 = vld [vmem:[%s192 + $0xa0] sm:$0xf]
      %v227 = vld [vmem:[%s192 + $0xa8] sm:$0xf]
      %v228 = vld [vmem:[%s192 + $0xac] sm:$0xf]
      %v229 = vld [vmem:[%s192 + $0xb4] sm:$0xf]
      %v230 = vld [vmem:[%s192 + $0xb8] sm:$0xf]
      %v231 = vld [vmem:[%s192 + $0x8] sm:$0x1]
      %v232 = vld [vmem:[%s192 + $0x14] sm:$0x1]
      %v233 = vld [vmem:[%s192 + $0x20] sm:$0x1]
      %v234 = vld [vmem:[%s192 + $0x2c] sm:$0x1]
      %v235 = vld [vmem:[%s192 + $0x38] sm:$0x1]
      %v236 = vld [vmem:[%s192 + $0x44] sm:$0x1]
      %v237 = vld [vmem:[%s192 + $0x50] sm:$0x1]
      %v238 = vld [vmem:[%s192 + $0x5c] sm:$0x1]
      %v239 = vld [vmem:[%s192 + $0x68] sm:$0x1]
      %v240 = vld [vmem:[%s192 + $0x74] sm:$0x1]
      %v241 = vld [vmem:[%s192 + $0x80] sm:$0x1]
      %v242 = vld [vmem:[%s192 + $0x8c] sm:$0x1]
      %v243 = vld [vmem:[%s192 + $0x98] sm:$0x1]
      %v244 = vld [vmem:[%s192 + $0xa4] sm:$0x1]
      %v245 = vld [vmem:[%s192 + $0xb0] sm:$0x1]
      %v246 = vld [vmem:[%s192 + $0xbc] sm:$0x1]
      %v247 = vld [vmem:[%s192] sm:$0xe]
      %v248 = vld [vmem:[%s192 + $0xc] sm:$0xe]
      %v249 = vld [vmem:[%s192 + $0x18] sm:$0xe]
      %v250 = vld [vmem:[%s192 + $0x24] sm:$0xe]
      %v251 = vld [vmem:[%s192 + $0x30] sm:$0xe]
      %v252 = vld [vmem:[%s192 + $0x3c] sm:$0xe]
      %v253 = vld [vmem:[%s192 + $0x48] sm:$0xe]
      %v254 = vld [vmem:[%s192 + $0x54] sm:$0xe]
      %v255 = vld [vmem:[%s192 + $0x60] sm:$0xe]
      %v256 = vld [vmem:[%s192 + $0x6c] sm:$0xe]
      %v257 = vld [vmem:[%s192 + $0x78] sm:$0xe]
      %v258 = vld [vmem:[%s192 + $0x84] sm:$0xe]
      %v259 = vld [vmem:[%s192 + $0x90] sm:$0xe]
      %v260 = vld [vmem:[%s192 + $0x9c] sm:$0xe]
      %v261 = vld [vmem:[%s192 + $0xa8] sm:$0xe]
      %v262 = vld [vmem:[%s192 + $0xb4] sm:$0xe]
      %s263 = scalar_lea.vmem %s192, 12
      %v264 = vld [vmem:[%s263] sm:$0xf]
      %v265 = vld [vmem:[%s263 + $0x4] sm:$0xf]
      %v266 = vld [vmem:[%s263 + $0xc] sm:$0xf]
      %v267 = vld [vmem:[%s263 + $0x10] sm:$0xf]
      %v268 = vld [vmem:[%s263 + $0x18] sm:$0xf]
      %v269 = vld [vmem:[%s263 + $0x1c] sm:$0xf]
      %v270 = vld [vmem:[%s263 + $0x24] sm:$0xf]
      %v271 = vld [vmem:[%s263 + $0x28] sm:$0xf]
      %v272 = vld [vmem:[%s263 + $0x30] sm:$0xf]
      %v273 = vld [vmem:[%s263 + $0x34] sm:$0xf]
      %v274 = vld [vmem:[%s263 + $0x3c] sm:$0xf]
      %v275 = vld [vmem:[%s263 + $0x40] sm:$0xf]
      %v276 = vld [vmem:[%s263 + $0x48] sm:$0xf]
      %v277 = vld [vmem:[%s263 + $0x4c] sm:$0xf]
      %v278 = vld [vmem:[%s263 + $0x54] sm:$0xf]
      %v279 = vld [vmem:[%s263 + $0x58] sm:$0xf]
      %v280 = vld [vmem:[%s263 + $0x60] sm:$0xf]
      %v281 = vld [vmem:[%s263 + $0x64] sm:$0xf]
      %v282 = vld [vmem:[%s263 + $0x6c] sm:$0xf]
      %v283 = vld [vmem:[%s263 + $0x70] sm:$0xf]
      %v284 = vld [vmem:[%s263 + $0x78] sm:$0xf]
      %v285 = vld [vmem:[%s263 + $0x7c] sm:$0xf]
      %v286 = vld [vmem:[%s263 + $0x84] sm:$0xf]
      %v287 = vld [vmem:[%s263 + $0x88] sm:$0xf]
      %v288 = vld [vmem:[%s263 + $0x90] sm:$0xf]
      %v289 = vld [vmem:[%s263 + $0x94] sm:$0xf]
      %v290 = vld [vmem:[%s263 + $0x9c] sm:$0xf]
      %v291 = vld [vmem:[%s263 + $0xa0] sm:$0xf]
      %v292 = vld [vmem:[%s263 + $0xa8] sm:$0xf]
      %v293 = vld [vmem:[%s263 + $0xac] sm:$0xf]
      %v294 = vld [vmem:[%s263 + $0xb4] sm:$0xf]
      %v295 = vld [vmem:[%s263 + $0xb8] sm:$0xf]
      %v296 = vld [vmem:[%s263 + $0x8] sm:$0x1]
      %v297 = vld [vmem:[%s263 + $0x14] sm:$0x1]
      %v298 = vld [vmem:[%s263 + $0x20] sm:$0x1]
      %v299 = vld [vmem:[%s263 + $0x2c] sm:$0x1]
      %v300 = vld [vmem:[%s263 + $0x38] sm:$0x1]
      %v301 = vld [vmem:[%s263 + $0x44] sm:$0x1]
      %v302 = vld [vmem:[%s263 + $0x50] sm:$0x1]
      %v303 = vld [vmem:[%s263 + $0x5c] sm:$0x1]
      %v304 = vld [vmem:[%s263 + $0x68] sm:$0x1]
      %v305 = vld [vmem:[%s263 + $0x74] sm:$0x1]
      %v306 = vld [vmem:[%s263 + $0x80] sm:$0x1]
      %v307 = vld [vmem:[%s263 + $0x8c] sm:$0x1]
      %v308 = vld [vmem:[%s263 + $0x98] sm:$0x1]
      %v309 = vld [vmem:[%s263 + $0xa4] sm:$0x1]
      %v310 = vld [vmem:[%s263 + $0xb0] sm:$0x1]
      %v311 = vld [vmem:[%s263 + $0xbc] sm:$0x1]
      %v312 = vld [vmem:[%s263] sm:$0xe]
      %v313 = vld [vmem:[%s263 + $0xc] sm:$0xe]
      %v314 = vld [vmem:[%s263 + $0x18] sm:$0xe]
      %v315 = vld [vmem:[%s263 + $0x24] sm:$0xe]
      %v316 = vld [vmem:[%s263 + $0x30] sm:$0xe]
      %v317 = vld [vmem:[%s263 + $0x3c] sm:$0xe]
      %v318 = vld [vmem:[%s263 + $0x48] sm:$0xe]
      %v319 = vld [vmem:[%s263 + $0x54] sm:$0xe]
      %v320 = vld [vmem:[%s263 + $0x60] sm:$0xe]
      %v321 = vld [vmem:[%s263 + $0x6c] sm:$0xe]
      %v322 = vld [vmem:[%s263 + $0x78] sm:$0xe]
      %v323 = vld [vmem:[%s263 + $0x84] sm:$0xe]
      %v324 = vld [vmem:[%s263 + $0x90] sm:$0xe]
      %v325 = vld [vmem:[%s263 + $0x9c] sm:$0xe]
      %v326 = vld [vmem:[%s263 + $0xa8] sm:$0xe]
      %v327 = vld [vmem:[%s263 + $0xb4] sm:$0xe]
      %s328 = scalar_lea.vmem %s192, 24
      %v329 = vld [vmem:[%s328] sm:$0xf]
      %v330 = vld [vmem:[%s328 + $0x4] sm:$0xf]
      %v331 = vld [vmem:[%s328 + $0xc] sm:$0xf]
      %v332 = vld [vmem:[%s328 + $0x10] sm:$0xf]
      %v333 = vld [vmem:[%s328 + $0x18] sm:$0xf]
      %v334 = vld [vmem:[%s328 + $0x1c] sm:$0xf]
      %v335 = vld [vmem:[%s328 + $0x24] sm:$0xf]
      %v336 = vld [vmem:[%s328 + $0x28] sm:$0xf]
      %v337 = vld [vmem:[%s328 + $0x30] sm:$0xf]
      %v338 = vld [vmem:[%s328 + $0x34] sm:$0xf]
      %v339 = vld [vmem:[%s328 + $0x3c] sm:$0xf]
      %v340 = vld [vmem:[%s328 + $0x40] sm:$0xf]
      %v341 = vld [vmem:[%s328 + $0x48] sm:$0xf]
      %v342 = vld [vmem:[%s328 + $0x4c] sm:$0xf]
      %v343 = vld [vmem:[%s328 + $0x54] sm:$0xf]
      %v344 = vld [vmem:[%s328 + $0x58] sm:$0xf]
      %v345 = vld [vmem:[%s328 + $0x60] sm:$0xf]
      %v346 = vld [vmem:[%s328 + $0x64] sm:$0xf]
      %v347 = vld [vmem:[%s328 + $0x6c] sm:$0xf]
      %v348 = vld [vmem:[%s328 + $0x70] sm:$0xf]
      %v349 = vld [vmem:[%s328 + $0x78] sm:$0xf]
      %v350 = vld [vmem:[%s328 + $0x7c] sm:$0xf]
      %v351 = vld [vmem:[%s328 + $0x84] sm:$0xf]
      %v352 = vld [vmem:[%s328 + $0x88] sm:$0xf]
      %v353 = vld [vmem:[%s328 + $0x90] sm:$0xf]
      %v354 = vld [vmem:[%s328 + $0x94] sm:$0xf]
      %v355 = vld [vmem:[%s328 + $0x9c] sm:$0xf]
      %v356 = vld [vmem:[%s328 + $0xa0] sm:$0xf]
      %v357 = vld [vmem:[%s328 + $0xa8] sm:$0xf]
      %v358 = vld [vmem:[%s328 + $0xac] sm:$0xf]
      %v359 = vld [vmem:[%s328 + $0xb4] sm:$0xf]
      %v360 = vld [vmem:[%s328 + $0xb8] sm:$0xf]
      %v361 = vld [vmem:[%s328 + $0x8] sm:$0x1]
      %v362 = vld [vmem:[%s328 + $0x14] sm:$0x1]
      %v363 = vld [vmem:[%s328 + $0x20] sm:$0x1]
      %v364 = vld [vmem:[%s328 + $0x2c] sm:$0x1]
      %v365 = vld [vmem:[%s328 + $0x38] sm:$0x1]
      %v366 = vld [vmem:[%s328 + $0x44] sm:$0x1]
      %v367 = vld [vmem:[%s328 + $0x50] sm:$0x1]
      %v368 = vld [vmem:[%s328 + $0x5c] sm:$0x1]
      %v369 = vld [vmem:[%s328 + $0x68] sm:$0x1]
      %v370 = vld [vmem:[%s328 + $0x74] sm:$0x1]
      %v371 = vld [vmem:[%s328 + $0x80] sm:$0x1]
      %v372 = vld [vmem:[%s328 + $0x8c] sm:$0x1]
      %v373 = vld [vmem:[%s328 + $0x98] sm:$0x1]
      %v374 = vld [vmem:[%s328 + $0xa4] sm:$0x1]
      %v375 = vld [vmem:[%s328 + $0xb0] sm:$0x1]
      %v376 = vld [vmem:[%s328 + $0xbc] sm:$0x1]
      %v377 = vld [vmem:[%s328] sm:$0xe]
      %v378 = vld [vmem:[%s328 + $0xc] sm:$0xe]
      %v379 = vld [vmem:[%s328 + $0x18] sm:$0xe]
      %v380 = vld [vmem:[%s328 + $0x24] sm:$0xe]
      %v381 = vld [vmem:[%s328 + $0x30] sm:$0xe]
      %v382 = vld [vmem:[%s328 + $0x3c] sm:$0xe]
      %v383 = vld [vmem:[%s328 + $0x48] sm:$0xe]
      %v384 = vld [vmem:[%s328 + $0x54] sm:$0xe]
      %v385 = vld [vmem:[%s328 + $0x60] sm:$0xe]
      %v386 = vld [vmem:[%s328 + $0x6c] sm:$0xe]
      %v387 = vld [vmem:[%s328 + $0x78] sm:$0xe]
      %v388 = vld [vmem:[%s328 + $0x84] sm:$0xe]
      %v389 = vld [vmem:[%s328 + $0x90] sm:$0xe]
      %v390 = vld [vmem:[%s328 + $0x9c] sm:$0xe]
      %v391 = vld [vmem:[%s328 + $0xa8] sm:$0xe]
      %v392 = vld [vmem:[%s328 + $0xb4] sm:$0xe]
      %v425 = vunpack.c.l.b16 %v199
      %v426 = vunpack.c.l.b16 %v200
      %v427 = vunpack.c.l.b16 %v201
      %v428 = vunpack.c.l.b16 %v202
      %v429 = vunpack.c.l.b16 %v203
      %v430 = vunpack.c.l.b16 %v204
      %v431 = vunpack.c.l.b16 %v205
      %v432 = vunpack.c.l.b16 %v206
      %v433 = vunpack.c.l.b16 %v207
      %v434 = vunpack.c.l.b16 %v208
      %v435 = vunpack.c.l.b16 %v209
      %v436 = vunpack.c.l.b16 %v210
      %v437 = vunpack.c.l.b16 %v211
      %v438 = vunpack.c.l.b16 %v212
      %v439 = vunpack.c.l.b16 %v213
      %v440 = vunpack.c.l.b16 %v214
      %v441 = vunpack.c.l.b16 %v215
      %v442 = vunpack.c.l.b16 %v216
      %v443 = vunpack.c.l.b16 %v217
      %v444 = vunpack.c.l.b16 %v218
      %v445 = vunpack.c.l.b16 %v219
      %v446 = vunpack.c.l.b16 %v220
      %v447 = vunpack.c.l.b16 %v221
      %v448 = vunpack.c.l.b16 %v222
      %v449 = vunpack.c.l.b16 %v223
      %v450 = vunpack.c.l.b16 %v224
      %v451 = vunpack.c.l.b16 %v225
      %v452 = vunpack.c.l.b16 %v226
      %v453 = vunpack.c.l.b16 %v227
      %v454 = vunpack.c.l.b16 %v228
      %v455 = vunpack.c.l.b16 %v229
      %v456 = vunpack.c.l.b16 %v230
      %v457 = vpack.c.b16 %v426, %v425
      %v458 = vpack.c.b16 %v428, %v427
      %v459 = vpack.c.b16 %v430, %v429
      %v460 = vpack.c.b16 %v432, %v431
      %v461 = vpack.c.b16 %v434, %v433
      %v462 = vpack.c.b16 %v436, %v435
      %v463 = vpack.c.b16 %v438, %v437
      %v464 = vpack.c.b16 %v440, %v439
      %v465 = vpack.c.b16 %v442, %v441
      %v466 = vpack.c.b16 %v444, %v443
      %v467 = vpack.c.b16 %v446, %v445
      %v468 = vpack.c.b16 %v448, %v447
      %v469 = vpack.c.b16 %v450, %v449
      %v470 = vpack.c.b16 %v452, %v451
      %v471 = vpack.c.b16 %v454, %v453
      %v472 = vpack.c.b16 %v456, %v455
      %v489 = vunpack.c.l.b16 %v231
      %v490 = vunpack.c.l.b16 %v232
      %v491 = vunpack.c.l.b16 %v233
      %v492 = vunpack.c.l.b16 %v234
      %v493 = vunpack.c.l.b16 %v235
      %v494 = vunpack.c.l.b16 %v236
      %v495 = vunpack.c.l.b16 %v237
      %v496 = vunpack.c.l.b16 %v238
      %v497 = vunpack.c.l.b16 %v239
      %v498 = vunpack.c.l.b16 %v240
      %v499 = vunpack.c.l.b16 %v241
      %v500 = vunpack.c.l.b16 %v242
      %v501 = vunpack.c.l.b16 %v243
      %v502 = vunpack.c.l.b16 %v244
      %v503 = vunpack.c.l.b16 %v245
      %v504 = vunpack.c.l.b16 %v246
      %v505 = vpack.c.b16 %v489, %v489
      %v506 = vpack.c.b16 %v490, %v490
      %v507 = vpack.c.b16 %v491, %v491
      %v508 = vpack.c.b16 %v492, %v492
      %v509 = vpack.c.b16 %v493, %v493
      %v510 = vpack.c.b16 %v494, %v494
      %v511 = vpack.c.b16 %v495, %v495
      %v512 = vpack.c.b16 %v496, %v496
      %v513 = vpack.c.b16 %v497, %v497
      %v514 = vpack.c.b16 %v498, %v498
      %v515 = vpack.c.b16 %v499, %v499
      %v516 = vpack.c.b16 %v500, %v500
      %v517 = vpack.c.b16 %v501, %v501
      %v518 = vpack.c.b16 %v502, %v502
      %v519 = vpack.c.b16 %v503, %v503
      %v520 = vpack.c.b16 %v504, %v504
      %vm521 = vsmask.f32 7424
      %v523 = vshrl.u32 %v457, 16
      %v525 = vshll.u32 %v457, 16
      %v527 = vrot.slane %v525, 1
      %v528 = vor.u32 %v523, %v527
      %v530 = vshll.u32 %v505, 16
      %v532 = vrot.slane %v530, 1
      %v533 = vsel %vm521, %v528, %v532
      %v535 = vshrl.u32 %v458, 16
      %v537 = vshll.u32 %v458, 16
      %v539 = vrot.slane %v537, 1
      %v540 = vor.u32 %v535, %v539
      %v542 = vshll.u32 %v506, 16
      %v544 = vrot.slane %v542, 1
      %v545 = vsel %vm521, %v540, %v544
      %v547 = vshrl.u32 %v459, 16
      %v549 = vshll.u32 %v459, 16
      %v551 = vrot.slane %v549, 1
      %v552 = vor.u32 %v547, %v551
      %v554 = vshll.u32 %v507, 16
      %v556 = vrot.slane %v554, 1
      %v557 = vsel %vm521, %v552, %v556
      %v559 = vshrl.u32 %v460, 16
      %v561 = vshll.u32 %v460, 16
      %v563 = vrot.slane %v561, 1
      %v564 = vor.u32 %v559, %v563
      %v566 = vshll.u32 %v508, 16
      %v568 = vrot.slane %v566, 1
      %v569 = vsel %vm521, %v564, %v568
      %v571 = vshrl.u32 %v461, 16
      %v573 = vshll.u32 %v461, 16
      %v575 = vrot.slane %v573, 1
      %v576 = vor.u32 %v571, %v575
      %v578 = vshll.u32 %v509, 16
      %v580 = vrot.slane %v578, 1
      %v581 = vsel %vm521, %v576, %v580
      %v583 = vshrl.u32 %v462, 16
      %v585 = vshll.u32 %v462, 16
      %v587 = vrot.slane %v585, 1
      %v588 = vor.u32 %v583, %v587
      %v590 = vshll.u32 %v510, 16
      %v592 = vrot.slane %v590, 1
      %v593 = vsel %vm521, %v588, %v592
      %v595 = vshrl.u32 %v463, 16
      %v597 = vshll.u32 %v463, 16
      %v599 = vrot.slane %v597, 1
      %v600 = vor.u32 %v595, %v599
      %v602 = vshll.u32 %v511, 16
      %v604 = vrot.slane %v602, 1
      %v605 = vsel %vm521, %v600, %v604
      %v607 = vshrl.u32 %v464, 16
      %v609 = vshll.u32 %v464, 16
      %v611 = vrot.slane %v609, 1
      %v612 = vor.u32 %v607, %v611
      %v614 = vshll.u32 %v512, 16
      %v616 = vrot.slane %v614, 1
      %v617 = vsel %vm521, %v612, %v616
      %v619 = vshrl.u32 %v465, 16
      %v621 = vshll.u32 %v465, 16
      %v623 = vrot.slane %v621, 1
      %v624 = vor.u32 %v619, %v623
      %v626 = vshll.u32 %v513, 16
      %v628 = vrot.slane %v626, 1
      %v629 = vsel %vm521, %v624, %v628
      %v631 = vshrl.u32 %v466, 16
      %v633 = vshll.u32 %v466, 16
      %v635 = vrot.slane %v633, 1
      %v636 = vor.u32 %v631, %v635
      %v638 = vshll.u32 %v514, 16
      %v640 = vrot.slane %v638, 1
      %v641 = vsel %vm521, %v636, %v640
      %v643 = vshrl.u32 %v467, 16
      %v645 = vshll.u32 %v467, 16
      %v647 = vrot.slane %v645, 1
      %v648 = vor.u32 %v643, %v647
      %v650 = vshll.u32 %v515, 16
      %v652 = vrot.slane %v650, 1
      %v653 = vsel %vm521, %v648, %v652
      %v655 = vshrl.u32 %v468, 16
      %v657 = vshll.u32 %v468, 16
      %v659 = vrot.slane %v657, 1
      %v660 = vor.u32 %v655, %v659
      %v662 = vshll.u32 %v516, 16
      %v664 = vrot.slane %v662, 1
      %v665 = vsel %vm521, %v660, %v664
      %v667 = vshrl.u32 %v469, 16
      %v669 = vshll.u32 %v469, 16
      %v671 = vrot.slane %v669, 1
      %v672 = vor.u32 %v667, %v671
      %v674 = vshll.u32 %v517, 16
      %v676 = vrot.slane %v674, 1
      %v677 = vsel %vm521, %v672, %v676
      %v679 = vshrl.u32 %v470, 16
      %v681 = vshll.u32 %v470, 16
      %v683 = vrot.slane %v681, 1
      %v684 = vor.u32 %v679, %v683
      %v686 = vshll.u32 %v518, 16
      %v688 = vrot.slane %v686, 1
      %v689 = vsel %vm521, %v684, %v688
      %v691 = vshrl.u32 %v471, 16
      %v693 = vshll.u32 %v471, 16
      %v695 = vrot.slane %v693, 1
      %v696 = vor.u32 %v691, %v695
      %v698 = vshll.u32 %v519, 16
      %v700 = vrot.slane %v698, 1
      %v701 = vsel %vm521, %v696, %v700
      %v703 = vshrl.u32 %v472, 16
      %v705 = vshll.u32 %v472, 16
      %v707 = vrot.slane %v705, 1
      %v708 = vor.u32 %v703, %v707
      %v710 = vshll.u32 %v520, 16
      %v712 = vrot.slane %v710, 1
      %v713 = vsel %vm521, %v708, %v712
      %714 = vrot.lane.b32.xlu0 %v533, 4
      %v715 = vpop.permute.xlu0 %714
      %716 = vrot.lane.b32.xlu0 %v545, 4
      %v717 = vpop.permute.xlu0 %716
      %718 = vrot.lane.b32.xlu0 %v557, 4
      %v719 = vpop.permute.xlu0 %718
      %720 = vrot.lane.b32.xlu0 %v569, 4
      %v721 = vpop.permute.xlu0 %720
      %722 = vrot.lane.b32.xlu0 %v581, 4
      %v723 = vpop.permute.xlu0 %722
      %724 = vrot.lane.b32.xlu0 %v593, 4
      %v725 = vpop.permute.xlu0 %724
      %726 = vrot.lane.b32.xlu0 %v605, 4
      %v727 = vpop.permute.xlu0 %726
      %728 = vrot.lane.b32.xlu0 %v617, 4
      %v729 = vpop.permute.xlu0 %728
      %730 = vrot.lane.b32.xlu0 %v629, 4
      %v731 = vpop.permute.xlu0 %730
      %732 = vrot.lane.b32.xlu0 %v641, 4
      %v733 = vpop.permute.xlu0 %732
      %734 = vrot.lane.b32.xlu0 %v653, 4
      %v735 = vpop.permute.xlu0 %734
      %736 = vrot.lane.b32.xlu0 %v665, 4
      %v737 = vpop.permute.xlu0 %736
      %738 = vrot.lane.b32.xlu0 %v677, 4
      %v739 = vpop.permute.xlu0 %738
      %740 = vrot.lane.b32.xlu0 %v689, 4
      %v741 = vpop.permute.xlu0 %740
      %742 = vrot.lane.b32.xlu0 %v701, 4
      %v743 = vpop.permute.xlu0 %742
      %744 = vrot.lane.b32.xlu0 %v713, 4
      %v745 = vpop.permute.xlu0 %744
      %v762 = vunpack.c.l.b16 %v247
      %v763 = vunpack.c.l.b16 %v248
      %v764 = vunpack.c.l.b16 %v249
      %v765 = vunpack.c.l.b16 %v250
      %v766 = vunpack.c.l.b16 %v251
      %v767 = vunpack.c.l.b16 %v252
      %v768 = vunpack.c.l.b16 %v253
      %v769 = vunpack.c.l.b16 %v254
      %v770 = vunpack.c.l.b16 %v255
      %v771 = vunpack.c.l.b16 %v256
      %v772 = vunpack.c.l.b16 %v257
      %v773 = vunpack.c.l.b16 %v258
      %v774 = vunpack.c.l.b16 %v259
      %v775 = vunpack.c.l.b16 %v260
      %v776 = vunpack.c.l.b16 %v261
      %v777 = vunpack.c.l.b16 %v262
      %v778 = vpack.c.b16 %v426, %v762
      %v779 = vpack.c.b16 %v428, %v763
      %v780 = vpack.c.b16 %v430, %v764
      %v781 = vpack.c.b16 %v432, %v765
      %v782 = vpack.c.b16 %v434, %v766
      %v783 = vpack.c.b16 %v436, %v767
      %v784 = vpack.c.b16 %v438, %v768
      %v785 = vpack.c.b16 %v440, %v769
      %v786 = vpack.c.b16 %v442, %v770
      %v787 = vpack.c.b16 %v444, %v771
      %v788 = vpack.c.b16 %v446, %v772
      %v789 = vpack.c.b16 %v448, %v773
      %v790 = vpack.c.b16 %v450, %v774
      %v791 = vpack.c.b16 %v452, %v775
      %v792 = vpack.c.b16 %v454, %v776
      %v793 = vpack.c.b16 %v456, %v777
      %vm794 = vcmask 1046528
      %v795 = vrot.slane %v778, 1
      %v796 = vrot.slane %v505, 1
      %v797 = vsel %vm794, %v795, %v796
      %v798 = vrot.slane %v779, 1
      %v799 = vrot.slane %v506, 1
      %v800 = vsel %vm794, %v798, %v799
      %v801 = vrot.slane %v780, 1
      %v802 = vrot.slane %v507, 1
      %v803 = vsel %vm794, %v801, %v802
      %v804 = vrot.slane %v781, 1
      %v805 = vrot.slane %v508, 1
      %v806 = vsel %vm794, %v804, %v805
      %v807 = vrot.slane %v782, 1
      %v808 = vrot.slane %v509, 1
      %v809 = vsel %vm794, %v807, %v808
      %v810 = vrot.slane %v783, 1
      %v811 = vrot.slane %v510, 1
      %v812 = vsel %vm794, %v810, %v811
      %v813 = vrot.slane %v784, 1
      %v814 = vrot.slane %v511, 1
      %v815 = vsel %vm794, %v813, %v814
      %v816 = vrot.slane %v785, 1
      %v817 = vrot.slane %v512, 1
      %v818 = vsel %vm794, %v816, %v817
      %v819 = vrot.slane %v786, 1
      %v820 = vrot.slane %v513, 1
      %v821 = vsel %vm794, %v819, %v820
      %v822 = vrot.slane %v787, 1
      %v823 = vrot.slane %v514, 1
      %v824 = vsel %vm794, %v822, %v823
      %v825 = vrot.slane %v788, 1
      %v826 = vrot.slane %v515, 1
      %v827 = vsel %vm794, %v825, %v826
      %v828 = vrot.slane %v789, 1
      %v829 = vrot.slane %v516, 1
      %v830 = vsel %vm794, %v828, %v829
      %v831 = vrot.slane %v790, 1
      %v832 = vrot.slane %v517, 1
      %v833 = vsel %vm794, %v831, %v832
      %v834 = vrot.slane %v791, 1
      %v835 = vrot.slane %v518, 1
      %v836 = vsel %vm794, %v834, %v835
      %v837 = vrot.slane %v792, 1
      %v838 = vrot.slane %v519, 1
      %v839 = vsel %vm794, %v837, %v838
      %v840 = vrot.slane %v793, 1
      %v841 = vrot.slane %v520, 1
      %v842 = vsel %vm794, %v840, %v841
      %843 = vrot.lane.b32.xlu0 %v797, 8
      %v844 = vpop.permute.xlu0 %843
      %845 = vrot.lane.b32.xlu0 %v800, 8
      %v846 = vpop.permute.xlu0 %845
      %847 = vrot.lane.b32.xlu0 %v803, 8
      %v848 = vpop.permute.xlu0 %847
      %849 = vrot.lane.b32.xlu0 %v806, 8
      %v850 = vpop.permute.xlu0 %849
      %851 = vrot.lane.b32.xlu0 %v809, 8
      %v852 = vpop.permute.xlu0 %851
      %853 = vrot.lane.b32.xlu0 %v812, 8
      %v854 = vpop.permute.xlu0 %853
      %855 = vrot.lane.b32.xlu0 %v815, 8
      %v856 = vpop.permute.xlu0 %855
      %857 = vrot.lane.b32.xlu0 %v818, 8
      %v858 = vpop.permute.xlu0 %857
      %859 = vrot.lane.b32.xlu0 %v821, 8
      %v860 = vpop.permute.xlu0 %859
      %861 = vrot.lane.b32.xlu0 %v824, 8
      %v862 = vpop.permute.xlu0 %861
      %863 = vrot.lane.b32.xlu0 %v827, 8
      %v864 = vpop.permute.xlu0 %863
      %865 = vrot.lane.b32.xlu0 %v830, 8
      %v866 = vpop.permute.xlu0 %865
      %867 = vrot.lane.b32.xlu0 %v833, 8
      %v868 = vpop.permute.xlu0 %867
      %869 = vrot.lane.b32.xlu0 %v836, 8
      %v870 = vpop.permute.xlu0 %869
      %871 = vrot.lane.b32.xlu0 %v839, 8
      %v872 = vpop.permute.xlu0 %871
      %873 = vrot.lane.b32.xlu0 %v842, 8
      %v874 = vpop.permute.xlu0 %873
      %v907 = vunpack.c.l.b16 %v264
      %v908 = vunpack.c.l.b16 %v265
      %v909 = vunpack.c.l.b16 %v266
      %v910 = vunpack.c.l.b16 %v267
      %v911 = vunpack.c.l.b16 %v268
      %v912 = vunpack.c.l.b16 %v269
      %v913 = vunpack.c.l.b16 %v270
      %v914 = vunpack.c.l.b16 %v271
      %v915 = vunpack.c.l.b16 %v272
      %v916 = vunpack.c.l.b16 %v273
      %v917 = vunpack.c.l.b16 %v274
      %v918 = vunpack.c.l.b16 %v275
      %v919 = vunpack.c.l.b16 %v276
      %v920 = vunpack.c.l.b16 %v277
      %v921 = vunpack.c.l.b16 %v278
      %v922 = vunpack.c.l.b16 %v279
      %v923 = vunpack.c.l.b16 %v280
      %v924 = vunpack.c.l.b16 %v281
      %v925 = vunpack.c.l.b16 %v282
      %v926 = vunpack.c.l.b16 %v283
      %v927 = vunpack.c.l.b16 %v284
      %v928 = vunpack.c.l.b16 %v285
      %v929 = vunpack.c.l.b16 %v286
      %v930 = vunpack.c.l.b16 %v287
      %v931 = vunpack.c.l.b16 %v288
      %v932 = vunpack.c.l.b16 %v289
      %v933 = vunpack.c.l.b16 %v290
      %v934 = vunpack.c.l.b16 %v291
      %v935 = vunpack.c.l.b16 %v292
      %v936 = vunpack.c.l.b16 %v293
      %v937 = vunpack.c.l.b16 %v294
      %v938 = vunpack.c.l.b16 %v295
      %v939 = vpack.c.b16 %v908, %v907
      %v940 = vpack.c.b16 %v910, %v909
      %v941 = vpack.c.b16 %v912, %v911
      %v942 = vpack.c.b16 %v914, %v913
      %v943 = vpack.c.b16 %v916, %v915
      %v944 = vpack.c.b16 %v918, %v917
      %v945 = vpack.c.b16 %v920, %v919
      %v946 = vpack.c.b16 %v922, %v921
      %v947 = vpack.c.b16 %v924, %v923
      %v948 = vpack.c.b16 %v926, %v925
      %v949 = vpack.c.b16 %v928, %v927
      %v950 = vpack.c.b16 %v930, %v929
      %v951 = vpack.c.b16 %v932, %v931
      %v952 = vpack.c.b16 %v934, %v933
      %v953 = vpack.c.b16 %v936, %v935
      %v954 = vpack.c.b16 %v938, %v937
      %955 = vrot.lane.b32.xlu0 %v939, 12
      %v956 = vpop.permute.xlu0 %955
      %957 = vrot.lane.b32.xlu0 %v940, 12
      %v958 = vpop.permute.xlu0 %957
      %959 = vrot.lane.b32.xlu0 %v941, 12
      %v960 = vpop.permute.xlu0 %959
      %961 = vrot.lane.b32.xlu0 %v942, 12
      %v962 = vpop.permute.xlu0 %961
      %963 = vrot.lane.b32.xlu0 %v943, 12
      %v964 = vpop.permute.xlu0 %963
      %965 = vrot.lane.b32.xlu0 %v944, 12
      %v966 = vpop.permute.xlu0 %965
      %967 = vrot.lane.b32.xlu0 %v945, 12
      %v968 = vpop.permute.xlu0 %967
      %969 = vrot.lane.b32.xlu0 %v946, 12
      %v970 = vpop.permute.xlu0 %969
      %971 = vrot.lane.b32.xlu0 %v947, 12
      %v972 = vpop.permute.xlu0 %971
      %973 = vrot.lane.b32.xlu0 %v948, 12
      %v974 = vpop.permute.xlu0 %973
      %975 = vrot.lane.b32.xlu0 %v949, 12
      %v976 = vpop.permute.xlu0 %975
      %977 = vrot.lane.b32.xlu0 %v950, 12
      %v978 = vpop.permute.xlu0 %977
      %979 = vrot.lane.b32.xlu0 %v951, 12
      %v980 = vpop.permute.xlu0 %979
      %981 = vrot.lane.b32.xlu0 %v952, 12
      %v982 = vpop.permute.xlu0 %981
      %983 = vrot.lane.b32.xlu0 %v953, 12
      %v984 = vpop.permute.xlu0 %983
      %985 = vrot.lane.b32.xlu0 %v954, 12
      %v986 = vpop.permute.xlu0 %985
      %v1003 = vunpack.c.l.b16 %v296
      %v1004 = vunpack.c.l.b16 %v297
      %v1005 = vunpack.c.l.b16 %v298
      %v1006 = vunpack.c.l.b16 %v299
      %v1007 = vunpack.c.l.b16 %v300
      %v1008 = vunpack.c.l.b16 %v301
      %v1009 = vunpack.c.l.b16 %v302
      %v1010 = vunpack.c.l.b16 %v303
      %v1011 = vunpack.c.l.b16 %v304
      %v1012 = vunpack.c.l.b16 %v305
      %v1013 = vunpack.c.l.b16 %v306
      %v1014 = vunpack.c.l.b16 %v307
      %v1015 = vunpack.c.l.b16 %v308
      %v1016 = vunpack.c.l.b16 %v309
      %v1017 = vunpack.c.l.b16 %v310
      %v1018 = vunpack.c.l.b16 %v311
      %v1019 = vpack.c.b16 %v1003, %v1003
      %v1020 = vpack.c.b16 %v1004, %v1004
      %v1021 = vpack.c.b16 %v1005, %v1005
      %v1022 = vpack.c.b16 %v1006, %v1006
      %v1023 = vpack.c.b16 %v1007, %v1007
      %v1024 = vpack.c.b16 %v1008, %v1008
      %v1025 = vpack.c.b16 %v1009, %v1009
      %v1026 = vpack.c.b16 %v1010, %v1010
      %v1027 = vpack.c.b16 %v1011, %v1011
      %v1028 = vpack.c.b16 %v1012, %v1012
      %v1029 = vpack.c.b16 %v1013, %v1013
      %v1030 = vpack.c.b16 %v1014, %v1014
      %v1031 = vpack.c.b16 %v1015, %v1015
      %v1032 = vpack.c.b16 %v1016, %v1016
      %v1033 = vpack.c.b16 %v1017, %v1017
      %v1034 = vpack.c.b16 %v1018, %v1018
      %v1036 = vshrl.u32 %v939, 16
      %v1038 = vshll.u32 %v939, 16
      %v1040 = vrot.slane %v1038, 1
      %v1041 = vor.u32 %v1036, %v1040
      %v1043 = vshll.u32 %v1019, 16
      %v1045 = vrot.slane %v1043, 1
      %v1046 = vsel %vm521, %v1041, %v1045
      %v1048 = vshrl.u32 %v940, 16
      %v1050 = vshll.u32 %v940, 16
      %v1052 = vrot.slane %v1050, 1
      %v1053 = vor.u32 %v1048, %v1052
      %v1055 = vshll.u32 %v1020, 16
      %v1057 = vrot.slane %v1055, 1
      %v1058 = vsel %vm521, %v1053, %v1057
      %v1060 = vshrl.u32 %v941, 16
      %v1062 = vshll.u32 %v941, 16
      %v1064 = vrot.slane %v1062, 1
      %v1065 = vor.u32 %v1060, %v1064
      %v1067 = vshll.u32 %v1021, 16
      %v1069 = vrot.slane %v1067, 1
      %v1070 = vsel %vm521, %v1065, %v1069
      %v1072 = vshrl.u32 %v942, 16
      %v1074 = vshll.u32 %v942, 16
      %v1076 = vrot.slane %v1074, 1
      %v1077 = vor.u32 %v1072, %v1076
      %v1079 = vshll.u32 %v1022, 16
      %v1081 = vrot.slane %v1079, 1
      %v1082 = vsel %vm521, %v1077, %v1081
      %v1084 = vshrl.u32 %v943, 16
      %v1086 = vshll.u32 %v943, 16
      %v1088 = vrot.slane %v1086, 1
      %v1089 = vor.u32 %v1084, %v1088
      %v1091 = vshll.u32 %v1023, 16
      %v1093 = vrot.slane %v1091, 1
      %v1094 = vsel %vm521, %v1089, %v1093
      %v1096 = vshrl.u32 %v944, 16
      %v1098 = vshll.u32 %v944, 16
      %v1100 = vrot.slane %v1098, 1
      %v1101 = vor.u32 %v1096, %v1100
      %v1103 = vshll.u32 %v1024, 16
      %v1105 = vrot.slane %v1103, 1
      %v1106 = vsel %vm521, %v1101, %v1105
      %v1108 = vshrl.u32 %v945, 16
      %v1110 = vshll.u32 %v945, 16
      %v1112 = vrot.slane %v1110, 1
      %v1113 = vor.u32 %v1108, %v1112
      %v1115 = vshll.u32 %v1025, 16
      %v1117 = vrot.slane %v1115, 1
      %v1118 = vsel %vm521, %v1113, %v1117
      %v1120 = vshrl.u32 %v946, 16
      %v1122 = vshll.u32 %v946, 16
      %v1124 = vrot.slane %v1122, 1
      %v1125 = vor.u32 %v1120, %v1124
      %v1127 = vshll.u32 %v1026, 16
      %v1129 = vrot.slane %v1127, 1
      %v1130 = vsel %vm521, %v1125, %v1129
      %v1132 = vshrl.u32 %v947, 16
      %v1134 = vshll.u32 %v947, 16
      %v1136 = vrot.slane %v1134, 1
      %v1137 = vor.u32 %v1132, %v1136
      %v1139 = vshll.u32 %v1027, 16
      %v1141 = vrot.slane %v1139, 1
      %v1142 = vsel %vm521, %v1137, %v1141
      %v1144 = vshrl.u32 %v948, 16
      %v1146 = vshll.u32 %v948, 16
      %v1148 = vrot.slane %v1146, 1
      %v1149 = vor.u32 %v1144, %v1148
      %v1151 = vshll.u32 %v1028, 16
      %v1153 = vrot.slane %v1151, 1
      %v1154 = vsel %vm521, %v1149, %v1153
      %v1156 = vshrl.u32 %v949, 16
      %v1158 = vshll.u32 %v949, 16
      %v1160 = vrot.slane %v1158, 1
      %v1161 = vor.u32 %v1156, %v1160
      %v1163 = vshll.u32 %v1029, 16
      %v1165 = vrot.slane %v1163, 1
      %v1166 = vsel %vm521, %v1161, %v1165
      %v1168 = vshrl.u32 %v950, 16
      %v1170 = vshll.u32 %v950, 16
      %v1172 = vrot.slane %v1170, 1
      %v1173 = vor.u32 %v1168, %v1172
      %v1175 = vshll.u32 %v1030, 16
      %v1177 = vrot.slane %v1175, 1
      %v1178 = vsel %vm521, %v1173, %v1177
      %v1180 = vshrl.u32 %v951, 16
      %v1182 = vshll.u32 %v951, 16
      %v1184 = vrot.slane %v1182, 1
      %v1185 = vor.u32 %v1180, %v1184
      %v1187 = vshll.u32 %v1031, 16
      %v1189 = vrot.slane %v1187, 1
      %v1190 = vsel %vm521, %v1185, %v1189
      %v1192 = vshrl.u32 %v952, 16
      %v1194 = vshll.u32 %v952, 16
      %v1196 = vrot.slane %v1194, 1
      %v1197 = vor.u32 %v1192, %v1196
      %v1199 = vshll.u32 %v1032, 16
      %v1201 = vrot.slane %v1199, 1
      %v1202 = vsel %vm521, %v1197, %v1201
      %v1204 = vshrl.u32 %v953, 16
      %v1206 = vshll.u32 %v953, 16
      %v1208 = vrot.slane %v1206, 1
      %v1209 = vor.u32 %v1204, %v1208
      %v1211 = vshll.u32 %v1033, 16
      %v1213 = vrot.slane %v1211, 1
      %v1214 = vsel %vm521, %v1209, %v1213
      %v1216 = vshrl.u32 %v954, 16
      %v1218 = vshll.u32 %v954, 16
      %v1220 = vrot.slane %v1218, 1
      %v1221 = vor.u32 %v1216, %v1220
      %v1223 = vshll.u32 %v1034, 16
      %v1225 = vrot.slane %v1223, 1
      %v1226 = vsel %vm521, %v1221, %v1225
      %1227 = vrot.lane.b32.xlu0 %v1046, 16
      %v1228 = vpop.permute.xlu0 %1227
      %1229 = vrot.lane.b32.xlu0 %v1058, 16
      %v1230 = vpop.permute.xlu0 %1229
      %1231 = vrot.lane.b32.xlu0 %v1070, 16
      %v1232 = vpop.permute.xlu0 %1231
      %1233 = vrot.lane.b32.xlu0 %v1082, 16
      %v1234 = vpop.permute.xlu0 %1233
      %1235 = vrot.lane.b32.xlu0 %v1094, 16
      %v1236 = vpop.permute.xlu0 %1235
      %1237 = vrot.lane.b32.xlu0 %v1106, 16
      %v1238 = vpop.permute.xlu0 %1237
      %1239 = vrot.lane.b32.xlu0 %v1118, 16
      %v1240 = vpop.permute.xlu0 %1239
      %1241 = vrot.lane.b32.xlu0 %v1130, 16
      %v1242 = vpop.permute.xlu0 %1241
      %1243 = vrot.lane.b32.xlu0 %v1142, 16
      %v1244 = vpop.permute.xlu0 %1243
      %1245 = vrot.lane.b32.xlu0 %v1154, 16
      %v1246 = vpop.permute.xlu0 %1245
      %1247 = vrot.lane.b32.xlu0 %v1166, 16
      %v1248 = vpop.permute.xlu0 %1247
      %1249 = vrot.lane.b32.xlu0 %v1178, 16
      %v1250 = vpop.permute.xlu0 %1249
      %1251 = vrot.lane.b32.xlu0 %v1190, 16
      %v1252 = vpop.permute.xlu0 %1251
      %1253 = vrot.lane.b32.xlu0 %v1202, 16
      %v1254 = vpop.permute.xlu0 %1253
      %1255 = vrot.lane.b32.xlu0 %v1214, 16
      %v1256 = vpop.permute.xlu0 %1255
      %1257 = vrot.lane.b32.xlu0 %v1226, 16
      %v1258 = vpop.permute.xlu0 %1257
      %v1275 = vunpack.c.l.b16 %v312
      %v1276 = vunpack.c.l.b16 %v313
      %v1277 = vunpack.c.l.b16 %v314
      %v1278 = vunpack.c.l.b16 %v315
      %v1279 = vunpack.c.l.b16 %v316
      %v1280 = vunpack.c.l.b16 %v317
      %v1281 = vunpack.c.l.b16 %v318
      %v1282 = vunpack.c.l.b16 %v319
      %v1283 = vunpack.c.l.b16 %v320
      %v1284 = vunpack.c.l.b16 %v321
      %v1285 = vunpack.c.l.b16 %v322
      %v1286 = vunpack.c.l.b16 %v323
      %v1287 = vunpack.c.l.b16 %v324
      %v1288 = vunpack.c.l.b16 %v325
      %v1289 = vunpack.c.l.b16 %v326
      %v1290 = vunpack.c.l.b16 %v327
      %v1291 = vpack.c.b16 %v908, %v1275
      %v1292 = vpack.c.b16 %v910, %v1276
      %v1293 = vpack.c.b16 %v912, %v1277
      %v1294 = vpack.c.b16 %v914, %v1278
      %v1295 = vpack.c.b16 %v916, %v1279
      %v1296 = vpack.c.b16 %v918, %v1280
      %v1297 = vpack.c.b16 %v920, %v1281
      %v1298 = vpack.c.b16 %v922, %v1282
      %v1299 = vpack.c.b16 %v924, %v1283
      %v1300 = vpack.c.b16 %v926, %v1284
      %v1301 = vpack.c.b16 %v928, %v1285
      %v1302 = vpack.c.b16 %v930, %v1286
      %v1303 = vpack.c.b16 %v932, %v1287
      %v1304 = vpack.c.b16 %v934, %v1288
      %v1305 = vpack.c.b16 %v936, %v1289
      %v1306 = vpack.c.b16 %v938, %v1290
      %v1307 = vrot.slane %v1291, 1
      %v1308 = vrot.slane %v1019, 1
      %v1309 = vsel %vm794, %v1307, %v1308
      %v1310 = vrot.slane %v1292, 1
      %v1311 = vrot.slane %v1020, 1
      %v1312 = vsel %vm794, %v1310, %v1311
      %v1313 = vrot.slane %v1293, 1
      %v1314 = vrot.slane %v1021, 1
      %v1315 = vsel %vm794, %v1313, %v1314
      %v1316 = vrot.slane %v1294, 1
      %v1317 = vrot.slane %v1022, 1
      %v1318 = vsel %vm794, %v1316, %v1317
      %v1319 = vrot.slane %v1295, 1
      %v1320 = vrot.slane %v1023, 1
      %v1321 = vsel %vm794, %v1319, %v1320
      %v1322 = vrot.slane %v1296, 1
      %v1323 = vrot.slane %v1024, 1
      %v1324 = vsel %vm794, %v1322, %v1323
      %v1325 = vrot.slane %v1297, 1
      %v1326 = vrot.slane %v1025, 1
      %v1327 = vsel %vm794, %v1325, %v1326
      %v1328 = vrot.slane %v1298, 1
      %v1329 = vrot.slane %v1026, 1
      %v1330 = vsel %vm794, %v1328, %v1329
      %v1331 = vrot.slane %v1299, 1
      %v1332 = vrot.slane %v1027, 1
      %v1333 = vsel %vm794, %v1331, %v1332
      %v1334 = vrot.slane %v1300, 1
      %v1335 = vrot.slane %v1028, 1
      %v1336 = vsel %vm794, %v1334, %v1335
      %v1337 = vrot.slane %v1301, 1
      %v1338 = vrot.slane %v1029, 1
      %v1339 = vsel %vm794, %v1337, %v1338
      %v1340 = vrot.slane %v1302, 1
      %v1341 = vrot.slane %v1030, 1
      %v1342 = vsel %vm794, %v1340, %v1341
      %v1343 = vrot.slane %v1303, 1
      %v1344 = vrot.slane %v1031, 1
      %v1345 = vsel %vm794, %v1343, %v1344
      %v1346 = vrot.slane %v1304, 1
      %v1347 = vrot.slane %v1032, 1
      %v1348 = vsel %vm794, %v1346, %v1347
      %v1349 = vrot.slane %v1305, 1
      %v1350 = vrot.slane %v1033, 1
      %v1351 = vsel %vm794, %v1349, %v1350
      %v1352 = vrot.slane %v1306, 1
      %v1353 = vrot.slane %v1034, 1
      %v1354 = vsel %vm794, %v1352, %v1353
      %1355 = vrot.lane.b32.xlu0 %v1309, 20
      %v1356 = vpop.permute.xlu0 %1355
      %1357 = vrot.lane.b32.xlu0 %v1312, 20
      %v1358 = vpop.permute.xlu0 %1357
      %1359 = vrot.lane.b32.xlu0 %v1315, 20
      %v1360 = vpop.permute.xlu0 %1359
      %1361 = vrot.lane.b32.xlu0 %v1318, 20
      %v1362 = vpop.permute.xlu0 %1361
      %1363 = vrot.lane.b32.xlu0 %v1321, 20
      %v1364 = vpop.permute.xlu0 %1363
      %1365 = vrot.lane.b32.xlu0 %v1324, 20
      %v1366 = vpop.permute.xlu0 %1365
      %1367 = vrot.lane.b32.xlu0 %v1327, 20
      %v1368 = vpop.permute.xlu0 %1367
      %1369 = vrot.lane.b32.xlu0 %v1330, 20
      %v1370 = vpop.permute.xlu0 %1369
      %1371 = vrot.lane.b32.xlu0 %v1333, 20
      %v1372 = vpop.permute.xlu0 %1371
      %1373 = vrot.lane.b32.xlu0 %v1336, 20
      %v1374 = vpop.permute.xlu0 %1373
      %1375 = vrot.lane.b32.xlu0 %v1339, 20
      %v1376 = vpop.permute.xlu0 %1375
      %1377 = vrot.lane.b32.xlu0 %v1342, 20
      %v1378 = vpop.permute.xlu0 %1377
      %1379 = vrot.lane.b32.xlu0 %v1345, 20
      %v1380 = vpop.permute.xlu0 %1379
      %1381 = vrot.lane.b32.xlu0 %v1348, 20
      %v1382 = vpop.permute.xlu0 %1381
      %1383 = vrot.lane.b32.xlu0 %v1351, 20
      %v1384 = vpop.permute.xlu0 %1383
      %1385 = vrot.lane.b32.xlu0 %v1354, 20
      %v1386 = vpop.permute.xlu0 %1385
      %v1419 = vunpack.c.l.b16 %v329
      %v1420 = vunpack.c.l.b16 %v330
      %v1421 = vunpack.c.l.b16 %v331
      %v1422 = vunpack.c.l.b16 %v332
      %v1423 = vunpack.c.l.b16 %v333
      %v1424 = vunpack.c.l.b16 %v334
      %v1425 = vunpack.c.l.b16 %v335
      %v1426 = vunpack.c.l.b16 %v336
      %v1427 = vunpack.c.l.b16 %v337
      %v1428 = vunpack.c.l.b16 %v338
      %v1429 = vunpack.c.l.b16 %v339
      %v1430 = vunpack.c.l.b16 %v340
      %v1431 = vunpack.c.l.b16 %v341
      %v1432 = vunpack.c.l.b16 %v342
      %v1433 = vunpack.c.l.b16 %v343
      %v1434 = vunpack.c.l.b16 %v344
      %v1435 = vunpack.c.l.b16 %v345
      %v1436 = vunpack.c.l.b16 %v346
      %v1437 = vunpack.c.l.b16 %v347
      %v1438 = vunpack.c.l.b16 %v348
      %v1439 = vunpack.c.l.b16 %v349
      %v1440 = vunpack.c.l.b16 %v350
      %v1441 = vunpack.c.l.b16 %v351
      %v1442 = vunpack.c.l.b16 %v352
      %v1443 = vunpack.c.l.b16 %v353
      %v1444 = vunpack.c.l.b16 %v354
      %v1445 = vunpack.c.l.b16 %v355
      %v1446 = vunpack.c.l.b16 %v356
      %v1447 = vunpack.c.l.b16 %v357
      %v1448 = vunpack.c.l.b16 %v358
      %v1449 = vunpack.c.l.b16 %v359
      %v1450 = vunpack.c.l.b16 %v360
      %v1451 = vpack.c.b16 %v1420, %v1419
      %v1452 = vpack.c.b16 %v1422, %v1421
      %v1453 = vpack.c.b16 %v1424, %v1423
      %v1454 = vpack.c.b16 %v1426, %v1425
      %v1455 = vpack.c.b16 %v1428, %v1427
      %v1456 = vpack.c.b16 %v1430, %v1429
      %v1457 = vpack.c.b16 %v1432, %v1431
      %v1458 = vpack.c.b16 %v1434, %v1433
      %v1459 = vpack.c.b16 %v1436, %v1435
      %v1460 = vpack.c.b16 %v1438, %v1437
      %v1461 = vpack.c.b16 %v1440, %v1439
      %v1462 = vpack.c.b16 %v1442, %v1441
      %v1463 = vpack.c.b16 %v1444, %v1443
      %v1464 = vpack.c.b16 %v1446, %v1445
      %v1465 = vpack.c.b16 %v1448, %v1447
      %v1466 = vpack.c.b16 %v1450, %v1449
      %1467 = vrot.lane.b32.xlu0 %v1451, 24
      %v1468 = vpop.permute.xlu0 %1467
      %1469 = vrot.lane.b32.xlu0 %v1452, 24
      %v1470 = vpop.permute.xlu0 %1469
      %1471 = vrot.lane.b32.xlu0 %v1453, 24
      %v1472 = vpop.permute.xlu0 %1471
      %1473 = vrot.lane.b32.xlu0 %v1454, 24
      %v1474 = vpop.permute.xlu0 %1473
      %1475 = vrot.lane.b32.xlu0 %v1455, 24
      %v1476 = vpop.permute.xlu0 %1475
      %1477 = vrot.lane.b32.xlu0 %v1456, 24
      %v1478 = vpop.permute.xlu0 %1477
      %1479 = vrot.lane.b32.xlu0 %v1457, 24
      %v1480 = vpop.permute.xlu0 %1479
      %1481 = vrot.lane.b32.xlu0 %v1458, 24
      %v1482 = vpop.permute.xlu0 %1481
      %1483 = vrot.lane.b32.xlu0 %v1459, 24
      %v1484 = vpop.permute.xlu0 %1483
      %1485 = vrot.lane.b32.xlu0 %v1460, 24
      %v1486 = vpop.permute.xlu0 %1485
      %1487 = vrot.lane.b32.xlu0 %v1461, 24
      %v1488 = vpop.permute.xlu0 %1487
      %1489 = vrot.lane.b32.xlu0 %v1462, 24
      %v1490 = vpop.permute.xlu0 %1489
      %1491 = vrot.lane.b32.xlu0 %v1463, 24
      %v1492 = vpop.permute.xlu0 %1491
      %1493 = vrot.lane.b32.xlu0 %v1464, 24
      %v1494 = vpop.permute.xlu0 %1493
      %1495 = vrot.lane.b32.xlu0 %v1465, 24
      %v1496 = vpop.permute.xlu0 %1495
      %1497 = vrot.lane.b32.xlu0 %v1466, 24
      %v1498 = vpop.permute.xlu0 %1497
      %v1515 = vunpack.c.l.b16 %v361
      %v1516 = vunpack.c.l.b16 %v362
      %v1517 = vunpack.c.l.b16 %v363
      %v1518 = vunpack.c.l.b16 %v364
      %v1519 = vunpack.c.l.b16 %v365
      %v1520 = vunpack.c.l.b16 %v366
      %v1521 = vunpack.c.l.b16 %v367
      %v1522 = vunpack.c.l.b16 %v368
      %v1523 = vunpack.c.l.b16 %v369
      %v1524 = vunpack.c.l.b16 %v370
      %v1525 = vunpack.c.l.b16 %v371
      %v1526 = vunpack.c.l.b16 %v372
      %v1527 = vunpack.c.l.b16 %v373
      %v1528 = vunpack.c.l.b16 %v374
      %v1529 = vunpack.c.l.b16 %v375
      %v1530 = vunpack.c.l.b16 %v376
      %v1531 = vpack.c.b16 %v1515, %v1515
      %v1532 = vpack.c.b16 %v1516, %v1516
      %v1533 = vpack.c.b16 %v1517, %v1517
      %v1534 = vpack.c.b16 %v1518, %v1518
      %v1535 = vpack.c.b16 %v1519, %v1519
      %v1536 = vpack.c.b16 %v1520, %v1520
      %v1537 = vpack.c.b16 %v1521, %v1521
      %v1538 = vpack.c.b16 %v1522, %v1522
      %v1539 = vpack.c.b16 %v1523, %v1523
      %v1540 = vpack.c.b16 %v1524, %v1524
      %v1541 = vpack.c.b16 %v1525, %v1525
      %v1542 = vpack.c.b16 %v1526, %v1526
      %v1543 = vpack.c.b16 %v1527, %v1527
      %v1544 = vpack.c.b16 %v1528, %v1528
      %v1545 = vpack.c.b16 %v1529, %v1529
      %v1546 = vpack.c.b16 %v1530, %v1530
      %v1548 = vshrl.u32 %v1451, 16
      %v1550 = vshll.u32 %v1451, 16
      %v1552 = vrot.slane %v1550, 1
      %v1553 = vor.u32 %v1548, %v1552
      %v1555 = vshll.u32 %v1531, 16
      %v1557 = vrot.slane %v1555, 1
      %v1558 = vsel %vm521, %v1553, %v1557
      %v1560 = vshrl.u32 %v1452, 16
      %v1562 = vshll.u32 %v1452, 16
      %v1564 = vrot.slane %v1562, 1
      %v1565 = vor.u32 %v1560, %v1564
      %v1567 = vshll.u32 %v1532, 16
      %v1569 = vrot.slane %v1567, 1
      %v1570 = vsel %vm521, %v1565, %v1569
      %v1572 = vshrl.u32 %v1453, 16
      %v1574 = vshll.u32 %v1453, 16
      %v1576 = vrot.slane %v1574, 1
      %v1577 = vor.u32 %v1572, %v1576
      %v1579 = vshll.u32 %v1533, 16
      %v1581 = vrot.slane %v1579, 1
      %v1582 = vsel %vm521, %v1577, %v1581
      %v1584 = vshrl.u32 %v1454, 16
      %v1586 = vshll.u32 %v1454, 16
      %v1588 = vrot.slane %v1586, 1
      %v1589 = vor.u32 %v1584, %v1588
      %v1591 = vshll.u32 %v1534, 16
      %v1593 = vrot.slane %v1591, 1
      %v1594 = vsel %vm521, %v1589, %v1593
      %v1596 = vshrl.u32 %v1455, 16
      %v1598 = vshll.u32 %v1455, 16
      %v1600 = vrot.slane %v1598, 1
      %v1601 = vor.u32 %v1596, %v1600
      %v1603 = vshll.u32 %v1535, 16
      %v1605 = vrot.slane %v1603, 1
      %v1606 = vsel %vm521, %v1601, %v1605
      %v1608 = vshrl.u32 %v1456, 16
      %v1610 = vshll.u32 %v1456, 16
      %v1612 = vrot.slane %v1610, 1
      %v1613 = vor.u32 %v1608, %v1612
      %v1615 = vshll.u32 %v1536, 16
      %v1617 = vrot.slane %v1615, 1
      %v1618 = vsel %vm521, %v1613, %v1617
      %v1620 = vshrl.u32 %v1457, 16
      %v1622 = vshll.u32 %v1457, 16
      %v1624 = vrot.slane %v1622, 1
      %v1625 = vor.u32 %v1620, %v1624
      %v1627 = vshll.u32 %v1537, 16
      %v1629 = vrot.slane %v1627, 1
      %v1630 = vsel %vm521, %v1625, %v1629
      %v1632 = vshrl.u32 %v1458, 16
      %v1634 = vshll.u32 %v1458, 16
      %v1636 = vrot.slane %v1634, 1
      %v1637 = vor.u32 %v1632, %v1636
      %v1639 = vshll.u32 %v1538, 16
      %v1641 = vrot.slane %v1639, 1
      %v1642 = vsel %vm521, %v1637, %v1641
      %v1644 = vshrl.u32 %v1459, 16
      %v1646 = vshll.u32 %v1459, 16
      %v1648 = vrot.slane %v1646, 1
      %v1649 = vor.u32 %v1644, %v1648
      %v1651 = vshll.u32 %v1539, 16
      %v1653 = vrot.slane %v1651, 1
      %v1654 = vsel %vm521, %v1649, %v1653
      %v1656 = vshrl.u32 %v1460, 16
      %v1658 = vshll.u32 %v1460, 16
      %v1660 = vrot.slane %v1658, 1
      %v1661 = vor.u32 %v1656, %v1660
      %v1663 = vshll.u32 %v1540, 16
      %v1665 = vrot.slane %v1663, 1
      %v1666 = vsel %vm521, %v1661, %v1665
      %v1668 = vshrl.u32 %v1461, 16
      %v1670 = vshll.u32 %v1461, 16
      %v1672 = vrot.slane %v1670, 1
      %v1673 = vor.u32 %v1668, %v1672
      %v1675 = vshll.u32 %v1541, 16
      %v1677 = vrot.slane %v1675, 1
      %v1678 = vsel %vm521, %v1673, %v1677
      %v1680 = vshrl.u32 %v1462, 16
      %v1682 = vshll.u32 %v1462, 16
      %v1684 = vrot.slane %v1682, 1
      %v1685 = vor.u32 %v1680, %v1684
      %v1687 = vshll.u32 %v1542, 16
      %v1689 = vrot.slane %v1687, 1
      %v1690 = vsel %vm521, %v1685, %v1689
      %v1692 = vshrl.u32 %v1463, 16
      %v1694 = vshll.u32 %v1463, 16
      %v1696 = vrot.slane %v1694, 1
      %v1697 = vor.u32 %v1692, %v1696
      %v1699 = vshll.u32 %v1543, 16
      %v1701 = vrot.slane %v1699, 1
      %v1702 = vsel %vm521, %v1697, %v1701
      %v1704 = vshrl.u32 %v1464, 16
      %v1706 = vshll.u32 %v1464, 16
      %v1708 = vrot.slane %v1706, 1
      %v1709 = vor.u32 %v1704, %v1708
      %v1711 = vshll.u32 %v1544, 16
      %v1713 = vrot.slane %v1711, 1
      %v1714 = vsel %vm521, %v1709, %v1713
      %v1716 = vshrl.u32 %v1465, 16
      %v1718 = vshll.u32 %v1465, 16
      %v1720 = vrot.slane %v1718, 1
      %v1721 = vor.u32 %v1716, %v1720
      %v1723 = vshll.u32 %v1545, 16
      %v1725 = vrot.slane %v1723, 1
      %v1726 = vsel %vm521, %v1721, %v1725
      %v1728 = vshrl.u32 %v1466, 16
      %v1730 = vshll.u32 %v1466, 16
      %v1732 = vrot.slane %v1730, 1
      %v1733 = vor.u32 %v1728, %v1732
      %v1735 = vshll.u32 %v1546, 16
      %v1737 = vrot.slane %v1735, 1
      %v1738 = vsel %vm521, %v1733, %v1737
      %1739 = vrot.lane.b32.xlu0 %v1558, 28
      %v1740 = vpop.permute.xlu0 %1739
      %1741 = vrot.lane.b32.xlu0 %v1570, 28
      %v1742 = vpop.permute.xlu0 %1741
      %1743 = vrot.lane.b32.xlu0 %v1582, 28
      %v1744 = vpop.permute.xlu0 %1743
      %1745 = vrot.lane.b32.xlu0 %v1594, 28
      %v1746 = vpop.permute.xlu0 %1745
      %1747 = vrot.lane.b32.xlu0 %v1606, 28
      %v1748 = vpop.permute.xlu0 %1747
      %1749 = vrot.lane.b32.xlu0 %v1618, 28
      %v1750 = vpop.permute.xlu0 %1749
      %1751 = vrot.lane.b32.xlu0 %v1630, 28
      %v1752 = vpop.permute.xlu0 %1751
      %1753 = vrot.lane.b32.xlu0 %v1642, 28
      %v1754 = vpop.permute.xlu0 %1753
      %1755 = vrot.lane.b32.xlu0 %v1654, 28
      %v1756 = vpop.permute.xlu0 %1755
      %1757 = vrot.lane.b32.xlu0 %v1666, 28
      %v1758 = vpop.permute.xlu0 %1757
      %1759 = vrot.lane.b32.xlu0 %v1678, 28
      %v1760 = vpop.permute.xlu0 %1759
      %1761 = vrot.lane.b32.xlu0 %v1690, 28
      %v1762 = vpop.permute.xlu0 %1761
      %1763 = vrot.lane.b32.xlu0 %v1702, 28
      %v1764 = vpop.permute.xlu0 %1763
      %1765 = vrot.lane.b32.xlu0 %v1714, 28
      %v1766 = vpop.permute.xlu0 %1765
      %1767 = vrot.lane.b32.xlu0 %v1726, 28
      %v1768 = vpop.permute.xlu0 %1767
      %1769 = vrot.lane.b32.xlu0 %v1738, 28
      %v1770 = vpop.permute.xlu0 %1769
      %v1787 = vunpack.c.l.b16 %v377
      %v1788 = vunpack.c.l.b16 %v378
      %v1789 = vunpack.c.l.b16 %v379
      %v1790 = vunpack.c.l.b16 %v380
      %v1791 = vunpack.c.l.b16 %v381
      %v1792 = vunpack.c.l.b16 %v382
      %v1793 = vunpack.c.l.b16 %v383
      %v1794 = vunpack.c.l.b16 %v384
      %v1795 = vunpack.c.l.b16 %v385
      %v1796 = vunpack.c.l.b16 %v386
      %v1797 = vunpack.c.l.b16 %v387
      %v1798 = vunpack.c.l.b16 %v388
      %v1799 = vunpack.c.l.b16 %v389
      %v1800 = vunpack.c.l.b16 %v390
      %v1801 = vunpack.c.l.b16 %v391
      %v1802 = vunpack.c.l.b16 %v392
      %v1803 = vpack.c.b16 %v1420, %v1787
      %v1804 = vpack.c.b16 %v1422, %v1788
      %v1805 = vpack.c.b16 %v1424, %v1789
      %v1806 = vpack.c.b16 %v1426, %v1790
      %v1807 = vpack.c.b16 %v1428, %v1791
      %v1808 = vpack.c.b16 %v1430, %v1792
      %v1809 = vpack.c.b16 %v1432, %v1793
      %v1810 = vpack.c.b16 %v1434, %v1794
      %v1811 = vpack.c.b16 %v1436, %v1795
      %v1812 = vpack.c.b16 %v1438, %v1796
      %v1813 = vpack.c.b16 %v1440, %v1797
      %v1814 = vpack.c.b16 %v1442, %v1798
      %v1815 = vpack.c.b16 %v1444, %v1799
      %v1816 = vpack.c.b16 %v1446, %v1800
      %v1817 = vpack.c.b16 %v1448, %v1801
      %v1818 = vpack.c.b16 %v1450, %v1802
      %v1819 = vrot.slane %v1803, 1
      %v1820 = vrot.slane %v1531, 1
      %v1821 = vsel %vm794, %v1819, %v1820
      %v1822 = vrot.slane %v1804, 1
      %v1823 = vrot.slane %v1532, 1
      %v1824 = vsel %vm794, %v1822, %v1823
      %v1825 = vrot.slane %v1805, 1
      %v1826 = vrot.slane %v1533, 1
      %v1827 = vsel %vm794, %v1825, %v1826
      %v1828 = vrot.slane %v1806, 1
      %v1829 = vrot.slane %v1534, 1
      %v1830 = vsel %vm794, %v1828, %v1829
      %v1831 = vrot.slane %v1807, 1
      %v1832 = vrot.slane %v1535, 1
      %v1833 = vsel %vm794, %v1831, %v1832
      %v1834 = vrot.slane %v1808, 1
      %v1835 = vrot.slane %v1536, 1
      %v1836 = vsel %vm794, %v1834, %v1835
      %v1837 = vrot.slane %v1809, 1
      %v1838 = vrot.slane %v1537, 1
      %v1839 = vsel %vm794, %v1837, %v1838
      %v1840 = vrot.slane %v1810, 1
      %v1841 = vrot.slane %v1538, 1
      %v1842 = vsel %vm794, %v1840, %v1841
      %v1843 = vrot.slane %v1811, 1
      %v1844 = vrot.slane %v1539, 1
      %v1845 = vsel %vm794, %v1843, %v1844
      %v1846 = vrot.slane %v1812, 1
      %v1847 = vrot.slane %v1540, 1
      %v1848 = vsel %vm794, %v1846, %v1847
      %v1849 = vrot.slane %v1813, 1
      %v1850 = vrot.slane %v1541, 1
      %v1851 = vsel %vm794, %v1849, %v1850
      %v1852 = vrot.slane %v1814, 1
      %v1853 = vrot.slane %v1542, 1
      %v1854 = vsel %vm794, %v1852, %v1853
      %v1855 = vrot.slane %v1815, 1
      %v1856 = vrot.slane %v1543, 1
      %v1857 = vsel %vm794, %v1855, %v1856
      %v1858 = vrot.slane %v1816, 1
      %v1859 = vrot.slane %v1544, 1
      %v1860 = vsel %vm794, %v1858, %v1859
      %v1861 = vrot.slane %v1817, 1
      %v1862 = vrot.slane %v1545, 1
      %v1863 = vsel %vm794, %v1861, %v1862
      %v1864 = vrot.slane %v1818, 1
      %v1865 = vrot.slane %v1546, 1
      %v1866 = vsel %vm794, %v1864, %v1865
      %1867 = vrot.lane.b32.xlu0 %v1821, 32
      %v1868 = vpop.permute.xlu0 %1867
      %1869 = vrot.lane.b32.xlu0 %v1824, 32
      %v1870 = vpop.permute.xlu0 %1869
      %1871 = vrot.lane.b32.xlu0 %v1827, 32
      %v1872 = vpop.permute.xlu0 %1871
      %1873 = vrot.lane.b32.xlu0 %v1830, 32
      %v1874 = vpop.permute.xlu0 %1873
      %1875 = vrot.lane.b32.xlu0 %v1833, 32
      %v1876 = vpop.permute.xlu0 %1875
      %1877 = vrot.lane.b32.xlu0 %v1836, 32
      %v1878 = vpop.permute.xlu0 %1877
      %1879 = vrot.lane.b32.xlu0 %v1839, 32
      %v1880 = vpop.permute.xlu0 %1879
      %1881 = vrot.lane.b32.xlu0 %v1842, 32
      %v1882 = vpop.permute.xlu0 %1881
      %1883 = vrot.lane.b32.xlu0 %v1845, 32
      %v1884 = vpop.permute.xlu0 %1883
      %1885 = vrot.lane.b32.xlu0 %v1848, 32
      %v1886 = vpop.permute.xlu0 %1885
      %1887 = vrot.lane.b32.xlu0 %v1851, 32
      %v1888 = vpop.permute.xlu0 %1887
      %1889 = vrot.lane.b32.xlu0 %v1854, 32
      %v1890 = vpop.permute.xlu0 %1889
      %1891 = vrot.lane.b32.xlu0 %v1857, 32
      %v1892 = vpop.permute.xlu0 %1891
      %1893 = vrot.lane.b32.xlu0 %v1860, 32
      %v1894 = vpop.permute.xlu0 %1893
      %1895 = vrot.lane.b32.xlu0 %v1863, 32
      %v1896 = vpop.permute.xlu0 %1895
      %1897 = vrot.lane.b32.xlu0 %v1866, 32
      %v1898 = vpop.permute.xlu0 %1897
      %vm1899 = vcmask 31744
      %v1901 = vsel %vm1899, %v457, %v715
      %v1903 = vsel %vm1899, %v458, %v717
      %v1905 = vsel %vm1899, %v459, %v719
      %v1907 = vsel %vm1899, %v460, %v721
      %v1909 = vsel %vm1899, %v461, %v723
      %v1911 = vsel %vm1899, %v462, %v725
      %v1913 = vsel %vm1899, %v463, %v727
      %v1915 = vsel %vm1899, %v464, %v729
      %v1917 = vsel %vm1899, %v465, %v731
      %v1919 = vsel %vm1899, %v466, %v733
      %v1921 = vsel %vm1899, %v467, %v735
      %v1923 = vsel %vm1899, %v468, %v737
      %v1925 = vsel %vm1899, %v469, %v739
      %v1927 = vsel %vm1899, %v470, %v741
      %v1929 = vsel %vm1899, %v471, %v743
      %v1931 = vsel %vm1899, %v472, %v745
      %vm1932 = vcmask 64512
      %v1934 = vsel %vm1932, %v1901, %v844
      %v1936 = vsel %vm1932, %v1903, %v846
      %v1938 = vsel %vm1932, %v1905, %v848
      %v1940 = vsel %vm1932, %v1907, %v850
      %v1942 = vsel %vm1932, %v1909, %v852
      %v1944 = vsel %vm1932, %v1911, %v854
      %v1946 = vsel %vm1932, %v1913, %v856
      %v1948 = vsel %vm1932, %v1915, %v858
      %v1950 = vsel %vm1932, %v1917, %v860
      %v1952 = vsel %vm1932, %v1919, %v862
      %v1954 = vsel %vm1932, %v1921, %v864
      %v1956 = vsel %vm1932, %v1923, %v866
      %v1958 = vsel %vm1932, %v1925, %v868
      %v1960 = vsel %vm1932, %v1927, %v870
      %v1962 = vsel %vm1932, %v1929, %v872
      %v1964 = vsel %vm1932, %v1931, %v874
      %vm1965 = vcmask 97280
      %v1967 = vsel %vm1965, %v1934, %v956
      %v1969 = vsel %vm1965, %v1936, %v958
      %v1971 = vsel %vm1965, %v1938, %v960
      %v1973 = vsel %vm1965, %v1940, %v962
      %v1975 = vsel %vm1965, %v1942, %v964
      %v1977 = vsel %vm1965, %v1944, %v966
      %v1979 = vsel %vm1965, %v1946, %v968
      %v1981 = vsel %vm1965, %v1948, %v970
      %v1983 = vsel %vm1965, %v1950, %v972
      %v1985 = vsel %vm1965, %v1952, %v974
      %v1987 = vsel %vm1965, %v1954, %v976
      %v1989 = vsel %vm1965, %v1956, %v978
      %v1991 = vsel %vm1965, %v1958, %v980
      %v1993 = vsel %vm1965, %v1960, %v982
      %v1995 = vsel %vm1965, %v1962, %v984
      %v1997 = vsel %vm1965, %v1964, %v986
      %vm1998 = vcmask 130048
      %v2000 = vsel %vm1998, %v1967, %v1228
      %v2002 = vsel %vm1998, %v1969, %v1230
      %v2004 = vsel %vm1998, %v1971, %v1232
      %v2006 = vsel %vm1998, %v1973, %v1234
      %v2008 = vsel %vm1998, %v1975, %v1236
      %v2010 = vsel %vm1998, %v1977, %v1238
      %v2012 = vsel %vm1998, %v1979, %v1240
      %v2014 = vsel %vm1998, %v1981, %v1242
      %v2016 = vsel %vm1998, %v1983, %v1244
      %v2018 = vsel %vm1998, %v1985, %v1246
      %v2020 = vsel %vm1998, %v1987, %v1248
      %v2022 = vsel %vm1998, %v1989, %v1250
      %v2024 = vsel %vm1998, %v1991, %v1252
      %v2026 = vsel %vm1998, %v1993, %v1254
      %v2028 = vsel %vm1998, %v1995, %v1256
      %v2030 = vsel %vm1998, %v1997, %v1258
      %vm2031 = vcmask 162816
      %v2033 = vsel %vm2031, %v2000, %v1356
      %v2035 = vsel %vm2031, %v2002, %v1358
      %v2037 = vsel %vm2031, %v2004, %v1360
      %v2039 = vsel %vm2031, %v2006, %v1362
      %v2041 = vsel %vm2031, %v2008, %v1364
      %v2043 = vsel %vm2031, %v2010, %v1366
      %v2045 = vsel %vm2031, %v2012, %v1368
      %v2047 = vsel %vm2031, %v2014, %v1370
      %v2049 = vsel %vm2031, %v2016, %v1372
      %v2051 = vsel %vm2031, %v2018, %v1374
      %v2053 = vsel %vm2031, %v2020, %v1376
      %v2055 = vsel %vm2031, %v2022, %v1378
      %v2057 = vsel %vm2031, %v2024, %v1380
      %v2059 = vsel %vm2031, %v2026, %v1382
      %v2061 = vsel %vm2031, %v2028, %v1384
      %v2063 = vsel %vm2031, %v2030, %v1386
      %vm2064 = vcmask 195584
      %v2066 = vsel %vm2064, %v2033, %v1468
      %v2068 = vsel %vm2064, %v2035, %v1470
      %v2070 = vsel %vm2064, %v2037, %v1472
      %v2072 = vsel %vm2064, %v2039, %v1474
      %v2074 = vsel %vm2064, %v2041, %v1476
      %v2076 = vsel %vm2064, %v2043, %v1478
      %v2078 = vsel %vm2064, %v2045, %v1480
      %v2080 = vsel %vm2064, %v2047, %v1482
      %v2082 = vsel %vm2064, %v2049, %v1484
      %v2084 = vsel %vm2064, %v2051, %v1486
      %v2086 = vsel %vm2064, %v2053, %v1488
      %v2088 = vsel %vm2064, %v2055, %v1490
      %v2090 = vsel %vm2064, %v2057, %v1492
      %v2092 = vsel %vm2064, %v2059, %v1494
      %v2094 = vsel %vm2064, %v2061, %v1496
      %v2096 = vsel %vm2064, %v2063, %v1498
      %vm2097 = vcmask 228352
      %v2099 = vsel %vm2097, %v2066, %v1740
      %v2101 = vsel %vm2097, %v2068, %v1742
      %v2103 = vsel %vm2097, %v2070, %v1744
      %v2105 = vsel %vm2097, %v2072, %v1746
      %v2107 = vsel %vm2097, %v2074, %v1748
      %v2109 = vsel %vm2097, %v2076, %v1750
      %v2111 = vsel %vm2097, %v2078, %v1752
      %v2113 = vsel %vm2097, %v2080, %v1754
      %v2115 = vsel %vm2097, %v2082, %v1756
      %v2117 = vsel %vm2097, %v2084, %v1758
      %v2119 = vsel %vm2097, %v2086, %v1760
      %v2121 = vsel %vm2097, %v2088, %v1762
      %v2123 = vsel %vm2097, %v2090, %v1764
      %v2125 = vsel %vm2097, %v2092, %v1766
      %v2127 = vsel %vm2097, %v2094, %v1768
      %v2129 = vsel %vm2097, %v2096, %v1770
      %vm2130 = vcmask 261120
      %v2132 = vsel %vm2130, %v2099, %v1868
      %v2134 = vsel %vm2130, %v2101, %v1870
      %v2136 = vsel %vm2130, %v2103, %v1872
      %v2138 = vsel %vm2130, %v2105, %v1874
      %v2140 = vsel %vm2130, %v2107, %v1876
      %v2142 = vsel %vm2130, %v2109, %v1878
      %v2144 = vsel %vm2130, %v2111, %v1880
      %v2146 = vsel %vm2130, %v2113, %v1882
      %v2148 = vsel %vm2130, %v2115, %v1884
      %v2150 = vsel %vm2130, %v2117, %v1886
      %v2152 = vsel %vm2130, %v2119, %v1888
      %v2154 = vsel %vm2130, %v2121, %v1890
      %v2156 = vsel %vm2130, %v2123, %v1892
      %v2158 = vsel %vm2130, %v2125, %v1894
      %v2160 = vsel %vm2130, %v2127, %v1896
      %v2162 = vsel %vm2130, %v2129, %v1898
      %v2163 = vld [vmem:[%s1] sm:$0xf]
      %v2164 = vld [vmem:[%s1 + $0x4] sm:$0xf]
      %v2165 = vld [vmem:[%s1 + $0x8] sm:$0xf]
      %v2166 = vld [vmem:[%s1 + $0xc] sm:$0xf]
      %v2167 = vld [vmem:[%s1 + $0x10] sm:$0x3]
      %v2173 = vunpack.c.l.b16 %v2163
      %v2174 = vunpack.c.l.b16 %v2164
      %v2175 = vunpack.c.l.b16 %v2165
      %v2176 = vunpack.c.l.b16 %v2166
      %v2177 = vunpack.c.l.b16 %v2167
      %v2178 = vpack.c.b16 %v2174, %v2173
      %v2179 = vpack.c.b16 %v2176, %v2175
      %v2180 = vpack.c.b16 %v2177, %v2177
      %vm2183 = vcmask 293888
      %v2184 = vsel %vm2183, %v2132, 0
      %v2186 = vsel %vm2183, %v2134, 0
      %v2188 = vsel %vm2183, %v2136, 0
      %v2190 = vsel %vm2183, %v2138, 0
      %v2192 = vsel %vm2183, %v2140, 0
      %v2194 = vsel %vm2183, %v2142, 0
      %v2196 = vsel %vm2183, %v2144, 0
      %v2198 = vsel %vm2183, %v2146, 0
      %v2200 = vsel %vm2183, %v2148, 0
      %v2202 = vsel %vm2183, %v2150, 0
      %v2204 = vsel %vm2183, %v2152, 0
      %v2206 = vsel %vm2183, %v2154, 0
      %v2208 = vsel %vm2183, %v2156, 0
      %v2210 = vsel %vm2183, %v2158, 0
      %v2212 = vsel %vm2183, %v2160, 0
      %v2214 = vsel %vm2183, %v2162, 0
      %vm2216 = vcmask 1041408
      %v2218 = vsel %vm2216, %v2180, 0
      %2220 = vmatpush.bf16.msra.mxu0 0
      %2221 = vmatpush.bf16.msra.mxu0 0
      %2222 = vmatpush.bf16.msra.mxu0 0
      %2223 = vmatpush.bf16.msra.mxu0 0
      %2224 = vmatpush.bf16.msra.mxu0 0
      %2225 = vmatpush.bf16.msra.mxu0 %v2218
      %2226 = vmatpush.bf16.msra.mxu0 %v2179
      %2227 = vmatpush.bf16.msra.mxu0 %v2178
      %2228 = vmatmul.bf16.gmra.mxu0 %v2184
      %v2229 = vpop.f32.mrf.mxu0
      %v2230 = vadd.f32 0.0, %v2229
      %v2231 = vpop.f32.mrf.mxu0
      %v2232 = vadd.f32 0.0, %v2231
      %2233 = vmatmul.bf16.gmra.mxu0 %v2186
      %v2234 = vpop.f32.mrf.mxu0
      %v2235 = vadd.f32 0.0, %v2234
      %v2236 = vpop.f32.mrf.mxu0
      %v2237 = vadd.f32 0.0, %v2236
      %2238 = vmatmul.bf16.gmra.mxu0 %v2188
      %v2239 = vpop.f32.mrf.mxu0
      %v2240 = vadd.f32 0.0, %v2239
      %v2241 = vpop.f32.mrf.mxu0
      %v2242 = vadd.f32 0.0, %v2241
      %2243 = vmatmul.bf16.gmra.mxu0 %v2190
      %v2244 = vpop.f32.mrf.mxu0
      %v2245 = vadd.f32 0.0, %v2244
      %v2246 = vpop.f32.mrf.mxu0
      %v2247 = vadd.f32 0.0, %v2246
      %2248 = vmatmul.bf16.gmra.mxu0 %v2192
      %v2249 = vpop.f32.mrf.mxu0
      %v2250 = vadd.f32 0.0, %v2249
      %v2251 = vpop.f32.mrf.mxu0
      %v2252 = vadd.f32 0.0, %v2251
      %2253 = vmatmul.bf16.gmra.mxu0 %v2194
      %v2254 = vpop.f32.mrf.mxu0
      %v2255 = vadd.f32 0.0, %v2254
      %v2256 = vpop.f32.mrf.mxu0
      %v2257 = vadd.f32 0.0, %v2256
      %2258 = vmatmul.bf16.gmra.mxu0 %v2196
      %v2259 = vpop.f32.mrf.mxu0
      %v2260 = vadd.f32 0.0, %v2259
      %v2261 = vpop.f32.mrf.mxu0
      %v2262 = vadd.f32 0.0, %v2261
      %2263 = vmatmul.bf16.gmra.mxu0 %v2198
      %v2264 = vpop.f32.mrf.mxu0
      %v2265 = vadd.f32 0.0, %v2264
      %v2266 = vpop.f32.mrf.mxu0
      %v2267 = vadd.f32 0.0, %v2266
      %2268 = vmatmul.bf16.gmra.mxu0 %v2200
      %v2269 = vpop.f32.mrf.mxu0
      %v2270 = vadd.f32 0.0, %v2269
      %v2271 = vpop.f32.mrf.mxu0
      %v2272 = vadd.f32 0.0, %v2271
      %2273 = vmatmul.bf16.gmra.mxu0 %v2202
      %v2274 = vpop.f32.mrf.mxu0
      %v2275 = vadd.f32 0.0, %v2274
      %v2276 = vpop.f32.mrf.mxu0
      %v2277 = vadd.f32 0.0, %v2276
      %2278 = vmatmul.bf16.gmra.mxu0 %v2204
      %v2279 = vpop.f32.mrf.mxu0
      %v2280 = vadd.f32 0.0, %v2279
      %v2281 = vpop.f32.mrf.mxu0
      %v2282 = vadd.f32 0.0, %v2281
      %2283 = vmatmul.bf16.gmra.mxu0 %v2206
      %v2284 = vpop.f32.mrf.mxu0
      %v2285 = vadd.f32 0.0, %v2284
      %v2286 = vpop.f32.mrf.mxu0
      %v2287 = vadd.f32 0.0, %v2286
      %2288 = vmatmul.bf16.gmra.mxu0 %v2208
      %v2289 = vpop.f32.mrf.mxu0
      %v2290 = vadd.f32 0.0, %v2289
      %v2291 = vpop.f32.mrf.mxu0
      %v2292 = vadd.f32 0.0, %v2291
      %2293 = vmatmul.bf16.gmra.mxu0 %v2210
      %v2294 = vpop.f32.mrf.mxu0
      %v2295 = vadd.f32 0.0, %v2294
      %v2296 = vpop.f32.mrf.mxu0
      %v2297 = vadd.f32 0.0, %v2296
      %2298 = vmatmul.bf16.gmra.mxu0 %v2212
      %v2299 = vpop.f32.mrf.mxu0
      %v2300 = vadd.f32 0.0, %v2299
      %v2301 = vpop.f32.mrf.mxu0
      %v2302 = vadd.f32 0.0, %v2301
      %2303 = vmatmul.bf16.gmra.mxu0 %v2214
      %v2304 = vpop.f32.mrf.mxu0
      %v2305 = vadd.f32 0.0, %v2304
      %v2306 = vpop.f32.mrf.mxu0
      %v2307 = vadd.f32 0.0, %v2306
      %2308 = vdwg.mxu0
      %v2309 = vld [vmem:[%s2] sm:$0x1]
      %v2311 = vperm.slane %v2309, 0
      %v2313 = vmul.f32 %v2230, %v2311
      %v2314 = vmul.f32 %v2232, %v2311
      %v2315 = vmul.f32 %v2235, %v2311
      %v2316 = vmul.f32 %v2237, %v2311
      %v2317 = vmul.f32 %v2240, %v2311
      %v2318 = vmul.f32 %v2242, %v2311
      %v2319 = vmul.f32 %v2245, %v2311
      %v2320 = vmul.f32 %v2247, %v2311
      %v2321 = vmul.f32 %v2250, %v2311
      %v2322 = vmul.f32 %v2252, %v2311
      %v2323 = vmul.f32 %v2255, %v2311
      %v2324 = vmul.f32 %v2257, %v2311
      %v2325 = vmul.f32 %v2260, %v2311
      %v2326 = vmul.f32 %v2262, %v2311
      %v2327 = vmul.f32 %v2265, %v2311
      %v2328 = vmul.f32 %v2267, %v2311
      %v2329 = vmul.f32 %v2270, %v2311
      %v2330 = vmul.f32 %v2272, %v2311
      %v2331 = vmul.f32 %v2275, %v2311
      %v2332 = vmul.f32 %v2277, %v2311
      %v2333 = vmul.f32 %v2280, %v2311
      %v2334 = vmul.f32 %v2282, %v2311
      %v2335 = vmul.f32 %v2285, %v2311
      %v2336 = vmul.f32 %v2287, %v2311
      %v2337 = vmul.f32 %v2290, %v2311
      %v2338 = vmul.f32 %v2292, %v2311
      %v2339 = vmul.f32 %v2295, %v2311
      %v2340 = vmul.f32 %v2297, %v2311
      %v2341 = vmul.f32 %v2300, %v2311
      %v2342 = vmul.f32 %v2302, %v2311
      %v2343 = vmul.f32 %v2305, %v2311
      %v2344 = vmul.f32 %v2307, %v2311
      %v2345 = vld [vmem:[%s3] sm:$0x1]
      %v2347 = vperm.slane %v2345, 0
      %v2349 = vadd.f32 %v2313, %v2347
      %v2350 = vadd.f32 %v2314, %v2347
      %v2351 = vadd.f32 %v2315, %v2347
      %v2352 = vadd.f32 %v2316, %v2347
      %v2353 = vadd.f32 %v2317, %v2347
      %v2354 = vadd.f32 %v2318, %v2347
      %v2355 = vadd.f32 %v2319, %v2347
      %v2356 = vadd.f32 %v2320, %v2347
      %v2357 = vadd.f32 %v2321, %v2347
      %v2358 = vadd.f32 %v2322, %v2347
      %v2359 = vadd.f32 %v2323, %v2347
      %v2360 = vadd.f32 %v2324, %v2347
      %v2361 = vadd.f32 %v2325, %v2347
      %v2362 = vadd.f32 %v2326, %v2347
      %v2363 = vadd.f32 %v2327, %v2347
      %v2364 = vadd.f32 %v2328, %v2347
      %v2365 = vadd.f32 %v2329, %v2347
      %v2366 = vadd.f32 %v2330, %v2347
      %v2367 = vadd.f32 %v2331, %v2347
      %v2368 = vadd.f32 %v2332, %v2347
      %v2369 = vadd.f32 %v2333, %v2347
      %v2370 = vadd.f32 %v2334, %v2347
      %v2371 = vadd.f32 %v2335, %v2347
      %v2372 = vadd.f32 %v2336, %v2347
      %v2373 = vadd.f32 %v2337, %v2347
      %v2374 = vadd.f32 %v2338, %v2347
      %v2375 = vadd.f32 %v2339, %v2347
      %v2376 = vadd.f32 %v2340, %v2347
      %v2377 = vadd.f32 %v2341, %v2347
      %v2378 = vadd.f32 %v2342, %v2347
      %v2379 = vadd.f32 %v2343, %v2347
      %v2380 = vadd.f32 %v2344, %v2347
      %v2381 = vmax.f32 %v2349, 0.0
      %v2382 = vmax.f32 %v2350, 0.0
      %v2383 = vmax.f32 %v2351, 0.0
      %v2384 = vmax.f32 %v2352, 0.0
      %v2385 = vmax.f32 %v2353, 0.0
      %v2386 = vmax.f32 %v2354, 0.0
      %v2387 = vmax.f32 %v2355, 0.0
      %v2388 = vmax.f32 %v2356, 0.0
      %v2389 = vmax.f32 %v2357, 0.0
      %v2390 = vmax.f32 %v2358, 0.0
      %v2391 = vmax.f32 %v2359, 0.0
      %v2392 = vmax.f32 %v2360, 0.0
      %v2393 = vmax.f32 %v2361, 0.0
      %v2394 = vmax.f32 %v2362, 0.0
      %v2395 = vmax.f32 %v2363, 0.0
      %v2396 = vmax.f32 %v2364, 0.0
      %v2397 = vmax.f32 %v2365, 0.0
      %v2398 = vmax.f32 %v2366, 0.0
      %v2399 = vmax.f32 %v2367, 0.0
      %v2400 = vmax.f32 %v2368, 0.0
      %v2401 = vmax.f32 %v2369, 0.0
      %v2402 = vmax.f32 %v2370, 0.0
      %v2403 = vmax.f32 %v2371, 0.0
      %v2404 = vmax.f32 %v2372, 0.0
      %v2405 = vmax.f32 %v2373, 0.0
      %v2406 = vmax.f32 %v2374, 0.0
      %v2407 = vmax.f32 %v2375, 0.0
      %v2408 = vmax.f32 %v2376, 0.0
      %v2409 = vmax.f32 %v2377, 0.0
      %v2410 = vmax.f32 %v2378, 0.0
      %v2411 = vmax.f32 %v2379, 0.0
      %v2412 = vmax.f32 %v2380, 0.0
      %v2413 = vmax.f32 %v2381, %v2383
      %v2414 = vmax.f32 %v2382, %v2384
      %v2415 = vmax.f32 %v2385, %v2387
      %v2416 = vmax.f32 %v2386, %v2388
      %v2417 = vmax.f32 %v2389, %v2391
      %v2418 = vmax.f32 %v2390, %v2392
      %v2419 = vmax.f32 %v2393, %v2395
      %v2420 = vmax.f32 %v2394, %v2396
      %v2421 = vmax.f32 %v2397, %v2399
      %v2422 = vmax.f32 %v2398, %v2400
      %v2423 = vmax.f32 %v2401, %v2403
      %v2424 = vmax.f32 %v2402, %v2404
      %v2425 = vmax.f32 %v2405, %v2407
      %v2426 = vmax.f32 %v2406, %v2408
      %v2427 = vmax.f32 %v2409, %v2411
      %v2428 = vmax.f32 %v2410, %v2412
      %v2445 = vrot.slane %v2413, 2
      %v2446 = vrot.slane %v2413, 4
      %v2447 = vrot.slane %v2413, 6
      %v2448 = vrot.slane %v2414, 2
      %v2449 = vrot.slane %v2414, 4
      %v2450 = vrot.slane %v2414, 6
      %v2451 = vrot.slane %v2415, 2
      %v2452 = vrot.slane %v2415, 4
      %v2453 = vrot.slane %v2415, 6
      %v2454 = vrot.slane %v2416, 2
      %v2455 = vrot.slane %v2416, 4
      %v2456 = vrot.slane %v2416, 6
      %v2457 = vrot.slane %v2417, 2
      %v2458 = vrot.slane %v2417, 4
      %v2459 = vrot.slane %v2417, 6
      %v2460 = vrot.slane %v2418, 2
      %v2461 = vrot.slane %v2418, 4
      %v2462 = vrot.slane %v2418, 6
      %v2463 = vrot.slane %v2419, 2
      %v2464 = vrot.slane %v2419, 4
      %v2465 = vrot.slane %v2419, 6
      %v2466 = vrot.slane %v2420, 2
      %v2467 = vrot.slane %v2420, 4
      %v2468 = vrot.slane %v2420, 6
      %v2469 = vrot.slane %v2421, 2
      %v2470 = vrot.slane %v2421, 4
      %v2471 = vrot.slane %v2421, 6
      %v2472 = vrot.slane %v2422, 2
      %v2473 = vrot.slane %v2422, 4
      %v2474 = vrot.slane %v2422, 6
      %v2475 = vrot.slane %v2423, 2
      %v2476 = vrot.slane %v2423, 4
      %v2477 = vrot.slane %v2423, 6
      %v2478 = vrot.slane %v2424, 2
      %v2479 = vrot.slane %v2424, 4
      %v2480 = vrot.slane %v2424, 6
      %v2481 = vrot.slane %v2425, 2
      %v2482 = vrot.slane %v2425, 4
      %v2483 = vrot.slane %v2425, 6
      %v2484 = vrot.slane %v2426, 2
      %v2485 = vrot.slane %v2426, 4
      %v2486 = vrot.slane %v2426, 6
      %v2487 = vrot.slane %v2427, 2
      %v2488 = vrot.slane %v2427, 4
      %v2489 = vrot.slane %v2427, 6
      %v2490 = vrot.slane %v2428, 2
      %v2491 = vrot.slane %v2428, 4
      %v2492 = vrot.slane %v2428, 6
      %v2541 = vrot.slane %v2413, 7
      %v2542 = vrot.slane %v2541, 2
      %v2543 = vrot.slane %v2445, 7
      %v2544 = vrot.slane %v2543, 2
      %v2545 = vrot.slane %v2446, 7
      %v2546 = vrot.slane %v2545, 2
      %v2547 = vrot.slane %v2447, 7
      %v2548 = vrot.slane %v2547, 2
      %v2549 = vrot.slane %v2414, 7
      %v2550 = vrot.slane %v2549, 2
      %v2551 = vrot.slane %v2448, 7
      %v2552 = vrot.slane %v2551, 2
      %v2553 = vrot.slane %v2449, 7
      %v2554 = vrot.slane %v2553, 2
      %v2555 = vrot.slane %v2450, 7
      %v2556 = vrot.slane %v2555, 2
      %v2557 = vrot.slane %v2415, 7
      %v2558 = vrot.slane %v2557, 2
      %v2559 = vrot.slane %v2451, 7
      %v2560 = vrot.slane %v2559, 2
      %v2561 = vrot.slane %v2452, 7
      %v2562 = vrot.slane %v2561, 2
      %v2563 = vrot.slane %v2453, 7
      %v2564 = vrot.slane %v2563, 2
      %v2565 = vrot.slane %v2416, 7
      %v2566 = vrot.slane %v2565, 2
      %v2567 = vrot.slane %v2454, 7
      %v2568 = vrot.slane %v2567, 2
      %v2569 = vrot.slane %v2455, 7
      %v2570 = vrot.slane %v2569, 2
      %v2571 = vrot.slane %v2456, 7
      %v2572 = vrot.slane %v2571, 2
      %v2573 = vrot.slane %v2417, 7
      %v2574 = vrot.slane %v2573, 2
      %v2575 = vrot.slane %v2457, 7
      %v2576 = vrot.slane %v2575, 2
      %v2577 = vrot.slane %v2458, 7
      %v2578 = vrot.slane %v2577, 2
      %v2579 = vrot.slane %v2459, 7
      %v2580 = vrot.slane %v2579, 2
      %v2581 = vrot.slane %v2418, 7
      %v2582 = vrot.slane %v2581, 2
      %v2583 = vrot.slane %v2460, 7
      %v2584 = vrot.slane %v2583, 2
      %v2585 = vrot.slane %v2461, 7
      %v2586 = vrot.slane %v2585, 2
      %v2587 = vrot.slane %v2462, 7
      %v2588 = vrot.slane %v2587, 2
      %v2589 = vrot.slane %v2419, 7
      %v2590 = vrot.slane %v2589, 2
      %v2591 = vrot.slane %v2463, 7
      %v2592 = vrot.slane %v2591, 2
      %v2593 = vrot.slane %v2464, 7
      %v2594 = vrot.slane %v2593, 2
      %v2595 = vrot.slane %v2465, 7
      %v2596 = vrot.slane %v2595, 2
      %v2597 = vrot.slane %v2420, 7
      %v2598 = vrot.slane %v2597, 2
      %v2599 = vrot.slane %v2466, 7
      %v2600 = vrot.slane %v2599, 2
      %v2601 = vrot.slane %v2467, 7
      %v2602 = vrot.slane %v2601, 2
      %v2603 = vrot.slane %v2468, 7
      %v2604 = vrot.slane %v2603, 2
      %v2605 = vrot.slane %v2421, 7
      %v2606 = vrot.slane %v2605, 2
      %v2607 = vrot.slane %v2469, 7
      %v2608 = vrot.slane %v2607, 2
      %v2609 = vrot.slane %v2470, 7
      %v2610 = vrot.slane %v2609, 2
      %v2611 = vrot.slane %v2471, 7
      %v2612 = vrot.slane %v2611, 2
      %v2613 = vrot.slane %v2422, 7
      %v2614 = vrot.slane %v2613, 2
      %v2615 = vrot.slane %v2472, 7
      %v2616 = vrot.slane %v2615, 2
      %v2617 = vrot.slane %v2473, 7
      %v2618 = vrot.slane %v2617, 2
      %v2619 = vrot.slane %v2474, 7
      %v2620 = vrot.slane %v2619, 2
      %v2621 = vrot.slane %v2423, 7
      %v2622 = vrot.slane %v2621, 2
      %v2623 = vrot.slane %v2475, 7
      %v2624 = vrot.slane %v2623, 2
      %v2625 = vrot.slane %v2476, 7
      %v2626 = vrot.slane %v2625, 2
      %v2627 = vrot.slane %v2477, 7
      %v2628 = vrot.slane %v2627, 2
      %v2629 = vrot.slane %v2424, 7
      %v2630 = vrot.slane %v2629, 2
      %v2631 = vrot.slane %v2478, 7
      %v2632 = vrot.slane %v2631, 2
      %v2633 = vrot.slane %v2479, 7
      %v2634 = vrot.slane %v2633, 2
      %v2635 = vrot.slane %v2480, 7
      %v2636 = vrot.slane %v2635, 2
      %v2637 = vrot.slane %v2425, 7
      %v2638 = vrot.slane %v2637, 2
      %v2639 = vrot.slane %v2481, 7
      %v2640 = vrot.slane %v2639, 2
      %v2641 = vrot.slane %v2482, 7
      %v2642 = vrot.slane %v2641, 2
      %v2643 = vrot.slane %v2483, 7
      %v2644 = vrot.slane %v2643, 2
      %v2645 = vrot.slane %v2426, 7
      %v2646 = vrot.slane %v2645, 2
      %v2647 = vrot.slane %v2484, 7
      %v2648 = vrot.slane %v2647, 2
      %v2649 = vrot.slane %v2485, 7
      %v2650 = vrot.slane %v2649, 2
      %v2651 = vrot.slane %v2486, 7
      %v2652 = vrot.slane %v2651, 2
      %v2653 = vrot.slane %v2427, 7
      %v2654 = vrot.slane %v2653, 2
      %v2655 = vrot.slane %v2487, 7
      %v2656 = vrot.slane %v2655, 2
      %v2657 = vrot.slane %v2488, 7
      %v2658 = vrot.slane %v2657, 2
      %v2659 = vrot.slane %v2489, 7
      %v2660 = vrot.slane %v2659, 2
      %v2661 = vrot.slane %v2428, 7
      %v2662 = vrot.slane %v2661, 2
      %v2663 = vrot.slane %v2490, 7
      %v2664 = vrot.slane %v2663, 2
      %v2665 = vrot.slane %v2491, 7
      %v2666 = vrot.slane %v2665, 2
      %v2667 = vrot.slane %v2492, 7
      %v2668 = vrot.slane %v2667, 2
      %v2733 = vmax.f32 %v2413, %v2542
      %v2734 = vmax.f32 %v2445, %v2544
      %v2735 = vmax.f32 %v2446, %v2546
      %v2736 = vmax.f32 %v2447, %v2548
      %v2737 = vmax.f32 %v2414, %v2550
      %v2738 = vmax.f32 %v2448, %v2552
      %v2739 = vmax.f32 %v2449, %v2554
      %v2740 = vmax.f32 %v2450, %v2556
      %v2741 = vmax.f32 %v2415, %v2558
      %v2742 = vmax.f32 %v2451, %v2560
      %v2743 = vmax.f32 %v2452, %v2562
      %v2744 = vmax.f32 %v2453, %v2564
      %v2745 = vmax.f32 %v2416, %v2566
      %v2746 = vmax.f32 %v2454, %v2568
      %v2747 = vmax.f32 %v2455, %v2570
      %v2748 = vmax.f32 %v2456, %v2572
      %v2749 = vmax.f32 %v2417, %v2574
      %v2750 = vmax.f32 %v2457, %v2576
      %v2751 = vmax.f32 %v2458, %v2578
      %v2752 = vmax.f32 %v2459, %v2580
      %v2753 = vmax.f32 %v2418, %v2582
      %v2754 = vmax.f32 %v2460, %v2584
      %v2755 = vmax.f32 %v2461, %v2586
      %v2756 = vmax.f32 %v2462, %v2588
      %v2757 = vmax.f32 %v2419, %v2590
      %v2758 = vmax.f32 %v2463, %v2592
      %v2759 = vmax.f32 %v2464, %v2594
      %v2760 = vmax.f32 %v2465, %v2596
      %v2761 = vmax.f32 %v2420, %v2598
      %v2762 = vmax.f32 %v2466, %v2600
      %v2763 = vmax.f32 %v2467, %v2602
      %v2764 = vmax.f32 %v2468, %v2604
      %v2765 = vmax.f32 %v2421, %v2606
      %v2766 = vmax.f32 %v2469, %v2608
      %v2767 = vmax.f32 %v2470, %v2610
      %v2768 = vmax.f32 %v2471, %v2612
      %v2769 = vmax.f32 %v2422, %v2614
      %v2770 = vmax.f32 %v2472, %v2616
      %v2771 = vmax.f32 %v2473, %v2618
      %v2772 = vmax.f32 %v2474, %v2620
      %v2773 = vmax.f32 %v2423, %v2622
      %v2774 = vmax.f32 %v2475, %v2624
      %v2775 = vmax.f32 %v2476, %v2626
      %v2776 = vmax.f32 %v2477, %v2628
      %v2777 = vmax.f32 %v2424, %v2630
      %v2778 = vmax.f32 %v2478, %v2632
      %v2779 = vmax.f32 %v2479, %v2634
      %v2780 = vmax.f32 %v2480, %v2636
      %v2781 = vmax.f32 %v2425, %v2638
      %v2782 = vmax.f32 %v2481, %v2640
      %v2783 = vmax.f32 %v2482, %v2642
      %v2784 = vmax.f32 %v2483, %v2644
      %v2785 = vmax.f32 %v2426, %v2646
      %v2786 = vmax.f32 %v2484, %v2648
      %v2787 = vmax.f32 %v2485, %v2650
      %v2788 = vmax.f32 %v2486, %v2652
      %v2789 = vmax.f32 %v2427, %v2654
      %v2790 = vmax.f32 %v2487, %v2656
      %v2791 = vmax.f32 %v2488, %v2658
      %v2792 = vmax.f32 %v2489, %v2660
      %v2793 = vmax.f32 %v2428, %v2662
      %v2794 = vmax.f32 %v2490, %v2664
      %v2795 = vmax.f32 %v2491, %v2666
      %v2796 = vmax.f32 %v2492, %v2668
      %v2861 = vperm.slane %v2733, 0
      %v2862 = vperm.slane %v2734, 0
      %v2863 = vperm.slane %v2735, 0
      %v2864 = vperm.slane %v2736, 0
      %v2865 = vperm.slane %v2737, 0
      %v2866 = vperm.slane %v2738, 0
      %v2867 = vperm.slane %v2739, 0
      %v2868 = vperm.slane %v2740, 0
      %v2869 = vperm.slane %v2741, 0
      %v2870 = vperm.slane %v2742, 0
      %v2871 = vperm.slane %v2743, 0
      %v2872 = vperm.slane %v2744, 0
      %v2873 = vperm.slane %v2745, 0
      %v2874 = vperm.slane %v2746, 0
      %v2875 = vperm.slane %v2747, 0
      %v2876 = vperm.slane %v2748, 0
      %v2877 = vperm.slane %v2749, 0
      %v2878 = vperm.slane %v2750, 0
      %v2879 = vperm.slane %v2751, 0
      %v2880 = vperm.slane %v2752, 0
      %v2881 = vperm.slane %v2753, 0
      %v2882 = vperm.slane %v2754, 0
      %v2883 = vperm.slane %v2755, 0
      %v2884 = vperm.slane %v2756, 0
      %v2885 = vperm.slane %v2757, 0
      %v2886 = vperm.slane %v2758, 0
      %v2887 = vperm.slane %v2759, 0
      %v2888 = vperm.slane %v2760, 0
      %v2889 = vperm.slane %v2761, 0
      %v2890 = vperm.slane %v2762, 0
      %v2891 = vperm.slane %v2763, 0
      %v2892 = vperm.slane %v2764, 0
      %v2893 = vperm.slane %v2765, 0
      %v2894 = vperm.slane %v2766, 0
      %v2895 = vperm.slane %v2767, 0
      %v2896 = vperm.slane %v2768, 0
      %v2897 = vperm.slane %v2769, 0
      %v2898 = vperm.slane %v2770, 0
      %v2899 = vperm.slane %v2771, 0
      %v2900 = vperm.slane %v2772, 0
      %v2901 = vperm.slane %v2773, 0
      %v2902 = vperm.slane %v2774, 0
      %v2903 = vperm.slane %v2775, 0
      %v2904 = vperm.slane %v2776, 0
      %v2905 = vperm.slane %v2777, 0
      %v2906 = vperm.slane %v2778, 0
      %v2907 = vperm.slane %v2779, 0
      %v2908 = vperm.slane %v2780, 0
      %v2909 = vperm.slane %v2781, 0
      %v2910 = vperm.slane %v2782, 0
      %v2911 = vperm.slane %v2783, 0
      %v2912 = vperm.slane %v2784, 0
      %v2913 = vperm.slane %v2785, 0
      %v2914 = vperm.slane %v2786, 0
      %v2915 = vperm.slane %v2787, 0
      %v2916 = vperm.slane %v2788, 0
      %v2917 = vperm.slane %v2789, 0
      %v2918 = vperm.slane %v2790, 0
      %v2919 = vperm.slane %v2791, 0
      %v2920 = vperm.slane %v2792, 0
      %v2921 = vperm.slane %v2793, 0
      %v2922 = vperm.slane %v2794, 0
      %v2923 = vperm.slane %v2795, 0
      %v2924 = vperm.slane %v2796, 0
      %vm2925 = vcmask 1041409
      %v2926 = vsel %vm2925, %v2862, %v2861
      %vm2927 = vcmask 1042434
      %v2928 = vsel %vm2927, %v2863, %v2926
      %vm2929 = vcmask 1043459
      %v2930 = vsel %vm2929, %v2864, %v2928
      %vm2931 = vcmask 1044484
      %v2932 = vsel %vm2931, %v2865, %v2930
      %vm2933 = vcmask 1045509
      %v2934 = vsel %vm2933, %v2866, %v2932
      %vm2935 = vcmask 1046534
      %v2936 = vsel %vm2935, %v2867, %v2934
      %vm2937 = vcmask 1047559
      %v2938 = vsel %vm2937, %v2868, %v2936
      %v2939 = vsel %vm2925, %v2870, %v2869
      %v2940 = vsel %vm2927, %v2871, %v2939
      %v2941 = vsel %vm2929, %v2872, %v2940
      %v2942 = vsel %vm2931, %v2873, %v2941
      %v2943 = vsel %vm2933, %v2874, %v2942
      %v2944 = vsel %vm2935, %v2875, %v2943
      %v2945 = vsel %vm2937, %v2876, %v2944
      %v2946 = vsel %vm2925, %v2878, %v2877
      %v2947 = vsel %vm2927, %v2879, %v2946
      %v2948 = vsel %vm2929, %v2880, %v2947
      %v2949 = vsel %vm2931, %v2881, %v2948
      %v2950 = vsel %vm2933, %v2882, %v2949
      %v2951 = vsel %vm2935, %v2883, %v2950
      %v2952 = vsel %vm2937, %v2884, %v2951
      %v2953 = vsel %vm2925, %v2886, %v2885
      %v2954 = vsel %vm2927, %v2887, %v2953
      %v2955 = vsel %vm2929, %v2888, %v2954
      %v2956 = vsel %vm2931, %v2889, %v2955
      %v2957 = vsel %vm2933, %v2890, %v2956
      %v2958 = vsel %vm2935, %v2891, %v2957
      %v2959 = vsel %vm2937, %v2892, %v2958
      %v2960 = vsel %vm2925, %v2894, %v2893
      %v2961 = vsel %vm2927, %v2895, %v2960
      %v2962 = vsel %vm2929, %v2896, %v2961
      %v2963 = vsel %vm2931, %v2897, %v2962
      %v2964 = vsel %vm2933, %v2898, %v2963
      %v2965 = vsel %vm2935, %v2899, %v2964
      %v2966 = vsel %vm2937, %v2900, %v2965
      %v2967 = vsel %vm2925, %v2902, %v2901
      %v2968 = vsel %vm2927, %v2903, %v2967
      %v2969 = vsel %vm2929, %v2904, %v2968
      %v2970 = vsel %vm2931, %v2905, %v2969
      %v2971 = vsel %vm2933, %v2906, %v2970
      %v2972 = vsel %vm2935, %v2907, %v2971
      %v2973 = vsel %vm2937, %v2908, %v2972
      %v2974 = vsel %vm2925, %v2910, %v2909
      %v2975 = vsel %vm2927, %v2911, %v2974
      %v2976 = vsel %vm2929, %v2912, %v2975
      %v2977 = vsel %vm2931, %v2913, %v2976
      %v2978 = vsel %vm2933, %v2914, %v2977
      %v2979 = vsel %vm2935, %v2915, %v2978
      %v2980 = vsel %vm2937, %v2916, %v2979
      %v2981 = vsel %vm2925, %v2918, %v2917
      %v2982 = vsel %vm2927, %v2919, %v2981
      %v2983 = vsel %vm2929, %v2920, %v2982
      %v2984 = vsel %vm2931, %v2921, %v2983
      %v2985 = vsel %vm2933, %v2922, %v2984
      %v2986 = vsel %vm2935, %v2923, %v2985
      %v2987 = vsel %vm2937, %v2924, %v2986
      %2996 = vst [vmem:[%s197] sm:$0xff] %v2938
      %2997 = vst [vmem:[%s197 + $0x8] sm:$0xff] %v2945
      %2998 = vst [vmem:[%s197 + $0x10] sm:$0xff] %v2952
      %2999 = vst [vmem:[%s197 + $0x18] sm:$0xff] %v2959
      %3000 = vst [vmem:[%s197 + $0x20] sm:$0xff] %v2966
      %3001 = vst [vmem:[%s197 + $0x28] sm:$0xff] %v2973
      %3002 = vst [vmem:[%s197 + $0x30] sm:$0xff] %v2980
      %3003 = vst [vmem:[%s197 + $0x38] sm:$0xff] %v2987
      %p3004 = scmp.lt.s32.totalorder %s15, 1
      %s3005 = scalar_select %p3004, %s15, 1
      %s3006 = smul.addr %s3005, 8
      %s3007 = smul.addr %s3006, 8
      %s3008 = scalar_lea.vmem %s4, %s3007
      // Predicated region
      $region37: #{conv_block_forward.3} parent=35 // pred_check
        %p3009 = pneg %p122
      $region38: #{conv_block_forward.3} parent=35 // pred_check_branch
        %3011 = sbr.rel (%p3009) target = $region40
      $region39: #{conv_block_forward.3} parent=35 // pred_region
        _
      $region40: #{conv_block_forward.3} parent=35 // pred_fallthru
        _
    $region36: #{conv_block_forward.3} parent=5 // pred_fallthru
      _
    %p3012 = scmp.le.s32.totalorder 2, %s10
    // Predicated region
    $region41: #{conv_block_forward.3} parent=5 // pred_check
      %p3013 = pneg %p3012
    $region42: #{conv_block_forward.3} parent=5 // pred_check_branch
      %3015 = sbr.rel (%p3013) target = $region44
    $region43: #{conv_block_forward.3} parent=5 // pred_region
      %s3016 = ssub.s32 %s10, 2
      // Predicated region
      $region45: #{conv_block_forward.3} parent=43 // pred_check
        %p3017 = pneg %p128
      $region46: #{conv_block_forward.3} parent=43 // pred_check_branch
        %3019 = sbr.rel (%p3017) target = $region48
      $region47: #{conv_block_forward.3} parent=43 // pred_region
        %p3020 = scmp.lt.s32.totalorder %s16, 1
        %s3021 = scalar_select %p3020, %s16, 1
        %s3022 = smul.addr %s3021, 8
        %s3023 = smul.addr %s3022, 8
        %s3024 = scalar_lea.vmem %s4, %s3023
      $region48: #{conv_block_forward.3} parent=43 // pred_fallthru
        _
    $region44: #{conv_block_forward.3} parent=5 // pred_fallthru
      _
  $region6: #{conv_block_forward.3} parent=0 // loop_footer
    %s14 = sadd.s32 1, %s10
  $region7: #{conv_block_forward.3} parent=0 // loop_footer_branch
    %9 = sbr.rel target = $region3
  $region8: #{conv_block_forward.3} parent=0 // loop_exit
    _

</llo_original>
